<compile_context>
chip_gen: v7x
topology: tpu7x:2x2x1
jax: 0.10.0
libtpu: 0.0.40
codegen_flags: <defaults>
</compile_context>

<pallas_src>
import functools

import jax
import jax.numpy as jnp
from jax import lax
from jax.experimental import pallas as pl
from jax.experimental.pallas import tpu as pltpu

BN_EPS = 1e-5


def _round_up(v, m):
    return (v + m - 1) // m * m


def _pick_tile_h(h, w, target_rows=512):
    """Largest divisor of h with tile_h*w <= ~target_rows and tile_h <= h//2
    (>=2 row tiles -> pipelining + megacore sharding even at batch size 1)."""
    if h <= 1:
        return 1
    cap = max(1, min(h // 2, max(1, target_rows // max(w, 1))))
    tile_h = 1
    for d in range(1, h + 1):
        if h % d == 0 and d <= cap:
            tile_h = d
    return tile_h


# ----------------------------------------------------------------------------
# Pallas kernels
# ----------------------------------------------------------------------------
def _conv1_kernel(x_ref, w_ref, y_ref, psum_ref, psq_ref, *, tile_h, w_img, cp):
    """conv1 on one (batch, row-tile): 9 shifted bf16 MXU matmuls (f32 acc).
    Also emits per-tile partial sum / sum-of-squares for the two-pass BN."""
    r = pl.program_id(1)
    row0 = r * tile_h
    # (tile_h+2, w_img+2, cp) slab incl. 1-pixel halo, from the resident image.
    slab = x_ref[0, pl.ds(row0, tile_h + 2), :, :]
    acc = jnp.zeros((tile_h * w_img, cp), jnp.float32)
    for t in range(9):
        di, dj = t // 3, t % 3
        win = slab[di:di + tile_h, dj:dj + w_img, :].reshape(tile_h * w_img, cp)
        acc = acc + jnp.dot(win, w_ref[t], preferred_element_type=jnp.float32)
    # conv1 bias intentionally omitted: exactly cancelled by BN mean subtraction.
    y_ref[0] = acc.astype(y_ref.dtype)
    psum_ref[0] = jnp.sum(acc, axis=0, keepdims=True)
    psq_ref[0] = jnp.sum(acc * acc, axis=0, keepdims=True)


def _conv2_kernel(y_ref, w_ref, scale_ref, shift_ref, b2_ref, res_ref, o_ref, *,
                  tile_h, w_img, h_img, cp):
    """Fused BN-affine + ReLU + conv2 + bias + residual on one (batch, row-tile)."""
    r = pl.program_id(1)
    row0 = r * tile_h
    slab = y_ref[0, pl.ds(row0, tile_h + 2), :, :].astype(jnp.float32)
    a = jnp.maximum(slab * scale_ref[...] + shift_ref[...], 0.0)
    # conv2 zero-pads the *activated* tensor, so positions outside the image
    # must be exactly zero (the affine of the stored zero padding is not zero).
    prow = lax.broadcasted_iota(jnp.int32, (tile_h + 2, w_img + 2, cp), 0) + row0
    pcol = lax.broadcasted_iota(jnp.int32, (tile_h + 2, w_img + 2, cp), 1)
    valid = (prow >= 1) & (prow <= h_img) & (pcol >= 1) & (pcol <= w_img)
    a = jnp.where(valid, a, 0.0).astype(jnp.bfloat16)
    acc = jnp.zeros((tile_h * w_img, cp), jnp.float32)
    for t in range(9):
        di, dj = t // 3, t % 3
        win = a[di:di + tile_h, dj:dj + w_img, :].reshape(tile_h * w_img, cp)
        acc = acc + jnp.dot(win, w_ref[t], preferred_element_type=jnp.float32)
    o_ref[0] = (acc + b2_ref[...] + res_ref[0]).astype(o_ref.dtype)


# ----------------------------------------------------------------------------
# Parameters: init + one-time preprocessing (hoisted out of the forward pass)
# ----------------------------------------------------------------------------
def init_params(channels, key, scale=0.05):
    k = jax.random.split(key, 4)
    return {
        "w1": scale * jax.random.normal(k[0], (channels, channels, 3, 3), jnp.float32),
        "b1": scale * jax.random.normal(k[1], (channels,), jnp.float32),
        "w2": scale * jax.random.normal(k[2], (channels, channels, 3, 3), jnp.float32),
        "b2": scale * jax.random.normal(k[3], (channels,), jnp.float32),
        "gamma": jnp.ones((channels,), jnp.float32),
        "beta": jnp.zeros((channels,), jnp.float32),
    }


def prepare_params(params, channels):
    """Tap-major bf16 GEMM weights + channel-padded per-channel vectors."""
    cp = max(128, _round_up(channels, 128))

    def to_taps(w):  # PyTorch (Cout, Cin, 3, 3) -> (9, Cp, Cp) bf16, tap-major
        cout, cin, kh, kw = w.shape
        t = jnp.transpose(w, (2, 3, 1, 0)).reshape(kh * kw, cin, cout)
        t = jnp.pad(t, ((0, 0), (0, cp - cin), (0, cp - cout)))
        return t.astype(jnp.bfloat16)

    def pad_vec(v):
        return jnp.pad(v.astype(jnp.float32), (0, cp - channels)).reshape(1, cp)

    return {
        "w1": to_taps(params["w1"]),
        "w2": to_taps(params["w2"]),
        # params["b1"] is unused: cancelled by training-mode BatchNorm.
        "b2": pad_vec(params["b2"]),
        "gamma": pad_vec(params["gamma"]),   # padded channels get gamma=0 -> stay 0
        "beta": pad_vec(params["beta"]),
    }


# ----------------------------------------------------------------------------
# Forward pass
# ----------------------------------------------------------------------------
@jax.jit
def resnet_block_forward(x_nchw, prep):
    n, c, h, w = x_nchw.shape
    cp = prep["w1"].shape[-1]
    tile_h = _pick_tile_h(h, w)
    rt = h // tile_h
    tile_m = tile_h * w
    m_total = n * h * w

    x_nhwc = jnp.transpose(x_nchw, (0, 2, 3, 1)).astype(jnp.float32)
    x_cp = jnp.pad(x_nhwc, ((0, 0), (0, 0), (0, 0), (0, cp - c)))   # f32, channel-padded
    res_m = x_cp.reshape(n * rt, tile_m, cp)                        # residual, M-view
    xp = jnp.pad(x_cp.astype(jnp.bfloat16), ((0, 0), (1, 1), (1, 1), (0, 0)))

    grid = (n, rt)
    cparams = pltpu.CompilerParams(dimension_semantics=("parallel", "parallel"))

    img_spec = pl.BlockSpec((1, h + 2, w + 2, cp), lambda i, r: (i, 0, 0, 0))
    taps_spec = pl.BlockSpec((9, cp, cp), lambda i, r: (0, 0, 0))
    vec_spec = pl.BlockSpec((1, cp), lambda i, r: (0, 0))
    m_spec = pl.BlockSpec((1, tile_m, cp), lambda i, r: (i * rt + r, 0, 0))
    stat_spec = pl.BlockSpec((1, 1, cp), lambda i, r: (i * rt + r, 0, 0))

    # ---- pass 1: conv1 (bf16 MXU, f32 accumulate) + per-tile BN partials ----
    y1_m, psum, psq = pl.pallas_call(
        functools.partial(_conv1_kernel, tile_h=tile_h, w_img=w, cp=cp),
        grid=grid,
        in_specs=[img_spec, taps_spec],
        out_specs=(m_spec, stat_spec, stat_spec),
        out_shape=(
            jax.ShapeDtypeStruct((n * rt, tile_m, cp), jnp.bfloat16),
            jax.ShapeDtypeStruct((n * rt, 1, cp), jnp.float32),
            jax.ShapeDtypeStruct((n * rt, 1, cp), jnp.float32),
        ),
        compiler_params=cparams,
    )(xp, prep["w1"])

    # ---- pass 2 (tiny, plain JAX): batch stats -> fused per-channel scale/shift
    mean = jnp.sum(psum, axis=(0, 1)) / m_total
    var = jnp.maximum(jnp.sum(psq, axis=(0, 1)) / m_total - mean * mean, 0.0)
    scale = prep["gamma"] * lax.rsqrt(var + BN_EPS)                 # (1, cp)
    shift = prep["beta"] - mean.reshape(1, cp) * scale              # (1, cp)

    # ---- pass 3: BN + ReLU fused into conv2 + bias + residual ----
    y1p = jnp.pad(y1_m.reshape(n, h, w, cp), ((0, 0), (1, 1), (1, 1), (0, 0)))
    out_m = pl.pallas_call(
        functools.partial(_conv2_kernel, tile_h=tile_h, w_img=w, h_img=h, cp=cp),
        grid=grid,
        in_specs=[img_spec, taps_spec, vec_spec, vec_spec, vec_spec, m_spec],
        out_specs=m_spec,
        out_shape=jax.ShapeDtypeStruct((n * rt, tile_m, cp), jnp.float32),
        compiler_params=cparams,
    )(y1p, prep["w2"], scale, shift, prep["b2"], res_m)

    out = out_m.reshape(n, h, w, cp)[..., :c]
    return jnp.transpose(out, (0, 3, 1, 2))


# ----------------------------------------------------------------------------
# Plain-JAX f32 reference (the PyTorch block, training-mode BN)
# ----------------------------------------------------------------------------
def reference_forward(x, p):
    dn = ("NCHW", "OIHW", "NCHW")
    y = lax.conv_general_dilated(x, p["w1"], (1, 1), ((1, 1), (1, 1)),
                                 dimension_numbers=dn,
                                 precision=lax.Precision.HIGHEST)
    y = y + p["b1"][None, :, None, None]
    mean = jnp.mean(y, axis=(0, 2, 3), keepdims=True)
    var = jnp.mean((y - mean) ** 2, axis=(0, 2, 3), keepdims=True)  # biased
    y = (y - mean) * lax.rsqrt(var + BN_EPS)
    y = y * p["gamma"][None, :, None, None] + p["beta"][None, :, None, None]
    y = jnp.maximum(y, 0.0)
    y = lax.conv_general_dilated(y, p["w2"], (1, 1), ((1, 1), (1, 1)),
                                 dimension_numbers=dn,
                                 precision=lax.Precision.HIGHEST)
    y = y + p["b2"][None, :, None, None]
    return y + x


if __name__ == "__main__":
    key = jax.random.PRNGKey(0)
    pkey, xkey = jax.random.split(key)

    n, c, h, w = 2, 32, 16, 16          # ResNet(channels=32), small test input
    params = init_params(c, pkey)
    prep = prepare_params(params, c)    # one-time weight preprocessing
    x = jax.random.normal(xkey, (n, c, h, w), jnp.float32)

    out = resnet_block_forward(x, prep)
    out = jax.block_until_ready(out)

    ref = reference_forward(x, params)
    err = float(jnp.max(jnp.abs(out - ref)))

    assert out.shape == (n, c, h, w), out.shape
    assert bool(jnp.all(jnp.isfinite(out)))
    assert err < 1e-1, f"max abs error vs f32 reference = {err}"
    print("KERNEL_OK")
</pallas_src>

<mosaic_0001>
module attributes {stable_mosaic.version = 11 : i64} {
  func.func @_conv1_kernel(%arg0: i32, %arg1: i32, %arg2: memref<1x18x18x128xbf16, #tpu.memory_space<vmem>>, %arg3: memref<9x128x128xbf16, #tpu.memory_space<vmem>>, %arg4: memref<1x128x128xbf16, #tpu.memory_space<vmem>>, %arg5: memref<1x1x128xf32, #tpu.memory_space<vmem>>, %arg6: memref<1x1x128xf32, #tpu.memory_space<vmem>>) attributes {dimension_semantics = [#tpu.dimension_semantics<parallel>, #tpu.dimension_semantics<parallel>], iteration_bounds = array<i64: 2, 2>, scalar_prefetch = 0 : i64, scratch_operands = 0 : i64, tpu.core_type = #tpu.core_type<tc>, window_params = [{transform_indices = @transform_0, window_bounds = array<i64: 1, 18, 18, 128>}, {pipeline_mode = #tpu.pipeline_mode<synchronous>, transform_indices = @transform_1, window_bounds = array<i64: 9, 128, 128>}, {transform_indices = @transform_2, window_bounds = array<i64: 1, 128, 128>}, {transform_indices = @transform_3, window_bounds = array<i64: 1, 1, 128>}, {transform_indices = @transform_4, window_bounds = array<i64: 1, 1, 128>}]} {
    %c8_i32 = arith.constant 8 : i32
    %0 = arith.muli %arg1, %c8_i32 : i32
    %c0 = arith.constant 0 : index
    %1 = arith.index_cast %0 : i32 to index
    %c0_0 = arith.constant 0 : index
    %c0_1 = arith.constant 0 : index
    %2 = vector.load %arg2[%c0, %1, %c0_0, %c0_1] : memref<1x18x18x128xbf16, #tpu.memory_space<vmem>>, vector<1x10x18x128xbf16>
    %3 = vector.shape_cast %2 : vector<1x10x18x128xbf16> to vector<10x18x128xbf16>
    %cst = arith.constant 0.000000e+00 : f32
    %4 = vector.broadcast %cst : f32 to vector<128x128xf32>
    %5 = vector.extract_strided_slice %3 {offsets = [0, 0, 0], sizes = [8, 16, 128], strides = [1, 1, 1]} : vector<10x18x128xbf16> to vector<8x16x128xbf16>
    %6 = vector.shape_cast %5 : vector<8x16x128xbf16> to vector<128x128xbf16>
    %c0_2 = arith.constant 0 : index
    %c0_3 = arith.constant 0 : index
    %c0_4 = arith.constant 0 : index
    %7 = vector.load %arg3[%c0_2, %c0_3, %c0_4] : memref<9x128x128xbf16, #tpu.memory_space<vmem>>, vector<1x128x128xbf16>
    %8 = vector.shape_cast %7 : vector<1x128x128xbf16> to vector<128x128xbf16>
    %cst_5 = arith.constant dense<0.000000e+00> : vector<128x128xf32>
    %9 = tpu.matmul %6, %8, %cst_5 {dimension_numbers = #tpu.dot_dimension_numbers<[1], [0], [0], [1], [0, 0, 1, 1], [], []>} : vector<128x128xbf16>, vector<128x128xbf16>, vector<128x128xf32> -> vector<128x128xf32>
    %10 = arith.addf %4, %9 : vector<128x128xf32>
    %11 = vector.extract_strided_slice %3 {offsets = [0, 1, 0], sizes = [8, 16, 128], strides = [1, 1, 1]} : vector<10x18x128xbf16> to vector<8x16x128xbf16>
    %12 = vector.shape_cast %11 : vector<8x16x128xbf16> to vector<128x128xbf16>
    %c1 = arith.constant 1 : index
    %c0_6 = arith.constant 0 : index
    %c0_7 = arith.constant 0 : index
    %13 = vector.load %arg3[%c1, %c0_6, %c0_7] : memref<9x128x128xbf16, #tpu.memory_space<vmem>>, vector<1x128x128xbf16>
    %14 = vector.shape_cast %13 : vector<1x128x128xbf16> to vector<128x128xbf16>
    %cst_8 = arith.constant dense<0.000000e+00> : vector<128x128xf32>
    %15 = tpu.matmul %12, %14, %cst_8 {dimension_numbers = #tpu.dot_dimension_numbers<[1], [0], [0], [1], [0, 0, 1, 1], [], []>} : vector<128x128xbf16>, vector<128x128xbf16>, vector<128x128xf32> -> vector<128x128xf32>
    %16 = arith.addf %10, %15 : vector<128x128xf32>
    %17 = vector.extract_strided_slice %3 {offsets = [0, 2, 0], sizes = [8, 16, 128], strides = [1, 1, 1]} : vector<10x18x128xbf16> to vector<8x16x128xbf16>
    %18 = vector.shape_cast %17 : vector<8x16x128xbf16> to vector<128x128xbf16>
    %c2 = arith.constant 2 : index
    %c0_9 = arith.constant 0 : index
    %c0_10 = arith.constant 0 : index
    %19 = vector.load %arg3[%c2, %c0_9, %c0_10] : memref<9x128x128xbf16, #tpu.memory_space<vmem>>, vector<1x128x128xbf16>
    %20 = vector.shape_cast %19 : vector<1x128x128xbf16> to vector<128x128xbf16>
    %cst_11 = arith.constant dense<0.000000e+00> : vector<128x128xf32>
    %21 = tpu.matmul %18, %20, %cst_11 {dimension_numbers = #tpu.dot_dimension_numbers<[1], [0], [0], [1], [0, 0, 1, 1], [], []>} : vector<128x128xbf16>, vector<128x128xbf16>, vector<128x128xf32> -> vector<128x128xf32>
    %22 = arith.addf %16, %21 : vector<128x128xf32>
    %23 = vector.extract_strided_slice %3 {offsets = [1, 0, 0], sizes = [8, 16, 128], strides = [1, 1, 1]} : vector<10x18x128xbf16> to vector<8x16x128xbf16>
    %24 = vector.shape_cast %23 : vector<8x16x128xbf16> to vector<128x128xbf16>
    %c3 = arith.constant 3 : index
    %c0_12 = arith.constant 0 : index
    %c0_13 = arith.constant 0 : index
    %25 = vector.load %arg3[%c3, %c0_12, %c0_13] : memref<9x128x128xbf16, #tpu.memory_space<vmem>>, vector<1x128x128xbf16>
    %26 = vector.shape_cast %25 : vector<1x128x128xbf16> to vector<128x128xbf16>
    %cst_14 = arith.constant dense<0.000000e+00> : vector<128x128xf32>
    %27 = tpu.matmul %24, %26, %cst_14 {dimension_numbers = #tpu.dot_dimension_numbers<[1], [0], [0], [1], [0, 0, 1, 1], [], []>} : vector<128x128xbf16>, vector<128x128xbf16>, vector<128x128xf32> -> vector<128x128xf32>
    %28 = arith.addf %22, %27 : vector<128x128xf32>
    %29 = vector.extract_strided_slice %3 {offsets = [1, 1, 0], sizes = [8, 16, 128], strides = [1, 1, 1]} : vector<10x18x128xbf16> to vector<8x16x128xbf16>
    %30 = vector.shape_cast %29 : vector<8x16x128xbf16> to vector<128x128xbf16>
    %c4 = arith.constant 4 : index
    %c0_15 = arith.constant 0 : index
    %c0_16 = arith.constant 0 : index
    %31 = vector.load %arg3[%c4, %c0_15, %c0_16] : memref<9x128x128xbf16, #tpu.memory_space<vmem>>, vector<1x128x128xbf16>
    %32 = vector.shape_cast %31 : vector<1x128x128xbf16> to vector<128x128xbf16>
    %cst_17 = arith.constant dense<0.000000e+00> : vector<128x128xf32>
    %33 = tpu.matmul %30, %32, %cst_17 {dimension_numbers = #tpu.dot_dimension_numbers<[1], [0], [0], [1], [0, 0, 1, 1], [], []>} : vector<128x128xbf16>, vector<128x128xbf16>, vector<128x128xf32> -> vector<128x128xf32>
    %34 = arith.addf %28, %33 : vector<128x128xf32>
    %35 = vector.extract_strided_slice %3 {offsets = [1, 2, 0], sizes = [8, 16, 128], strides = [1, 1, 1]} : vector<10x18x128xbf16> to vector<8x16x128xbf16>
    %36 = vector.shape_cast %35 : vector<8x16x128xbf16> to vector<128x128xbf16>
    %c5 = arith.constant 5 : index
    %c0_18 = arith.constant 0 : index
    %c0_19 = arith.constant 0 : index
    %37 = vector.load %arg3[%c5, %c0_18, %c0_19] : memref<9x128x128xbf16, #tpu.memory_space<vmem>>, vector<1x128x128xbf16>
    %38 = vector.shape_cast %37 : vector<1x128x128xbf16> to vector<128x128xbf16>
    %cst_20 = arith.constant dense<0.000000e+00> : vector<128x128xf32>
    %39 = tpu.matmul %36, %38, %cst_20 {dimension_numbers = #tpu.dot_dimension_numbers<[1], [0], [0], [1], [0, 0, 1, 1], [], []>} : vector<128x128xbf16>, vector<128x128xbf16>, vector<128x128xf32> -> vector<128x128xf32>
    %40 = arith.addf %34, %39 : vector<128x128xf32>
    %41 = vector.extract_strided_slice %3 {offsets = [2, 0, 0], sizes = [8, 16, 128], strides = [1, 1, 1]} : vector<10x18x128xbf16> to vector<8x16x128xbf16>
    %42 = vector.shape_cast %41 : vector<8x16x128xbf16> to vector<128x128xbf16>
    %c6 = arith.constant 6 : index
    %c0_21 = arith.constant 0 : index
    %c0_22 = arith.constant 0 : index
    %43 = vector.load %arg3[%c6, %c0_21, %c0_22] : memref<9x128x128xbf16, #tpu.memory_space<vmem>>, vector<1x128x128xbf16>
    %44 = vector.shape_cast %43 : vector<1x128x128xbf16> to vector<128x128xbf16>
    %cst_23 = arith.constant dense<0.000000e+00> : vector<128x128xf32>
    %45 = tpu.matmul %42, %44, %cst_23 {dimension_numbers = #tpu.dot_dimension_numbers<[1], [0], [0], [1], [0, 0, 1, 1], [], []>} : vector<128x128xbf16>, vector<128x128xbf16>, vector<128x128xf32> -> vector<128x128xf32>
    %46 = arith.addf %40, %45 : vector<128x128xf32>
    %47 = vector.extract_strided_slice %3 {offsets = [2, 1, 0], sizes = [8, 16, 128], strides = [1, 1, 1]} : vector<10x18x128xbf16> to vector<8x16x128xbf16>
    %48 = vector.shape_cast %47 : vector<8x16x128xbf16> to vector<128x128xbf16>
    %c7 = arith.constant 7 : index
    %c0_24 = arith.constant 0 : index
    %c0_25 = arith.constant 0 : index
    %49 = vector.load %arg3[%c7, %c0_24, %c0_25] : memref<9x128x128xbf16, #tpu.memory_space<vmem>>, vector<1x128x128xbf16>
    %50 = vector.shape_cast %49 : vector<1x128x128xbf16> to vector<128x128xbf16>
    %cst_26 = arith.constant dense<0.000000e+00> : vector<128x128xf32>
    %51 = tpu.matmul %48, %50, %cst_26 {dimension_numbers = #tpu.dot_dimension_numbers<[1], [0], [0], [1], [0, 0, 1, 1], [], []>} : vector<128x128xbf16>, vector<128x128xbf16>, vector<128x128xf32> -> vector<128x128xf32>
    %52 = arith.addf %46, %51 : vector<128x128xf32>
    %53 = vector.extract_strided_slice %3 {offsets = [2, 2, 0], sizes = [8, 16, 128], strides = [1, 1, 1]} : vector<10x18x128xbf16> to vector<8x16x128xbf16>
    %54 = vector.shape_cast %53 : vector<8x16x128xbf16> to vector<128x128xbf16>
    %c8 = arith.constant 8 : index
    %c0_27 = arith.constant 0 : index
    %c0_28 = arith.constant 0 : index
    %55 = vector.load %arg3[%c8, %c0_27, %c0_28] : memref<9x128x128xbf16, #tpu.memory_space<vmem>>, vector<1x128x128xbf16>
    %56 = vector.shape_cast %55 : vector<1x128x128xbf16> to vector<128x128xbf16>
    %cst_29 = arith.constant dense<0.000000e+00> : vector<128x128xf32>
    %57 = tpu.matmul %54, %56, %cst_29 {dimension_numbers = #tpu.dot_dimension_numbers<[1], [0], [0], [1], [0, 0, 1, 1], [], []>} : vector<128x128xbf16>, vector<128x128xbf16>, vector<128x128xf32> -> vector<128x128xf32>
    %58 = arith.addf %52, %57 : vector<128x128xf32>
    %59 = arith.truncf %58 : vector<128x128xf32> to vector<128x128xbf16>
    %c0_30 = arith.constant 0 : index
    %c0_31 = arith.constant 0 : index
    %c0_32 = arith.constant 0 : index
    %60 = vector.load %arg4[%c0_30, %c0_31, %c0_32] : memref<1x128x128xbf16, #tpu.memory_space<vmem>>, vector<1x128x128xbf16>
    %61 = vector.shape_cast %60 : vector<1x128x128xbf16> to vector<128x128xbf16>
    %62 = vector.shape_cast %59 : vector<128x128xbf16> to vector<1x128x128xbf16>
    tpu.vector_store %arg4[%c0_30, %c0_31, %c0_32], %62 {strides = array<i32>} : memref<1x128x128xbf16, #tpu.memory_space<vmem>>, vector<1x128x128xbf16>,
    %cst_33 = arith.constant dense<0.000000e+00> : vector<128xf32>
    %63 = vector.multi_reduction <add>, %58, %cst_33 [0] : vector<128x128xf32> to vector<128xf32>
    %64 = vector.shape_cast %63 : vector<128xf32> to vector<1x128xf32>
    %c0_34 = arith.constant 0 : index
    %c0_35 = arith.constant 0 : index
    %c0_36 = arith.constant 0 : index
    %65 = vector.load %arg5[%c0_34, %c0_35, %c0_36] : memref<1x1x128xf32, #tpu.memory_space<vmem>>, vector<1x1x128xf32>
    %66 = vector.shape_cast %65 : vector<1x1x128xf32> to vector<1x128xf32>
    %67 = vector.shape_cast %64 : vector<1x128xf32> to vector<1x1x128xf32>
    tpu.vector_store %arg5[%c0_34, %c0_35, %c0_36], %67 {strides = array<i32>} : memref<1x1x128xf32, #tpu.memory_space<vmem>>, vector<1x1x128xf32>,
    %68 = arith.mulf %58, %58 : vector<128x128xf32>
    %cst_37 = arith.constant dense<0.000000e+00> : vector<128xf32>
    %69 = vector.multi_reduction <add>, %68, %cst_37 [0] : vector<128x128xf32> to vector<128xf32>
    %70 = vector.shape_cast %69 : vector<128xf32> to vector<1x128xf32>
    %c0_38 = arith.constant 0 : index
    %c0_39 = arith.constant 0 : index
    %c0_40 = arith.constant 0 : index
    %71 = vector.load %arg6[%c0_38, %c0_39, %c0_40] : memref<1x1x128xf32, #tpu.memory_space<vmem>>, vector<1x1x128xf32>
    %72 = vector.shape_cast %71 : vector<1x1x128xf32> to vector<1x128xf32>
    %73 = vector.shape_cast %70 : vector<1x128xf32> to vector<1x1x128xf32>
    tpu.vector_store %arg6[%c0_38, %c0_39, %c0_40], %73 {strides = array<i32>} : memref<1x1x128xf32, #tpu.memory_space<vmem>>, vector<1x1x128xf32>,
    return
  }
  func.func @transform_0(%arg0: i32, %arg1: i32) -> (i32, i32, i32, i32) {
    %c0_i32 = arith.constant 0 : i32
    %c0_i32_0 = arith.constant 0 : i32
    %c0_i32_1 = arith.constant 0 : i32
    %c0_i32_2 = arith.constant 0 : i32
    return %arg0, %c0_i32, %c0_i32_0, %c0_i32_1 : i32, i32, i32, i32
  }
  func.func @transform_1(%arg0: i32, %arg1: i32) -> (i32, i32, i32) {
    %c0_i32 = arith.constant 0 : i32
    %c0_i32_0 = arith.constant 0 : i32
    %c0_i32_1 = arith.constant 0 : i32
    %c0_i32_2 = arith.constant 0 : i32
    return %c0_i32, %c0_i32_0, %c0_i32_1 : i32, i32, i32
  }
  func.func @transform_2(%arg0: i32, %arg1: i32) -> (i32, i32, i32) {
    %c2_i32 = arith.constant 2 : i32
    %0 = arith.muli %arg0, %c2_i32 : i32
    %1 = arith.addi %0, %arg1 : i32
    %c0_i32 = arith.constant 0 : i32
    %c0_i32_0 = arith.constant 0 : i32
    %c0_i32_1 = arith.constant 0 : i32
    return %1, %c0_i32, %c0_i32_0 : i32, i32, i32
  }
  func.func @transform_3(%arg0: i32, %arg1: i32) -> (i32, i32, i32) {
    %c2_i32 = arith.constant 2 : i32
    %0 = arith.muli %arg0, %c2_i32 : i32
    %1 = arith.addi %0, %arg1 : i32
    %c0_i32 = arith.constant 0 : i32
    %c0_i32_0 = arith.constant 0 : i32
    %c0_i32_1 = arith.constant 0 : i32
    return %1, %c0_i32, %c0_i32_0 : i32, i32, i32
  }
  func.func @transform_4(%arg0: i32, %arg1: i32) -> (i32, i32, i32) {
    %c2_i32 = arith.constant 2 : i32
    %0 = arith.muli %arg0, %c2_i32 : i32
    %1 = arith.addi %0, %arg1 : i32
    %c0_i32 = arith.constant 0 : i32
    %c0_i32_0 = arith.constant 0 : i32
    %c0_i32_1 = arith.constant 0 : i32
    return %1, %c0_i32, %c0_i32_0 : i32, i32, i32
  }
}

module attributes {stable_mosaic.version = 11 : i64} {
  func.func @_conv2_kernel(%arg0: i32, %arg1: i32, %arg2: memref<1x18x18x128xbf16, #tpu.memory_space<vmem>>, %arg3: memref<9x128x128xbf16, #tpu.memory_space<vmem>>, %arg4: memref<1x128xf32, #tpu.memory_space<vmem>>, %arg5: memref<1x128xf32, #tpu.memory_space<vmem>>, %arg6: memref<1x128xf32, #tpu.memory_space<vmem>>, %arg7: memref<1x128x128xf32, #tpu.memory_space<vmem>>, %arg8: memref<1x128x128xf32, #tpu.memory_space<vmem>>) attributes {dimension_semantics = [#tpu.dimension_semantics<parallel>, #tpu.dimension_semantics<parallel>], iteration_bounds = array<i64: 2, 2>, scalar_prefetch = 0 : i64, scratch_operands = 0 : i64, tpu.core_type = #tpu.core_type<tc>, window_params = [{transform_indices = @transform_0, window_bounds = array<i64: 1, 18, 18, 128>}, {pipeline_mode = #tpu.pipeline_mode<synchronous>, transform_indices = @transform_1, window_bounds = array<i64: 9, 128, 128>}, {pipeline_mode = #tpu.pipeline_mode<synchronous>, transform_indices = @transform_2, window_bounds = array<i64: 1, 128>}, {pipeline_mode = #tpu.pipeline_mode<synchronous>, transform_indices = @transform_3, window_bounds = array<i64: 1, 128>}, {pipeline_mode = #tpu.pipeline_mode<synchronous>, transform_indices = @transform_4, window_bounds = array<i64: 1, 128>}, {transform_indices = @transform_5, window_bounds = array<i64: 1, 128, 128>}, {transform_indices = @transform_6, window_bounds = array<i64: 1, 128, 128>}]} {
    %c8_i32 = arith.constant 8 : i32
    %0 = arith.muli %arg1, %c8_i32 : i32
    %c0 = arith.constant 0 : index
    %1 = arith.index_cast %0 : i32 to index
    %c0_0 = arith.constant 0 : index
    %c0_1 = arith.constant 0 : index
    %2 = vector.load %arg2[%c0, %1, %c0_0, %c0_1] : memref<1x18x18x128xbf16, #tpu.memory_space<vmem>>, vector<1x10x18x128xbf16>
    %3 = vector.shape_cast %2 : vector<1x10x18x128xbf16> to vector<10x18x128xbf16>
    %4 = arith.extf %3 : vector<10x18x128xbf16> to vector<10x18x128xf32>
    %c0_2 = arith.constant 0 : index
    %c0_3 = arith.constant 0 : index
    %5 = vector.load %arg4[%c0_2, %c0_3] : memref<1x128xf32, #tpu.memory_space<vmem>>, vector<1x128xf32>
    %6 = vector.shape_cast %5 : vector<1x128xf32> to vector<1x1x128xf32>
    %7 = vector.broadcast %6 : vector<1x1x128xf32> to vector<10x18x128xf32>
    %8 = arith.mulf %4, %7 : vector<10x18x128xf32>
    %c0_4 = arith.constant 0 : index
    %c0_5 = arith.constant 0 : index
    %9 = vector.load %arg5[%c0_4, %c0_5] : memref<1x128xf32, #tpu.memory_space<vmem>>, vector<1x128xf32>
    %10 = vector.shape_cast %9 : vector<1x128xf32> to vector<1x1x128xf32>
    %11 = vector.broadcast %10 : vector<1x1x128xf32> to vector<10x18x128xf32>
    %12 = arith.addf %8, %11 : vector<10x18x128xf32>
    %cst = arith.constant 0.000000e+00 : f32
    %13 = vector.broadcast %cst : f32 to vector<10x18x128xf32>
    %14 = arith.maximumf %12, %13 : vector<10x18x128xf32>
    %15 = tpu.iota {dimensions = array<i32: 0>} : vector<10x18x128xi32>
    %16 = vector.broadcast %0 : i32 to vector<10x18x128xi32>
    %17 = arith.addi %15, %16 : vector<10x18x128xi32>
    %18 = tpu.iota {dimensions = array<i32: 1>} : vector<10x18x128xi32>
    %c1_i32 = arith.constant 1 : i32
    %19 = vector.broadcast %c1_i32 : i32 to vector<10x18x128xi32>
    %20 = arith.cmpi sge, %17, %19 : vector<10x18x128xi32>
    %c16_i32 = arith.constant 16 : i32
    %21 = vector.broadcast %c16_i32 : i32 to vector<10x18x128xi32>
    %22 = arith.cmpi sle, %17, %21 : vector<10x18x128xi32>
    %23 = arith.andi %20, %22 : vector<10x18x128xi1>
    %c1_i32_6 = arith.constant 1 : i32
    %24 = vector.broadcast %c1_i32_6 : i32 to vector<10x18x128xi32>
    %25 = arith.cmpi sge, %18, %24 : vector<10x18x128xi32>
    %26 = arith.andi %23, %25 : vector<10x18x128xi1>
    %c16_i32_7 = arith.constant 16 : i32
    %27 = vector.broadcast %c16_i32_7 : i32 to vector<10x18x128xi32>
    %28 = arith.cmpi sle, %18, %27 : vector<10x18x128xi32>
    %29 = arith.andi %26, %28 : vector<10x18x128xi1>
    %cst_8 = arith.constant 0.000000e+00 : f32
    %30 = vector.broadcast %cst_8 : f32 to vector<10x18x128xf32>
    %31 = arith.select %29, %14, %30 : vector<10x18x128xi1>, vector<10x18x128xf32>
    %32 = arith.truncf %31 : vector<10x18x128xf32> to vector<10x18x128xbf16>
    %cst_9 = arith.constant 0.000000e+00 : f32
    %33 = vector.broadcast %cst_9 : f32 to vector<128x128xf32>
    %34 = vector.extract_strided_slice %32 {offsets = [0, 0, 0], sizes = [8, 16, 128], strides = [1, 1, 1]} : vector<10x18x128xbf16> to vector<8x16x128xbf16>
    %35 = vector.shape_cast %34 : vector<8x16x128xbf16> to vector<128x128xbf16>
    %c0_10 = arith.constant 0 : index
    %c0_11 = arith.constant 0 : index
    %c0_12 = arith.constant 0 : index
    %36 = vector.load %arg3[%c0_10, %c0_11, %c0_12] : memref<9x128x128xbf16, #tpu.memory_space<vmem>>, vector<1x128x128xbf16>
    %37 = vector.shape_cast %36 : vector<1x128x128xbf16> to vector<128x128xbf16>
    %cst_13 = arith.constant dense<0.000000e+00> : vector<128x128xf32>
    %38 = tpu.matmul %35, %37, %cst_13 {dimension_numbers = #tpu.dot_dimension_numbers<[1], [0], [0], [1], [0, 0, 1, 1], [], []>} : vector<128x128xbf16>, vector<128x128xbf16>, vector<128x128xf32> -> vector<128x128xf32>
    %39 = arith.addf %33, %38 : vector<128x128xf32>
    %40 = vector.extract_strided_slice %32 {offsets = [0, 1, 0], sizes = [8, 16, 128], strides = [1, 1, 1]} : vector<10x18x128xbf16> to vector<8x16x128xbf16>
    %41 = vector.shape_cast %40 : vector<8x16x128xbf16> to vector<128x128xbf16>
    %c1 = arith.constant 1 : index
    %c0_14 = arith.constant 0 : index
    %c0_15 = arith.constant 0 : index
    %42 = vector.load %arg3[%c1, %c0_14, %c0_15] : memref<9x128x128xbf16, #tpu.memory_space<vmem>>, vector<1x128x128xbf16>
    %43 = vector.shape_cast %42 : vector<1x128x128xbf16> to vector<128x128xbf16>
    %cst_16 = arith.constant dense<0.000000e+00> : vector<128x128xf32>
    %44 = tpu.matmul %41, %43, %cst_16 {dimension_numbers = #tpu.dot_dimension_numbers<[1], [0], [0], [1], [0, 0, 1, 1], [], []>} : vector<128x128xbf16>, vector<128x128xbf16>, vector<128x128xf32> -> vector<128x128xf32>
    %45 = arith.addf %39, %44 : vector<128x128xf32>
    %46 = vector.extract_strided_slice %32 {offsets = [0, 2, 0], sizes = [8, 16, 128], strides = [1, 1, 1]} : vector<10x18x128xbf16> to vector<8x16x128xbf16>
    %47 = vector.shape_cast %46 : vector<8x16x128xbf16> to vector<128x128xbf16>
    %c2 = arith.constant 2 : index
    %c0_17 = arith.constant 0 : index
    %c0_18 = arith.constant 0 : index
    %48 = vector.load %arg3[%c2, %c0_17, %c0_18] : memref<9x128x128xbf16, #tpu.memory_space<vmem>>, vector<1x128x128xbf16>
    %49 = vector.shape_cast %48 : vector<1x128x128xbf16> to vector<128x128xbf16>
    %cst_19 = arith.constant dense<0.000000e+00> : vector<128x128xf32>
    %50 = tpu.matmul %47, %49, %cst_19 {dimension_numbers = #tpu.dot_dimension_numbers<[1], [0], [0], [1], [0, 0, 1, 1], [], []>} : vector<128x128xbf16>, vector<128x128xbf16>, vector<128x128xf32> -> vector<128x128xf32>
    %51 = arith.addf %45, %50 : vector<128x128xf32>
    %52 = vector.extract_strided_slice %32 {offsets = [1, 0, 0], sizes = [8, 16, 128], strides = [1, 1, 1]} : vector<10x18x128xbf16> to vector<8x16x128xbf16>
    %53 = vector.shape_cast %52 : vector<8x16x128xbf16> to vector<128x128xbf16>
    %c3 = arith.constant 3 : index
    %c0_20 = arith.constant 0 : index
    %c0_21 = arith.constant 0 : index
    %54 = vector.load %arg3[%c3, %c0_20, %c0_21] : memref<9x128x128xbf16, #tpu.memory_space<vmem>>, vector<1x128x128xbf16>
    %55 = vector.shape_cast %54 : vector<1x128x128xbf16> to vector<128x128xbf16>
    %cst_22 = arith.constant dense<0.000000e+00> : vector<128x128xf32>
    %56 = tpu.matmul %53, %55, %cst_22 {dimension_numbers = #tpu.dot_dimension_numbers<[1], [0], [0], [1], [0, 0, 1, 1], [], []>} : vector<128x128xbf16>, vector<128x128xbf16>, vector<128x128xf32> -> vector<128x128xf32>
    %57 = arith.addf %51, %56 : vector<128x128xf32>
    %58 = vector.extract_strided_slice %32 {offsets = [1, 1, 0], sizes = [8, 16, 128], strides = [1, 1, 1]} : vector<10x18x128xbf16> to vector<8x16x128xbf16>
    %59 = vector.shape_cast %58 : vector<8x16x128xbf16> to vector<128x128xbf16>
    %c4 = arith.constant 4 : index
    %c0_23 = arith.constant 0 : index
    %c0_24 = arith.constant 0 : index
    %60 = vector.load %arg3[%c4, %c0_23, %c0_24] : memref<9x128x128xbf16, #tpu.memory_space<vmem>>, vector<1x128x128xbf16>
    %61 = vector.shape_cast %60 : vector<1x128x128xbf16> to vector<128x128xbf16>
    %cst_25 = arith.constant dense<0.000000e+00> : vector<128x128xf32>
    %62 = tpu.matmul %59, %61, %cst_25 {dimension_numbers = #tpu.dot_dimension_numbers<[1], [0], [0], [1], [0, 0, 1, 1], [], []>} : vector<128x128xbf16>, vector<128x128xbf16>, vector<128x128xf32> -> vector<128x128xf32>
    %63 = arith.addf %57, %62 : vector<128x128xf32>
    %64 = vector.extract_strided_slice %32 {offsets = [1, 2, 0], sizes = [8, 16, 128], strides = [1, 1, 1]} : vector<10x18x128xbf16> to vector<8x16x128xbf16>
    %65 = vector.shape_cast %64 : vector<8x16x128xbf16> to vector<128x128xbf16>
    %c5 = arith.constant 5 : index
    %c0_26 = arith.constant 0 : index
    %c0_27 = arith.constant 0 : index
    %66 = vector.load %arg3[%c5, %c0_26, %c0_27] : memref<9x128x128xbf16, #tpu.memory_space<vmem>>, vector<1x128x128xbf16>
    %67 = vector.shape_cast %66 : vector<1x128x128xbf16> to vector<128x128xbf16>
    %cst_28 = arith.constant dense<0.000000e+00> : vector<128x128xf32>
    %68 = tpu.matmul %65, %67, %cst_28 {dimension_numbers = #tpu.dot_dimension_numbers<[1], [0], [0], [1], [0, 0, 1, 1], [], []>} : vector<128x128xbf16>, vector<128x128xbf16>, vector<128x128xf32> -> vector<128x128xf32>
    %69 = arith.addf %63, %68 : vector<128x128xf32>
    %70 = vector.extract_strided_slice %32 {offsets = [2, 0, 0], sizes = [8, 16, 128], strides = [1, 1, 1]} : vector<10x18x128xbf16> to vector<8x16x128xbf16>
    %71 = vector.shape_cast %70 : vector<8x16x128xbf16> to vector<128x128xbf16>
    %c6 = arith.constant 6 : index
    %c0_29 = arith.constant 0 : index
    %c0_30 = arith.constant 0 : index
    %72 = vector.load %arg3[%c6, %c0_29, %c0_30] : memref<9x128x128xbf16, #tpu.memory_space<vmem>>, vector<1x128x128xbf16>
    %73 = vector.shape_cast %72 : vector<1x128x128xbf16> to vector<128x128xbf16>
    %cst_31 = arith.constant dense<0.000000e+00> : vector<128x128xf32>
    %74 = tpu.matmul %71, %73, %cst_31 {dimension_numbers = #tpu.dot_dimension_numbers<[1], [0], [0], [1], [0, 0, 1, 1], [], []>} : vector<128x128xbf16>, vector<128x128xbf16>, vector<128x128xf32> -> vector<128x128xf32>
    %75 = arith.addf %69, %74 : vector<128x128xf32>
    %76 = vector.extract_strided_slice %32 {offsets = [2, 1, 0], sizes = [8, 16, 128], strides = [1, 1, 1]} : vector<10x18x128xbf16> to vector<8x16x128xbf16>
    %77 = vector.shape_cast %76 : vector<8x16x128xbf16> to vector<128x128xbf16>
    %c7 = arith.constant 7 : index
    %c0_32 = arith.constant 0 : index
    %c0_33 = arith.constant 0 : index
    %78 = vector.load %arg3[%c7, %c0_32, %c0_33] : memref<9x128x128xbf16, #tpu.memory_space<vmem>>, vector<1x128x128xbf16>
    %79 = vector.shape_cast %78 : vector<1x128x128xbf16> to vector<128x128xbf16>
    %cst_34 = arith.constant dense<0.000000e+00> : vector<128x128xf32>
    %80 = tpu.matmul %77, %79, %cst_34 {dimension_numbers = #tpu.dot_dimension_numbers<[1], [0], [0], [1], [0, 0, 1, 1], [], []>} : vector<128x128xbf16>, vector<128x128xbf16>, vector<128x128xf32> -> vector<128x128xf32>
    %81 = arith.addf %75, %80 : vector<128x128xf32>
    %82 = vector.extract_strided_slice %32 {offsets = [2, 2, 0], sizes = [8, 16, 128], strides = [1, 1, 1]} : vector<10x18x128xbf16> to vector<8x16x128xbf16>
    %83 = vector.shape_cast %82 : vector<8x16x128xbf16> to vector<128x128xbf16>
    %c8 = arith.constant 8 : index
    %c0_35 = arith.constant 0 : index
    %c0_36 = arith.constant 0 : index
    %84 = vector.load %arg3[%c8, %c0_35, %c0_36] : memref<9x128x128xbf16, #tpu.memory_space<vmem>>, vector<1x128x128xbf16>
    %85 = vector.shape_cast %84 : vector<1x128x128xbf16> to vector<128x128xbf16>
    %cst_37 = arith.constant dense<0.000000e+00> : vector<128x128xf32>
    %86 = tpu.matmul %83, %85, %cst_37 {dimension_numbers = #tpu.dot_dimension_numbers<[1], [0], [0], [1], [0, 0, 1, 1], [], []>} : vector<128x128xbf16>, vector<128x128xbf16>, vector<128x128xf32> -> vector<128x128xf32>
    %87 = arith.addf %81, %86 : vector<128x128xf32>
    %c0_38 = arith.constant 0 : index
    %c0_39 = arith.constant 0 : index
    %88 = vector.load %arg6[%c0_38, %c0_39] : memref<1x128xf32, #tpu.memory_space<vmem>>, vector<1x128xf32>
    %89 = vector.broadcast %88 : vector<1x128xf32> to vector<128x128xf32>
    %90 = arith.addf %87, %89 : vector<128x128xf32>
    %c0_40 = arith.constant 0 : index
    %c0_41 = arith.constant 0 : index
    %c0_42 = arith.constant 0 : index
    %91 = vector.load %arg7[%c0_40, %c0_41, %c0_42] : memref<1x128x128xf32, #tpu.memory_space<vmem>>, vector<1x128x128xf32>
    %92 = vector.shape_cast %91 : vector<1x128x128xf32> to vector<128x128xf32>
    %93 = arith.addf %90, %92 : vector<128x128xf32>
    %c0_43 = arith.constant 0 : index
    %c0_44 = arith.constant 0 : index
    %c0_45 = arith.constant 0 : index
    %94 = vector.load %arg8[%c0_43, %c0_44, %c0_45] : memref<1x128x128xf32, #tpu.memory_space<vmem>>, vector<1x128x128xf32>
    %95 = vector.shape_cast %94 : vector<1x128x128xf32> to vector<128x128xf32>
    %96 = vector.shape_cast %93 : vector<128x128xf32> to vector<1x128x128xf32>
    tpu.vector_store %arg8[%c0_43, %c0_44, %c0_45], %96 {strides = array<i32>} : memref<1x128x128xf32, #tpu.memory_space<vmem>>, vector<1x128x128xf32>,
    return
  }
  func.func @transform_0(%arg0: i32, %arg1: i32) -> (i32, i32, i32, i32) {
    %c0_i32 = arith.constant 0 : i32
    %c0_i32_0 = arith.constant 0 : i32
    %c0_i32_1 = arith.constant 0 : i32
    %c0_i32_2 = arith.constant 0 : i32
    return %arg0, %c0_i32, %c0_i32_0, %c0_i32_1 : i32, i32, i32, i32
  }
  func.func @transform_1(%arg0: i32, %arg1: i32) -> (i32, i32, i32) {
    %c0_i32 = arith.constant 0 : i32
    %c0_i32_0 = arith.constant 0 : i32
    %c0_i32_1 = arith.constant 0 : i32
    %c0_i32_2 = arith.constant 0 : i32
    return %c0_i32, %c0_i32_0, %c0_i32_1 : i32, i32, i32
  }
  func.func @transform_2(%arg0: i32, %arg1: i32) -> (i32, i32) {
    %c0_i32 = arith.constant 0 : i32
    %c0_i32_0 = arith.constant 0 : i32
    %c0_i32_1 = arith.constant 0 : i32
    return %c0_i32, %c0_i32_0 : i32, i32
  }
  func.func @transform_3(%arg0: i32, %arg1: i32) -> (i32, i32) {
    %c0_i32 = arith.constant 0 : i32
    %c0_i32_0 = arith.constant 0 : i32
    %c0_i32_1 = arith.constant 0 : i32
    return %c0_i32, %c0_i32_0 : i32, i32
  }
  func.func @transform_4(%arg0: i32, %arg1: i32) -> (i32, i32) {
    %c0_i32 = arith.constant 0 : i32
    %c0_i32_0 = arith.constant 0 : i32
    %c0_i32_1 = arith.constant 0 : i32
    return %c0_i32, %c0_i32_0 : i32, i32
  }
  func.func @transform_5(%arg0: i32, %arg1: i32) -> (i32, i32, i32) {
    %c2_i32 = arith.constant 2 : i32
    %0 = arith.muli %arg0, %c2_i32 : i32
    %1 = arith.addi %0, %arg1 : i32
    %c0_i32 = arith.constant 0 : i32
    %c0_i32_0 = arith.constant 0 : i32
    %c0_i32_1 = arith.constant 0 : i32
    return %1, %c0_i32, %c0_i32_0 : i32, i32, i32
  }
  func.func @transform_6(%arg0: i32, %arg1: i32) -> (i32, i32, i32) {
    %c2_i32 = arith.constant 2 : i32
    %0 = arith.muli %arg0, %c2_i32 : i32
    %1 = arith.addi %0, %arg1 : i32
    %c0_i32 = arith.constant 0 : i32
    %c0_i32_0 = arith.constant 0 : i32
    %c0_i32_1 = arith.constant 0 : i32
    return %1, %c0_i32, %c0_i32_0 : i32, i32, i32
  }
}

</mosaic_0001>

<llo_original>
// kernel: resnet_block_forward.2
$region0: #{resnet_block_forward.2}
  #allocation0 [shape = 'u32[]', space=smem, size = 0x4, offset = 0x4, fixed_abs, tag = 'smem constant byte address 0x4 - core index']
  #allocation1 [shape = 'u32[144,128]{1,0:T(1,128)}', space=vmem, size = 0x12000, scoped, tag = 'internal scratch']
  %s0 = inlined_call_operand.vmem [shape: bf16[2,18,18,128], index: 0, kind: input, shape index: {}]
  %s1 = inlined_call_operand.vmem [shape: bf16[9,128,128], index: 1, kind: input, shape index: {}]
  %s2 = inlined_call_operand.vmem [shape: bf16[4,128,128], index: 2, kind: output, shape index: {0}]
  %s3 = inlined_call_operand.vmem [shape: f32[4,1,128], index: 3, kind: output, shape index: {1}]
  %s4 = inlined_call_operand.vmem [shape: f32[4,1,128], index: 4, kind: output, shape index: {2}]
  %5 = xla_tuple %s2, %s3, %s4
  %s6 = sld [smem:[#allocation0]]
  $region57: #{resnet_block_forward.2} parent=0
    _
  %s8 = ssub.s32 1, %s6
  %s9 = scalar_select 0, %s8, %s6
  loop: start=0, step=1, limit=6
  $region2: #{resnet_block_forward.2} parent=0 // loop_pre_header
    _
  $region3: #{resnet_block_forward.2} parent=0 // loop_header
    %s11 = sphi 0, %s15
    %p12 = scmp.ge.s32.totalorder %s11, 6
    %s18 = sphi 0, %s30
    %s19 = sphi 0, %s26
    %s20 = sphi 0, %s18
    %s21 = sphi 0, %s19
    %s22 = sphi 0, %s20
    %s23 = sphi 0, %s21
    %s33 = sphi 0, %s35
    %s36 = sphi 0, %s33
    %s37 = sphi 0, %s36
    %s53 = sphi 0, %s37
    %s57 = sphi 0, %s57
    %s59 = sphi 0, %s57
    %s60 = sphi 0, %s59
    %s74 = sphi 0, %s60
    %s84 = sphi 0, %s86
    %s87 = sphi 0, %s84
    %s88 = sphi 0, %s87
    %s104 = sphi 0, %s88
    %s114 = sphi 0, %s116
    %s117 = sphi 0, %s114
    %s118 = sphi 0, %s117
    %s134 = sphi 0, %s118
    %s144 = sphi 0, %s146
    %s147 = sphi 0, %s144
    %s148 = sphi 0, %s147
    %s164 = sphi 0, %s148
  $region4: #{resnet_block_forward.2} parent=0 // loop_header_branch
    %14 = sbr.rel (%p12) target = $region8
  $region5: #{resnet_block_forward.2} parent=0 // loop_body
    %s16 = ssub.s32 %s11, 1
    %s17 = ssub.s32 %s11, 2
    %s24 = sadd.s32 1, %s19
    %p25 = scmp.ge.s32.totalorder %s24, 2
    %s26 = scalar_select %p25, 0, %s24
    %s27 = sadd.s32 1, %s18
    %s28 = scalar_select %p25, %s27, %s18
    %p29 = scmp.ge.s32.totalorder %s28, 2
    %s30 = scalar_select %p29, 0, %s28
    %s31 = ssub.s32 %s18, %s30
    %p32 = scmp.eq.s32.totalorder %s31, 0
    %s34 = sadd.s32 %s33, 1
    %s35 = scalar_select %p32, %s33, %s34
    %p38 = pneg %p32
    %p39 = scmp.eq.s32.totalorder %s11, 3
    %p40 = por %p38, %p39
    %p41 = scmp.ne.s32.totalorder %s33, %s36
    %p42 = scmp.eq.s32.totalorder %s11, 0
    %p43 = por %p41, %p42
    %p44 = scmp.ne.s32.totalorder %s33, %s36
    %p45 = scmp.eq.s32.totalorder %s16, 3
    %p46 = por %p44, %p45
    %p47 = scmp.ne.s32.totalorder %s36, %s37
    %p48 = scmp.eq.s32.totalorder %s16, 0
    %p49 = por %p47, %p48
    %p50 = scmp.ne.s32.totalorder %s36, %s37
    %p51 = scmp.eq.s32.totalorder %s17, 3
    %p52 = por %p50, %p51
    %p54 = scmp.ne.s32.totalorder %s37, %s53
    %p55 = scmp.eq.s32.totalorder %s17, 0
    %p56 = por %p54, %p55
    %s58 = sadd.s32 %s57, 1
    %p61 = scmp.eq.s32.totalorder %s11, 3
    %p62 = scmp.ne.s32.totalorder %s57, %s59
    %p63 = scmp.eq.s32.totalorder %s11, 0
    %p64 = por %p62, %p63
    %p65 = scmp.ne.s32.totalorder %s57, %s59
    %p66 = scmp.eq.s32.totalorder %s16, 3
    %p67 = por %p65, %p66
    %p68 = scmp.ne.s32.totalorder %s59, %s60
    %p69 = scmp.eq.s32.totalorder %s16, 0
    %p70 = por %p68, %p69
    %p71 = scmp.ne.s32.totalorder %s59, %s60
    %p72 = scmp.eq.s32.totalorder %s17, 3
    %p73 = por %p71, %p72
    %p75 = scmp.ne.s32.totalorder %s60, %s74
    %p76 = scmp.eq.s32.totalorder %s17, 0
    %p77 = por %p75, %p76
    %s78 = smul.u32 %s18, 2
    %s79 = sadd.s32 %s78, %s19
    %s80 = smul.u32 %s30, 2
    %s81 = sadd.s32 %s80, %s26
    %s82 = ssub.s32 %s79, %s81
    %p83 = scmp.eq.s32.totalorder %s82, 0
    %s85 = sadd.s32 %s84, 1
    %s86 = scalar_select %p83, %s84, %s85
    %p89 = pneg %p83
    %p90 = scmp.eq.s32.totalorder %s11, 3
    %p91 = por %p89, %p90
    %p92 = scmp.ne.s32.totalorder %s84, %s87
    %p93 = scmp.eq.s32.totalorder %s11, 0
    %p94 = por %p92, %p93
    %p95 = scmp.ne.s32.totalorder %s84, %s87
    %p96 = scmp.eq.s32.totalorder %s16, 3
    %p97 = por %p95, %p96
    %p98 = scmp.ne.s32.totalorder %s87, %s88
    %p99 = scmp.eq.s32.totalorder %s16, 0
    %p100 = por %p98, %p99
    %p101 = scmp.ne.s32.totalorder %s87, %s88
    %p102 = scmp.eq.s32.totalorder %s17, 3
    %p103 = por %p101, %p102
    %p105 = scmp.ne.s32.totalorder %s88, %s104
    %p106 = scmp.eq.s32.totalorder %s17, 0
    %p107 = por %p105, %p106
    %s108 = smul.u32 %s18, 2
    %s109 = sadd.s32 %s108, %s19
    %s110 = smul.u32 %s30, 2
    %s111 = sadd.s32 %s110, %s26
    %s112 = ssub.s32 %s109, %s111
    %p113 = scmp.eq.s32.totalorder %s112, 0
    %s115 = sadd.s32 %s114, 1
    %s116 = scalar_select %p113, %s114, %s115
    %p119 = pneg %p113
    %p120 = scmp.eq.s32.totalorder %s11, 3
    %p121 = por %p119, %p120
    %p122 = scmp.ne.s32.totalorder %s114, %s117
    %p123 = scmp.eq.s32.totalorder %s11, 0
    %p124 = por %p122, %p123
    %p125 = scmp.ne.s32.totalorder %s114, %s117
    %p126 = scmp.eq.s32.totalorder %s16, 3
    %p127 = por %p125, %p126
    %p128 = scmp.ne.s32.totalorder %s117, %s118
    %p129 = scmp.eq.s32.totalorder %s16, 0
    %p130 = por %p128, %p129
    %p131 = scmp.ne.s32.totalorder %s117, %s118
    %p132 = scmp.eq.s32.totalorder %s17, 3
    %p133 = por %p131, %p132
    %p135 = scmp.ne.s32.totalorder %s118, %s134
    %p136 = scmp.eq.s32.totalorder %s17, 0
    %p137 = por %p135, %p136
    %s138 = smul.u32 %s18, 2
    %s139 = sadd.s32 %s138, %s19
    %s140 = smul.u32 %s30, 2
    %s141 = sadd.s32 %s140, %s26
    %s142 = ssub.s32 %s139, %s141
    %p143 = scmp.eq.s32.totalorder %s142, 0
    %s145 = sadd.s32 %s144, 1
    %s146 = scalar_select %p143, %s144, %s145
    %p149 = pneg %p143
    %p150 = scmp.eq.s32.totalorder %s11, 3
    %p151 = por %p149, %p150
    %p152 = scmp.ne.s32.totalorder %s144, %s147
    %p153 = scmp.eq.s32.totalorder %s11, 0
    %p154 = por %p152, %p153
    %p155 = scmp.ne.s32.totalorder %s144, %s147
    %p156 = scmp.eq.s32.totalorder %s16, 3
    %p157 = por %p155, %p156
    %p158 = scmp.ne.s32.totalorder %s147, %s148
    %p159 = scmp.eq.s32.totalorder %s16, 0
    %p160 = por %p158, %p159
    %p161 = scmp.ne.s32.totalorder %s147, %s148
    %p162 = scmp.eq.s32.totalorder %s17, 3
    %p163 = por %p161, %p162
    %p165 = scmp.ne.s32.totalorder %s148, %s164
    %p166 = scmp.eq.s32.totalorder %s17, 0
    %p167 = por %p165, %p166
    %p168 = scmp.le.s32.totalorder 1, %s11
    %p169 = scmp.lt.s32.totalorder %s11, 5
    %p170 = pnand %p168, %p169
    %p171 = pneg %p170
    // Predicated region
    $region9: #{resnet_block_forward.2} parent=5 // pred_check
      _
    $region10: #{resnet_block_forward.2} parent=5 // pred_check_branch
      %173 = sbr.rel (%p170) target = $region12
    $region11: #{resnet_block_forward.2} parent=5 // pred_region
      %s174 = ssub.s32 %s11, 1
      // Predicated region
      $region13: #{resnet_block_forward.2} parent=11 // pred_check
        %p175 = pneg %p70
      $region14: #{resnet_block_forward.2} parent=11 // pred_check_branch
        %177 = sbr.rel (%p175) target = $region16
      $region15: #{resnet_block_forward.2} parent=11 // pred_region
        _
      $region16: #{resnet_block_forward.2} parent=11 // pred_fallthru
        _
    $region12: #{resnet_block_forward.2} parent=5 // pred_fallthru
      _
    %p178 = scmp.lt.s32.totalorder %s11, 4
    // Predicated region
    $region17: #{resnet_block_forward.2} parent=5 // pred_check
      %p179 = pneg %p178
    $region18: #{resnet_block_forward.2} parent=5 // pred_check_branch
      %181 = sbr.rel (%p179) target = $region20
    $region19: #{resnet_block_forward.2} parent=5 // pred_region
      // Predicated region
      $region21: #{resnet_block_forward.2} parent=19 // pred_check
        %p182 = pneg %p43
      $region22: #{resnet_block_forward.2} parent=19 // pred_check_branch
        %184 = sbr.rel (%p182) target = $region24
      $region23: #{resnet_block_forward.2} parent=19 // pred_region
        %p185 = scmp.lt.s32.totalorder %s18, 1
        %s186 = scalar_select %p185, %s18, 1
        %s187 = smul.addr %s186, 54
        %s188 = smul.addr %s187, 4
        %s189 = scalar_lea.vmem %s0, %s188
      $region24: #{resnet_block_forward.2} parent=19 // pred_fallthru
        _
    $region20: #{resnet_block_forward.2} parent=5 // pred_fallthru
      _
    %p190 = scmp.le.s32.totalorder 1, %s11
    %p191 = scmp.lt.s32.totalorder %s11, 5
    %p192 = pnand %p190, %p191
    %p193 = pneg %p192
    // Predicated region
    $region25: #{resnet_block_forward.2} parent=5 // pred_check
      _
    $region26: #{resnet_block_forward.2} parent=5 // pred_check_branch
      %195 = sbr.rel (%p192) target = $region28
    $region27: #{resnet_block_forward.2} parent=5 // pred_region
      %s196 = ssub.s32 %s11, 1
      %p197 = scmp.lt.s32.totalorder %s20, 1
      %s198 = scalar_select %p197, %s20, 1
      %s199 = smul.addr %s198, 54
      %s200 = smul.addr %s199, 4
      %s201 = scalar_lea.vmem %s0, %s200
      %p202 = pneg %p49
      %p203 = pneg %p46
      %p204 = pneg %p70
      %p205 = pneg %p67
      %p206 = pneg %p100
      %p207 = pneg %p97
      %s208 = smul.u32 %s20, 2
      %s209 = sadd.s32 %s208, %s21
      %p210 = scmp.lt.s32.totalorder %s209, 3
      %s211 = scalar_select %p210, %s209, 3
      %s212 = smul.addr %s211, 16
      %s213 = smul.addr %s212, 4
      %s214 = scalar_lea.vmem %s2, %s213
      %p215 = pneg %p130
      %p216 = pneg %p127
      %s217 = smul.u32 %s20, 2
      %s218 = sadd.s32 %s217, %s21
      %p219 = scmp.lt.s32.totalorder %s218, 3
      %s220 = scalar_select %p219, %s218, 3
      %s221 = scalar_lea.vmem %s3, %s220
      %p222 = pneg %p160
      %p223 = pneg %p157
      %s224 = smul.u32 %s20, 2
      %s225 = sadd.s32 %s224, %s21
      %p226 = scmp.lt.s32.totalorder %s225, 3
      %s227 = scalar_select %p226, %s225, 3
      %s228 = scalar_lea.vmem %s4, %s227
      %p229 = scmp.lt.s32.totalorder %s20, 1
      %s230 = scalar_select %p229, %s20, 1
      %s231 = smul.addr %s230, 54
      %s232 = smul.addr %s231, 4
      %s233 = scalar_lea.vmem %s0, %s232
      %s234 = smul.u32 %s20, 2
      %s235 = sadd.s32 %s234, %s21
      %p236 = scmp.lt.s32.totalorder %s235, 3
      %s237 = scalar_select %p236, %s235, 3
      %s238 = smul.addr %s237, 16
      %s239 = smul.addr %s238, 4
      %s240 = scalar_lea.vmem %s2, %s239
      %s241 = smul.u32 %s20, 2
      %s242 = sadd.s32 %s241, %s21
      %s243 = smul.u32 %s20, 2
      %s244 = sadd.s32 %s243, %s21
      %p245 = scmp.lt.s32.totalorder %s244, 3
      %s246 = scalar_select %p245, %s244, 3
      %s247 = scalar_lea.vmem %s3, %s246
      %s248 = smul.u32 %s20, 2
      %s249 = sadd.s32 %s248, %s21
      %s250 = smul.u32 %s20, 2
      %s251 = sadd.s32 %s250, %s21
      %p252 = scmp.lt.s32.totalorder %s251, 3
      %s253 = scalar_select %p252, %s251, 3
      %s254 = scalar_lea.vmem %s4, %s253
      %s255 = smul.u32 %s20, 2
      %s256 = sadd.s32 %s255, %s21
      %s258 = smul.u32 %s21, 8
      %s259 = smul.u32 %s258, 3
      %s260 = smul.addr %s259, 4
      %s261 = scalar_lea.vmem %s233, %s260
      %v262 = vld [vmem:[%s261] sm:$0xf]
      %v263 = vld [vmem:[%s261 + $0x4] sm:$0xf]
      %v264 = vld [vmem:[%s261 + $0x8] sm:$0x1]
      %v265 = vld [vmem:[%s261 + $0xc] sm:$0xf]
      %v266 = vld [vmem:[%s261 + $0x10] sm:$0xf]
      %v267 = vld [vmem:[%s261 + $0x14] sm:$0x1]
      %v268 = vld [vmem:[%s261 + $0x18] sm:$0xf]
      %v269 = vld [vmem:[%s261 + $0x1c] sm:$0xf]
      %v270 = vld [vmem:[%s261 + $0x20] sm:$0x1]
      %v271 = vld [vmem:[%s261 + $0x24] sm:$0xf]
      %v272 = vld [vmem:[%s261 + $0x28] sm:$0xf]
      %v273 = vld [vmem:[%s261 + $0x2c] sm:$0x1]
      %v274 = vld [vmem:[%s261 + $0x30] sm:$0xf]
      %v275 = vld [vmem:[%s261 + $0x34] sm:$0xf]
      %v276 = vld [vmem:[%s261 + $0x38] sm:$0x1]
      %v277 = vld [vmem:[%s261 + $0x3c] sm:$0xf]
      %v278 = vld [vmem:[%s261 + $0x40] sm:$0xf]
      %v279 = vld [vmem:[%s261 + $0x44] sm:$0x1]
      %v280 = vld [vmem:[%s261 + $0x48] sm:$0xf]
      %v281 = vld [vmem:[%s261 + $0x4c] sm:$0xf]
      %v282 = vld [vmem:[%s261 + $0x50] sm:$0x1]
      %v283 = vld [vmem:[%s261 + $0x54] sm:$0xf]
      %v284 = vld [vmem:[%s261 + $0x58] sm:$0xf]
      %v285 = vld [vmem:[%s261 + $0x5c] sm:$0x1]
      %v286 = vld [vmem:[%s261 + $0x60] sm:$0xf]
      %v287 = vld [vmem:[%s261 + $0x64] sm:$0xf]
      %v288 = vld [vmem:[%s261 + $0x68] sm:$0x1]
      %v289 = vld [vmem:[%s261 + $0x6c] sm:$0xf]
      %v290 = vld [vmem:[%s261 + $0x70] sm:$0xf]
      %v291 = vld [vmem:[%s261 + $0x74] sm:$0x1]
      %v292 = vld [vmem:[%s1] sm:$0xf]
      %v293 = vld [vmem:[%s1 + $0x4] sm:$0xf]
      %v294 = vld [vmem:[%s1 + $0x8] sm:$0xf]
      %v295 = vld [vmem:[%s1 + $0xc] sm:$0xf]
      %v296 = vld [vmem:[%s1 + $0x10] sm:$0xf]
      %v297 = vld [vmem:[%s1 + $0x14] sm:$0xf]
      %v298 = vld [vmem:[%s1 + $0x18] sm:$0xf]
      %v299 = vld [vmem:[%s1 + $0x1c] sm:$0xf]
      %v300 = vld [vmem:[%s1 + $0x20] sm:$0xf]
      %v301 = vld [vmem:[%s1 + $0x24] sm:$0xf]
      %v302 = vld [vmem:[%s1 + $0x28] sm:$0xf]
      %v303 = vld [vmem:[%s1 + $0x2c] sm:$0xf]
      %v304 = vld [vmem:[%s1 + $0x30] sm:$0xf]
      %v305 = vld [vmem:[%s1 + $0x34] sm:$0xf]
      %v306 = vld [vmem:[%s1 + $0x38] sm:$0xf]
      %v307 = vld [vmem:[%s1 + $0x3c] sm:$0xf]
      %vm308 = vsmask.f32 3328
      %vm309 = vsmask.f32 7440
      %vm310 = vmor %vm308, %vm309
      %v312 = vshrl.u32 %v262, 16
      %v314 = vrot.slane %v312, 4
      %v315 = vshll.u32 %v262, 16
      %v317 = vrot.slane %v315, 5
      %v318 = vor.u32 %v314, %v317
      %v319 = vrot.slane %v318, 4
      %v321 = vshll.u32 %v263, 16
      %v323 = vrot.slane %v321, 5
      %v324 = vsel %vm310, %v319, %v323
      %v325 = vshrl.u32 %v263, 16
      %v327 = vrot.slane %v325, 4
      %v328 = vor.u32 %v327, %v323
      %v329 = vrot.slane %v328, 4
      %v331 = vshll.u32 %v264, 16
      %v333 = vrot.slane %v331, 5
      %v334 = vsel %vm310, %v329, %v333
      %v336 = vshrl.u32 %v265, 16
      %v338 = vrot.slane %v336, 4
      %v339 = vshll.u32 %v265, 16
      %v341 = vrot.slane %v339, 5
      %v342 = vor.u32 %v338, %v341
      %v343 = vrot.slane %v342, 4
      %v345 = vshll.u32 %v266, 16
      %v347 = vrot.slane %v345, 5
      %v348 = vsel %vm310, %v343, %v347
      %v349 = vshrl.u32 %v266, 16
      %v351 = vrot.slane %v349, 4
      %v352 = vor.u32 %v351, %v347
      %v353 = vrot.slane %v352, 4
      %v355 = vshll.u32 %v267, 16
      %v357 = vrot.slane %v355, 5
      %v358 = vsel %vm310, %v353, %v357
      %v360 = vshrl.u32 %v268, 16
      %v362 = vrot.slane %v360, 4
      %v363 = vshll.u32 %v268, 16
      %v365 = vrot.slane %v363, 5
      %v366 = vor.u32 %v362, %v365
      %v367 = vrot.slane %v366, 4
      %v369 = vshll.u32 %v269, 16
      %v371 = vrot.slane %v369, 5
      %v372 = vsel %vm310, %v367, %v371
      %v373 = vshrl.u32 %v269, 16
      %v375 = vrot.slane %v373, 4
      %v376 = vor.u32 %v375, %v371
      %v377 = vrot.slane %v376, 4
      %v379 = vshll.u32 %v270, 16
      %v381 = vrot.slane %v379, 5
      %v382 = vsel %vm310, %v377, %v381
      %v384 = vshrl.u32 %v271, 16
      %v386 = vrot.slane %v384, 4
      %v387 = vshll.u32 %v271, 16
      %v389 = vrot.slane %v387, 5
      %v390 = vor.u32 %v386, %v389
      %v391 = vrot.slane %v390, 4
      %v393 = vshll.u32 %v272, 16
      %v395 = vrot.slane %v393, 5
      %v396 = vsel %vm310, %v391, %v395
      %v397 = vshrl.u32 %v272, 16
      %v399 = vrot.slane %v397, 4
      %v400 = vor.u32 %v399, %v395
      %v401 = vrot.slane %v400, 4
      %v403 = vshll.u32 %v273, 16
      %v405 = vrot.slane %v403, 5
      %v406 = vsel %vm310, %v401, %v405
      %v408 = vshrl.u32 %v274, 16
      %v410 = vrot.slane %v408, 4
      %v411 = vshll.u32 %v274, 16
      %v413 = vrot.slane %v411, 5
      %v414 = vor.u32 %v410, %v413
      %v415 = vrot.slane %v414, 4
      %v417 = vshll.u32 %v275, 16
      %v419 = vrot.slane %v417, 5
      %v420 = vsel %vm310, %v415, %v419
      %v421 = vshrl.u32 %v275, 16
      %v423 = vrot.slane %v421, 4
      %v424 = vor.u32 %v423, %v419
      %v425 = vrot.slane %v424, 4
      %v427 = vshll.u32 %v276, 16
      %v429 = vrot.slane %v427, 5
      %v430 = vsel %vm310, %v425, %v429
      %v432 = vshrl.u32 %v277, 16
      %v434 = vrot.slane %v432, 4
      %v435 = vshll.u32 %v277, 16
      %v437 = vrot.slane %v435, 5
      %v438 = vor.u32 %v434, %v437
      %v439 = vrot.slane %v438, 4
      %v441 = vshll.u32 %v278, 16
      %v443 = vrot.slane %v441, 5
      %v444 = vsel %vm310, %v439, %v443
      %v445 = vshrl.u32 %v278, 16
      %v447 = vrot.slane %v445, 4
      %v448 = vor.u32 %v447, %v443
      %v449 = vrot.slane %v448, 4
      %v451 = vshll.u32 %v279, 16
      %v453 = vrot.slane %v451, 5
      %v454 = vsel %vm310, %v449, %v453
      %v456 = vshrl.u32 %v280, 16
      %v458 = vrot.slane %v456, 4
      %v459 = vshll.u32 %v280, 16
      %v461 = vrot.slane %v459, 5
      %v462 = vor.u32 %v458, %v461
      %v463 = vrot.slane %v462, 4
      %v465 = vshll.u32 %v281, 16
      %v467 = vrot.slane %v465, 5
      %v468 = vsel %vm310, %v463, %v467
      %v469 = vshrl.u32 %v281, 16
      %v471 = vrot.slane %v469, 4
      %v472 = vor.u32 %v471, %v467
      %v473 = vrot.slane %v472, 4
      %v475 = vshll.u32 %v282, 16
      %v477 = vrot.slane %v475, 5
      %v478 = vsel %vm310, %v473, %v477
      %v480 = vshrl.u32 %v283, 16
      %v482 = vrot.slane %v480, 4
      %v483 = vshll.u32 %v283, 16
      %v485 = vrot.slane %v483, 5
      %v486 = vor.u32 %v482, %v485
      %v487 = vrot.slane %v486, 4
      %v489 = vshll.u32 %v284, 16
      %v491 = vrot.slane %v489, 5
      %v492 = vsel %vm310, %v487, %v491
      %v493 = vshrl.u32 %v284, 16
      %v495 = vrot.slane %v493, 4
      %v496 = vor.u32 %v495, %v491
      %v497 = vrot.slane %v496, 4
      %v499 = vshll.u32 %v285, 16
      %v501 = vrot.slane %v499, 5
      %v502 = vsel %vm310, %v497, %v501
      %s503 = scalar_lea.vmem %s1, 64
      %v504 = vld [vmem:[%s503] sm:$0xf]
      %v505 = vld [vmem:[%s503 + $0x4] sm:$0xf]
      %v506 = vld [vmem:[%s503 + $0x8] sm:$0xf]
      %v507 = vld [vmem:[%s503 + $0xc] sm:$0xf]
      %v508 = vld [vmem:[%s503 + $0x10] sm:$0xf]
      %v509 = vld [vmem:[%s503 + $0x14] sm:$0xf]
      %v510 = vld [vmem:[%s503 + $0x18] sm:$0xf]
      %v511 = vld [vmem:[%s503 + $0x1c] sm:$0xf]
      %v512 = vld [vmem:[%s503 + $0x20] sm:$0xf]
      %v513 = vld [vmem:[%s503 + $0x24] sm:$0xf]
      %v514 = vld [vmem:[%s503 + $0x28] sm:$0xf]
      %v515 = vld [vmem:[%s503 + $0x2c] sm:$0xf]
      %v516 = vld [vmem:[%s503 + $0x30] sm:$0xf]
      %v517 = vld [vmem:[%s503 + $0x34] sm:$0xf]
      %v518 = vld [vmem:[%s503 + $0x38] sm:$0xf]
      %v519 = vld [vmem:[%s503 + $0x3c] sm:$0xf]
      %v520 = vunpack.c.l.b16 %v324
      %v521 = vunpack.c.l.b16 %v334
      %v522 = vunpack.c.l.b16 %v348
      %v523 = vunpack.c.l.b16 %v358
      %v524 = vunpack.c.l.b16 %v372
      %v525 = vunpack.c.l.b16 %v382
      %v526 = vunpack.c.l.b16 %v396
      %v527 = vunpack.c.l.b16 %v406
      %v528 = vunpack.c.l.b16 %v420
      %v529 = vunpack.c.l.b16 %v430
      %v530 = vunpack.c.l.b16 %v444
      %v531 = vunpack.c.l.b16 %v454
      %v532 = vunpack.c.l.b16 %v468
      %v533 = vunpack.c.l.b16 %v478
      %v534 = vunpack.c.l.b16 %v492
      %v535 = vunpack.c.l.b16 %v502
      %v536 = vpack.c.b16 %v521, %v520
      %v537 = vpack.c.b16 %v523, %v522
      %v538 = vpack.c.b16 %v525, %v524
      %v539 = vpack.c.b16 %v527, %v526
      %v540 = vpack.c.b16 %v529, %v528
      %v541 = vpack.c.b16 %v531, %v530
      %v542 = vpack.c.b16 %v533, %v532
      %v543 = vpack.c.b16 %v535, %v534
      %v568 = vunpack.c.l.b16 %v504
      %v569 = vunpack.c.l.b16 %v505
      %v570 = vunpack.c.l.b16 %v506
      %v571 = vunpack.c.l.b16 %v507
      %v572 = vunpack.c.l.b16 %v508
      %v573 = vunpack.c.l.b16 %v509
      %v574 = vunpack.c.l.b16 %v510
      %v575 = vunpack.c.l.b16 %v511
      %v576 = vunpack.c.l.b16 %v512
      %v577 = vunpack.c.l.b16 %v513
      %v578 = vunpack.c.l.b16 %v514
      %v579 = vunpack.c.l.b16 %v515
      %v580 = vunpack.c.l.b16 %v516
      %v581 = vunpack.c.l.b16 %v517
      %v582 = vunpack.c.l.b16 %v518
      %v583 = vunpack.c.l.b16 %v519
      %v584 = vpack.c.b16 %v569, %v568
      %v585 = vpack.c.b16 %v571, %v570
      %v586 = vpack.c.b16 %v573, %v572
      %v587 = vpack.c.b16 %v575, %v574
      %v588 = vpack.c.b16 %v577, %v576
      %v589 = vpack.c.b16 %v579, %v578
      %v590 = vpack.c.b16 %v581, %v580
      %v591 = vpack.c.b16 %v583, %v582
      %600 = vmatprep.subr.bf16.mxu0 0
      %601 = vmatpush1.bf16.msra.mxu0 %v584
      %602 = vmatprep.subr.bf16.mxu0 0
      %603 = vmatpush1.bf16.msra.mxu0 %v585
      %604 = vmatprep.subr.bf16.mxu0 0
      %605 = vmatpush1.bf16.msra.mxu0 %v586
      %606 = vmatprep.subr.bf16.mxu0 0
      %607 = vmatpush1.bf16.msra.mxu0 %v587
      %608 = vmatprep.subr.bf16.mxu0 0
      %609 = vmatpush1.bf16.msra.mxu0 %v588
      %610 = vmatprep.subr.bf16.mxu0 0
      %611 = vmatpush1.bf16.msra.mxu0 %v589
      %612 = vmatprep.subr.bf16.mxu0 0
      %613 = vmatpush1.bf16.msra.mxu0 %v590
      %614 = vmatprep.subr.bf16.mxu0 0
      %615 = vmatpush1.bf16.msra.mxu0 %v591
      %616 = vmatprep.subr.bf16.mxu0 0
      %617 = vmatpush1.bf16.msra.mxu0 0
      %618 = vmatprep.subr.bf16.mxu0 0
      %619 = vmatpush1.bf16.msra.mxu0 0
      %620 = vmatprep.subr.bf16.mxu0 0
      %621 = vmatpush1.bf16.msra.mxu0 0
      %622 = vmatprep.subr.bf16.mxu0 0
      %623 = vmatpush1.bf16.msra.mxu0 0
      %624 = vmatprep.subr.bf16.mxu0 0
      %625 = vmatpush1.bf16.msra.mxu0 0
      %626 = vmatprep.subr.bf16.mxu0 0
      %627 = vmatpush1.bf16.msra.mxu0 0
      %628 = vmatprep.subr.bf16.mxu0 0
      %629 = vmatpush1.bf16.msra.mxu0 0
      %630 = vmatprep.subr.bf16.mxu0 0
      %631 = vmatpush1.bf16.msra.mxu0 0
      %632 = vmatprep.mubr.bf16.mxu0 0
      %633 = vmatmul.mubr.bf16.gmra.mrb[0].mxu0 %v536
      %v634 = vpop.f32.mrb[0].mxu0
      %v635 = vadd.f32 0.0, %v634
      %v636 = vpop.f32.mrb[0].mxu0
      %v637 = vpop.f32.mrb[0].mxu0
      %v638 = vadd.f32 0.0, %v637
      %v639 = vpop.f32.mrb[0].mxu0
      %640 = vmatprep.mubr.bf16.mxu0 0
      %641 = vmatmul.mubr.bf16.gmra.mrb[0].mxu0 %v537
      %v642 = vpop.f32.mrb[0].mxu0
      %v643 = vadd.f32 0.0, %v642
      %v644 = vpop.f32.mrb[0].mxu0
      %v645 = vpop.f32.mrb[0].mxu0
      %v646 = vadd.f32 0.0, %v645
      %v647 = vpop.f32.mrb[0].mxu0
      %648 = vmatprep.mubr.bf16.mxu0 0
      %649 = vmatmul.mubr.bf16.gmra.mrb[0].mxu0 %v538
      %v650 = vpop.f32.mrb[0].mxu0
      %v651 = vadd.f32 0.0, %v650
      %v652 = vpop.f32.mrb[0].mxu0
      %v653 = vpop.f32.mrb[0].mxu0
      %v654 = vadd.f32 0.0, %v653
      %v655 = vpop.f32.mrb[0].mxu0
      %656 = vmatprep.mubr.bf16.mxu0 0
      %657 = vmatmul.mubr.bf16.gmra.mrb[0].mxu0 %v539
      %v658 = vpop.f32.mrb[0].mxu0
      %v659 = vadd.f32 0.0, %v658
      %v660 = vpop.f32.mrb[0].mxu0
      %v661 = vpop.f32.mrb[0].mxu0
      %v662 = vadd.f32 0.0, %v661
      %v663 = vpop.f32.mrb[0].mxu0
      %664 = vmatprep.mubr.bf16.mxu0 0
      %665 = vmatmul.mubr.bf16.gmra.mrb[0].mxu0 %v540
      %v666 = vpop.f32.mrb[0].mxu0
      %v667 = vadd.f32 0.0, %v666
      %v668 = vpop.f32.mrb[0].mxu0
      %v669 = vpop.f32.mrb[0].mxu0
      %v670 = vadd.f32 0.0, %v669
      %v671 = vpop.f32.mrb[0].mxu0
      %672 = vmatprep.mubr.bf16.mxu0 0
      %673 = vmatmul.mubr.bf16.gmra.mrb[0].mxu0 %v541
      %v674 = vpop.f32.mrb[0].mxu0
      %v675 = vadd.f32 0.0, %v674
      %v676 = vpop.f32.mrb[0].mxu0
      %v677 = vpop.f32.mrb[0].mxu0
      %v678 = vadd.f32 0.0, %v677
      %v679 = vpop.f32.mrb[0].mxu0
      %680 = vmatprep.mubr.bf16.mxu0 0
      %681 = vmatmul.mubr.bf16.gmra.mrb[0].mxu0 %v542
      %v682 = vpop.f32.mrb[0].mxu0
      %v683 = vadd.f32 0.0, %v682
      %v684 = vpop.f32.mrb[0].mxu0
      %v685 = vpop.f32.mrb[0].mxu0
      %v686 = vadd.f32 0.0, %v685
      %v687 = vpop.f32.mrb[0].mxu0
      %688 = vmatprep.mubr.bf16.mxu0 0
      %689 = vmatmul.mubr.bf16.gmra.mrb[0].mxu0 %v543
      %v690 = vpop.f32.mrb[0].mxu0
      %v691 = vadd.f32 0.0, %v690
      %v692 = vpop.f32.mrb[0].mxu0
      %v693 = vpop.f32.mrb[0].mxu0
      %v694 = vadd.f32 0.0, %v693
      %v695 = vpop.f32.mrb[0].mxu0
      %696 = vdwg.mxu0
      %v713 = vunpack.c.l.b16 %v262
      %v714 = vunpack.c.l.b16 %v263
      %v715 = vunpack.c.l.b16 %v265
      %v716 = vunpack.c.l.b16 %v266
      %v717 = vunpack.c.l.b16 %v268
      %v718 = vunpack.c.l.b16 %v269
      %v719 = vunpack.c.l.b16 %v271
      %v720 = vunpack.c.l.b16 %v272
      %v721 = vunpack.c.l.b16 %v274
      %v722 = vunpack.c.l.b16 %v275
      %v723 = vunpack.c.l.b16 %v277
      %v724 = vunpack.c.l.b16 %v278
      %v725 = vunpack.c.l.b16 %v280
      %v726 = vunpack.c.l.b16 %v281
      %v727 = vunpack.c.l.b16 %v283
      %v728 = vunpack.c.l.b16 %v284
      %v729 = vpack.c.b16 %v714, %v713
      %v730 = vpack.c.b16 %v716, %v715
      %v731 = vpack.c.b16 %v718, %v717
      %v732 = vpack.c.b16 %v720, %v719
      %v733 = vpack.c.b16 %v722, %v721
      %v734 = vpack.c.b16 %v724, %v723
      %v735 = vpack.c.b16 %v726, %v725
      %v736 = vpack.c.b16 %v728, %v727
      %v761 = vunpack.c.l.b16 %v292
      %v762 = vunpack.c.l.b16 %v293
      %v763 = vunpack.c.l.b16 %v294
      %v764 = vunpack.c.l.b16 %v295
      %v765 = vunpack.c.l.b16 %v296
      %v766 = vunpack.c.l.b16 %v297
      %v767 = vunpack.c.l.b16 %v298
      %v768 = vunpack.c.l.b16 %v299
      %v769 = vunpack.c.l.b16 %v300
      %v770 = vunpack.c.l.b16 %v301
      %v771 = vunpack.c.l.b16 %v302
      %v772 = vunpack.c.l.b16 %v303
      %v773 = vunpack.c.l.b16 %v304
      %v774 = vunpack.c.l.b16 %v305
      %v775 = vunpack.c.l.b16 %v306
      %v776 = vunpack.c.l.b16 %v307
      %v777 = vpack.c.b16 %v762, %v761
      %v778 = vpack.c.b16 %v764, %v763
      %v779 = vpack.c.b16 %v766, %v765
      %v780 = vpack.c.b16 %v768, %v767
      %v781 = vpack.c.b16 %v770, %v769
      %v782 = vpack.c.b16 %v772, %v771
      %v783 = vpack.c.b16 %v774, %v773
      %v784 = vpack.c.b16 %v776, %v775
      %793 = vmatprep.subr.bf16.mxu0 0
      %794 = vmatpush1.bf16.msra.mxu0 %v777
      %795 = vmatprep.subr.bf16.mxu0 0
      %796 = vmatpush1.bf16.msra.mxu0 %v778
      %797 = vmatprep.subr.bf16.mxu0 0
      %798 = vmatpush1.bf16.msra.mxu0 %v779
      %799 = vmatprep.subr.bf16.mxu0 0
      %800 = vmatpush1.bf16.msra.mxu0 %v780
      %801 = vmatprep.subr.bf16.mxu0 0
      %802 = vmatpush1.bf16.msra.mxu0 %v781
      %803 = vmatprep.subr.bf16.mxu0 0
      %804 = vmatpush1.bf16.msra.mxu0 %v782
      %805 = vmatprep.subr.bf16.mxu0 0
      %806 = vmatpush1.bf16.msra.mxu0 %v783
      %807 = vmatprep.subr.bf16.mxu0 0
      %808 = vmatpush1.bf16.msra.mxu0 %v784
      %809 = vmatprep.subr.bf16.mxu0 0
      %810 = vmatpush1.bf16.msra.mxu0 0
      %811 = vmatprep.subr.bf16.mxu0 0
      %812 = vmatpush1.bf16.msra.mxu0 0
      %813 = vmatprep.subr.bf16.mxu0 0
      %814 = vmatpush1.bf16.msra.mxu0 0
      %815 = vmatprep.subr.bf16.mxu0 0
      %816 = vmatpush1.bf16.msra.mxu0 0
      %817 = vmatprep.subr.bf16.mxu0 0
      %818 = vmatpush1.bf16.msra.mxu0 0
      %819 = vmatprep.subr.bf16.mxu0 0
      %820 = vmatpush1.bf16.msra.mxu0 0
      %821 = vmatprep.subr.bf16.mxu0 0
      %822 = vmatpush1.bf16.msra.mxu0 0
      %823 = vmatprep.subr.bf16.mxu0 0
      %824 = vmatpush1.bf16.msra.mxu0 0
      %825 = vmatprep.mubr.bf16.mxu0 0
      %826 = vmatmul.mubr.bf16.gmra.mrb[0].mxu0 %v729
      %v827 = vpop.f32.mrb[0].mxu0
      %v828 = vadd.f32 %v635, %v827
      %v829 = vpop.f32.mrb[0].mxu0
      %v830 = vpop.f32.mrb[0].mxu0
      %v831 = vadd.f32 %v638, %v830
      %v832 = vpop.f32.mrb[0].mxu0
      %833 = vmatprep.mubr.bf16.mxu0 0
      %834 = vmatmul.mubr.bf16.gmra.mrb[0].mxu0 %v730
      %v835 = vpop.f32.mrb[0].mxu0
      %v836 = vadd.f32 %v643, %v835
      %v837 = vpop.f32.mrb[0].mxu0
      %v838 = vpop.f32.mrb[0].mxu0
      %v839 = vadd.f32 %v646, %v838
      %v840 = vpop.f32.mrb[0].mxu0
      %841 = vmatprep.mubr.bf16.mxu0 0
      %842 = vmatmul.mubr.bf16.gmra.mrb[0].mxu0 %v731
      %v843 = vpop.f32.mrb[0].mxu0
      %v844 = vadd.f32 %v651, %v843
      %v845 = vpop.f32.mrb[0].mxu0
      %v846 = vpop.f32.mrb[0].mxu0
      %v847 = vadd.f32 %v654, %v846
      %v848 = vpop.f32.mrb[0].mxu0
      %849 = vmatprep.mubr.bf16.mxu0 0
      %850 = vmatmul.mubr.bf16.gmra.mrb[0].mxu0 %v732
      %v851 = vpop.f32.mrb[0].mxu0
      %v852 = vadd.f32 %v659, %v851
      %v853 = vpop.f32.mrb[0].mxu0
      %v854 = vpop.f32.mrb[0].mxu0
      %v855 = vadd.f32 %v662, %v854
      %v856 = vpop.f32.mrb[0].mxu0
      %857 = vmatprep.mubr.bf16.mxu0 0
      %858 = vmatmul.mubr.bf16.gmra.mrb[0].mxu0 %v733
      %v859 = vpop.f32.mrb[0].mxu0
      %v860 = vadd.f32 %v667, %v859
      %v861 = vpop.f32.mrb[0].mxu0
      %v862 = vpop.f32.mrb[0].mxu0
      %v863 = vadd.f32 %v670, %v862
      %v864 = vpop.f32.mrb[0].mxu0
      %865 = vmatprep.mubr.bf16.mxu0 0
      %866 = vmatmul.mubr.bf16.gmra.mrb[0].mxu0 %v734
      %v867 = vpop.f32.mrb[0].mxu0
      %v868 = vadd.f32 %v675, %v867
      %v869 = vpop.f32.mrb[0].mxu0
      %v870 = vpop.f32.mrb[0].mxu0
      %v871 = vadd.f32 %v678, %v870
      %v872 = vpop.f32.mrb[0].mxu0
      %873 = vmatprep.mubr.bf16.mxu0 0
      %874 = vmatmul.mubr.bf16.gmra.mrb[0].mxu0 %v735
      %v875 = vpop.f32.mrb[0].mxu0
      %v876 = vadd.f32 %v683, %v875
      %v877 = vpop.f32.mrb[0].mxu0
      %v878 = vpop.f32.mrb[0].mxu0
      %v879 = vadd.f32 %v686, %v878
      %v880 = vpop.f32.mrb[0].mxu0
      %881 = vmatprep.mubr.bf16.mxu0 0
      %882 = vmatmul.mubr.bf16.gmra.mrb[0].mxu0 %v736
      %v883 = vpop.f32.mrb[0].mxu0
      %v884 = vadd.f32 %v691, %v883
      %v885 = vpop.f32.mrb[0].mxu0
      %v886 = vpop.f32.mrb[0].mxu0
      %v887 = vadd.f32 %v694, %v886
      %v888 = vpop.f32.mrb[0].mxu0
      %889 = vdwg.mxu0
      %vm898 = vcmask 1042432
      %vm899 = vcmask 1046532
      %vm900 = vmor %vm898, %vm899
      %v901 = vrot.slane %v262, 5
      %v902 = vrot.slane %v901, 4
      %v903 = vrot.slane %v263, 5
      %v904 = vsel %vm900, %v902, %v903
      %v905 = vrot.slane %v903, 4
      %v906 = vrot.slane %v264, 5
      %v907 = vsel %vm900, %v905, %v906
      %v908 = vrot.slane %v265, 5
      %v909 = vrot.slane %v908, 4
      %v910 = vrot.slane %v266, 5
      %v911 = vsel %vm900, %v909, %v910
      %v912 = vrot.slane %v910, 4
      %v913 = vrot.slane %v267, 5
      %v914 = vsel %vm900, %v912, %v913
      %v915 = vrot.slane %v268, 5
      %v916 = vrot.slane %v915, 4
      %v917 = vrot.slane %v269, 5
      %v918 = vsel %vm900, %v916, %v917
      %v919 = vrot.slane %v917, 4
      %v920 = vrot.slane %v270, 5
      %v921 = vsel %vm900, %v919, %v920
      %v922 = vrot.slane %v271, 5
      %v923 = vrot.slane %v922, 4
      %v924 = vrot.slane %v272, 5
      %v925 = vsel %vm900, %v923, %v924
      %v926 = vrot.slane %v924, 4
      %v927 = vrot.slane %v273, 5
      %v928 = vsel %vm900, %v926, %v927
      %v929 = vrot.slane %v274, 5
      %v930 = vrot.slane %v929, 4
      %v931 = vrot.slane %v275, 5
      %v932 = vsel %vm900, %v930, %v931
      %v933 = vrot.slane %v931, 4
      %v934 = vrot.slane %v276, 5
      %v935 = vsel %vm900, %v933, %v934
      %v936 = vrot.slane %v277, 5
      %v937 = vrot.slane %v936, 4
      %v938 = vrot.slane %v278, 5
      %v939 = vsel %vm900, %v937, %v938
      %v940 = vrot.slane %v938, 4
      %v941 = vrot.slane %v279, 5
      %v942 = vsel %vm900, %v940, %v941
      %v943 = vrot.slane %v280, 5
      %v944 = vrot.slane %v943, 4
      %v945 = vrot.slane %v281, 5
      %v946 = vsel %vm900, %v944, %v945
      %v947 = vrot.slane %v945, 4
      %v948 = vrot.slane %v282, 5
      %v949 = vsel %vm900, %v947, %v948
      %v950 = vrot.slane %v283, 5
      %v951 = vrot.slane %v950, 4
      %v952 = vrot.slane %v284, 5
      %v953 = vsel %vm900, %v951, %v952
      %v954 = vrot.slane %v952, 4
      %v955 = vrot.slane %v285, 5
      %v956 = vsel %vm900, %v954, %v955
      %s957 = scalar_lea.vmem %s1, 128
      %v958 = vld [vmem:[%s957] sm:$0xf]
      %v959 = vld [vmem:[%s957 + $0x4] sm:$0xf]
      %v960 = vld [vmem:[%s957 + $0x8] sm:$0xf]
      %v961 = vld [vmem:[%s957 + $0xc] sm:$0xf]
      %v962 = vld [vmem:[%s957 + $0x10] sm:$0xf]
      %v963 = vld [vmem:[%s957 + $0x14] sm:$0xf]
      %v964 = vld [vmem:[%s957 + $0x18] sm:$0xf]
      %v965 = vld [vmem:[%s957 + $0x1c] sm:$0xf]
      %v966 = vld [vmem:[%s957 + $0x20] sm:$0xf]
      %v967 = vld [vmem:[%s957 + $0x24] sm:$0xf]
      %v968 = vld [vmem:[%s957 + $0x28] sm:$0xf]
      %v969 = vld [vmem:[%s957 + $0x2c] sm:$0xf]
      %v970 = vld [vmem:[%s957 + $0x30] sm:$0xf]
      %v971 = vld [vmem:[%s957 + $0x34] sm:$0xf]
      %v972 = vld [vmem:[%s957 + $0x38] sm:$0xf]
      %v973 = vld [vmem:[%s957 + $0x3c] sm:$0xf]
      %v974 = vunpack.c.l.b16 %v904
      %v975 = vunpack.c.l.b16 %v907
      %v976 = vunpack.c.l.b16 %v911
      %v977 = vunpack.c.l.b16 %v914
      %v978 = vunpack.c.l.b16 %v918
      %v979 = vunpack.c.l.b16 %v921
      %v980 = vunpack.c.l.b16 %v925
      %v981 = vunpack.c.l.b16 %v928
      %v982 = vunpack.c.l.b16 %v932
      %v983 = vunpack.c.l.b16 %v935
      %v984 = vunpack.c.l.b16 %v939
      %v985 = vunpack.c.l.b16 %v942
      %v986 = vunpack.c.l.b16 %v946
      %v987 = vunpack.c.l.b16 %v949
      %v988 = vunpack.c.l.b16 %v953
      %v989 = vunpack.c.l.b16 %v956
      %v990 = vpack.c.b16 %v975, %v974
      %v991 = vpack.c.b16 %v977, %v976
      %v992 = vpack.c.b16 %v979, %v978
      %v993 = vpack.c.b16 %v981, %v980
      %v994 = vpack.c.b16 %v983, %v982
      %v995 = vpack.c.b16 %v985, %v984
      %v996 = vpack.c.b16 %v987, %v986
      %v997 = vpack.c.b16 %v989, %v988
      %v1022 = vunpack.c.l.b16 %v958
      %v1023 = vunpack.c.l.b16 %v959
      %v1024 = vunpack.c.l.b16 %v960
      %v1025 = vunpack.c.l.b16 %v961
      %v1026 = vunpack.c.l.b16 %v962
      %v1027 = vunpack.c.l.b16 %v963
      %v1028 = vunpack.c.l.b16 %v964
      %v1029 = vunpack.c.l.b16 %v965
      %v1030 = vunpack.c.l.b16 %v966
      %v1031 = vunpack.c.l.b16 %v967
      %v1032 = vunpack.c.l.b16 %v968
      %v1033 = vunpack.c.l.b16 %v969
      %v1034 = vunpack.c.l.b16 %v970
      %v1035 = vunpack.c.l.b16 %v971
      %v1036 = vunpack.c.l.b16 %v972
      %v1037 = vunpack.c.l.b16 %v973
      %v1038 = vpack.c.b16 %v1023, %v1022
      %v1039 = vpack.c.b16 %v1025, %v1024
      %v1040 = vpack.c.b16 %v1027, %v1026
      %v1041 = vpack.c.b16 %v1029, %v1028
      %v1042 = vpack.c.b16 %v1031, %v1030
      %v1043 = vpack.c.b16 %v1033, %v1032
      %v1044 = vpack.c.b16 %v1035, %v1034
      %v1045 = vpack.c.b16 %v1037, %v1036
      %1054 = vmatprep.subr.bf16.mxu0 0
      %1055 = vmatpush1.bf16.msra.mxu0 %v1038
      %1056 = vmatprep.subr.bf16.mxu0 0
      %1057 = vmatpush1.bf16.msra.mxu0 %v1039
      %1058 = vmatprep.subr.bf16.mxu0 0
      %1059 = vmatpush1.bf16.msra.mxu0 %v1040
      %1060 = vmatprep.subr.bf16.mxu0 0
      %1061 = vmatpush1.bf16.msra.mxu0 %v1041
      %1062 = vmatprep.subr.bf16.mxu0 0
      %1063 = vmatpush1.bf16.msra.mxu0 %v1042
      %1064 = vmatprep.subr.bf16.mxu0 0
      %1065 = vmatpush1.bf16.msra.mxu0 %v1043
      %1066 = vmatprep.subr.bf16.mxu0 0
      %1067 = vmatpush1.bf16.msra.mxu0 %v1044
      %1068 = vmatprep.subr.bf16.mxu0 0
      %1069 = vmatpush1.bf16.msra.mxu0 %v1045
      %1070 = vmatprep.subr.bf16.mxu0 0
      %1071 = vmatpush1.bf16.msra.mxu0 0
      %1072 = vmatprep.subr.bf16.mxu0 0
      %1073 = vmatpush1.bf16.msra.mxu0 0
      %1074 = vmatprep.subr.bf16.mxu0 0
      %1075 = vmatpush1.bf16.msra.mxu0 0
      %1076 = vmatprep.subr.bf16.mxu0 0
      %1077 = vmatpush1.bf16.msra.mxu0 0
      %1078 = vmatprep.subr.bf16.mxu0 0
      %1079 = vmatpush1.bf16.msra.mxu0 0
      %1080 = vmatprep.subr.bf16.mxu0 0
      %1081 = vmatpush1.bf16.msra.mxu0 0
      %1082 = vmatprep.subr.bf16.mxu0 0
      %1083 = vmatpush1.bf16.msra.mxu0 0
      %1084 = vmatprep.subr.bf16.mxu0 0
      %1085 = vmatpush1.bf16.msra.mxu0 0
      %1086 = vmatprep.mubr.bf16.mxu0 0
      %1087 = vmatmul.mubr.bf16.gmra.mrb[0].mxu0 %v990
      %v1088 = vpop.f32.mrb[0].mxu0
      %v1089 = vadd.f32 0.0, %v1088
      %v1090 = vpop.f32.mrb[0].mxu0
      %v1091 = vpop.f32.mrb[0].mxu0
      %v1092 = vadd.f32 0.0, %v1091
      %v1093 = vpop.f32.mrb[0].mxu0
      %1094 = vmatprep.mubr.bf16.mxu0 0
      %1095 = vmatmul.mubr.bf16.gmra.mrb[0].mxu0 %v991
      %v1096 = vpop.f32.mrb[0].mxu0
      %v1097 = vadd.f32 0.0, %v1096
      %v1098 = vpop.f32.mrb[0].mxu0
      %v1099 = vpop.f32.mrb[0].mxu0
      %v1100 = vadd.f32 0.0, %v1099
      %v1101 = vpop.f32.mrb[0].mxu0
      %1102 = vmatprep.mubr.bf16.mxu0 0
      %1103 = vmatmul.mubr.bf16.gmra.mrb[0].mxu0 %v992
      %v1104 = vpop.f32.mrb[0].mxu0
      %v1105 = vadd.f32 0.0, %v1104
      %v1106 = vpop.f32.mrb[0].mxu0
      %v1107 = vpop.f32.mrb[0].mxu0
      %v1108 = vadd.f32 0.0, %v1107
      %v1109 = vpop.f32.mrb[0].mxu0
      %1110 = vmatprep.mubr.bf16.mxu0 0
      %1111 = vmatmul.mubr.bf16.gmra.mrb[0].mxu0 %v993
      %v1112 = vpop.f32.mrb[0].mxu0
      %v1113 = vadd.f32 0.0, %v1112
      %v1114 = vpop.f32.mrb[0].mxu0
      %v1115 = vpop.f32.mrb[0].mxu0
      %v1116 = vadd.f32 0.0, %v1115
      %v1117 = vpop.f32.mrb[0].mxu0
      %1118 = vmatprep.mubr.bf16.mxu0 0
      %1119 = vmatmul.mubr.bf16.gmra.mrb[0].mxu0 %v994
      %v1120 = vpop.f32.mrb[0].mxu0
      %v1121 = vadd.f32 0.0, %v1120
      %v1122 = vpop.f32.mrb[0].mxu0
      %v1123 = vpop.f32.mrb[0].mxu0
      %v1124 = vadd.f32 0.0, %v1123
      %v1125 = vpop.f32.mrb[0].mxu0
      %1126 = vmatprep.mubr.bf16.mxu0 0
      %1127 = vmatmul.mubr.bf16.gmra.mrb[0].mxu0 %v995
      %v1128 = vpop.f32.mrb[0].mxu0
      %v1129 = vadd.f32 0.0, %v1128
      %v1130 = vpop.f32.mrb[0].mxu0
      %v1131 = vpop.f32.mrb[0].mxu0
      %v1132 = vadd.f32 0.0, %v1131
      %v1133 = vpop.f32.mrb[0].mxu0
      %1134 = vmatprep.mubr.bf16.mxu0 0
      %1135 = vmatmul.mubr.bf16.gmra.mrb[0].mxu0 %v996
      %v1136 = vpop.f32.mrb[0].mxu0
      %v1137 = vadd.f32 0.0, %v1136
      %v1138 = vpop.f32.mrb[0].mxu0
      %v1139 = vpop.f32.mrb[0].mxu0
      %v1140 = vadd.f32 0.0, %v1139
      %v1141 = vpop.f32.mrb[0].mxu0
      %1142 = vmatprep.mubr.bf16.mxu0 0
      %1143 = vmatmul.mubr.bf16.gmra.mrb[0].mxu0 %v997
      %v1144 = vpop.f32.mrb[0].mxu0
      %v1145 = vadd.f32 0.0, %v1144
      %v1146 = vpop.f32.mrb[0].mxu0
      %v1147 = vpop.f32.mrb[0].mxu0
      %v1148 = vadd.f32 0.0, %v1147
      %v1149 = vpop.f32.mrb[0].mxu0
      %1150 = vdwg.mxu0
      %v1151 = vadd.f32 %v828, %v1089
      %v1152 = vadd.f32 %v831, %v1092
      %v1153 = vadd.f32 %v836, %v1097
      %v1154 = vadd.f32 %v839, %v1100
      %v1155 = vadd.f32 %v844, %v1105
      %v1156 = vadd.f32 %v847, %v1108
      %v1157 = vadd.f32 %v852, %v1113
      %v1158 = vadd.f32 %v855, %v1116
      %v1159 = vadd.f32 %v860, %v1121
      %v1160 = vadd.f32 %v863, %v1124
      %v1161 = vadd.f32 %v868, %v1129
      %v1162 = vadd.f32 %v871, %v1132
      %v1163 = vadd.f32 %v876, %v1137
      %v1164 = vadd.f32 %v879, %v1140
      %v1165 = vadd.f32 %v884, %v1145
      %v1166 = vadd.f32 %v887, %v1148
      %s1167 = scalar_lea.vmem %s1, 192
      %v1168 = vld [vmem:[%s1167] sm:$0xf]
      %v1169 = vld [vmem:[%s1167 + $0x4] sm:$0xf]
      %v1170 = vld [vmem:[%s1167 + $0x8] sm:$0xf]
      %v1171 = vld [vmem:[%s1167 + $0xc] sm:$0xf]
      %v1172 = vld [vmem:[%s1167 + $0x10] sm:$0xf]
      %v1173 = vld [vmem:[%s1167 + $0x14] sm:$0xf]
      %v1174 = vld [vmem:[%s1167 + $0x18] sm:$0xf]
      %v1175 = vld [vmem:[%s1167 + $0x1c] sm:$0xf]
      %v1176 = vld [vmem:[%s1167 + $0x20] sm:$0xf]
      %v1177 = vld [vmem:[%s1167 + $0x24] sm:$0xf]
      %v1178 = vld [vmem:[%s1167 + $0x28] sm:$0xf]
      %v1179 = vld [vmem:[%s1167 + $0x2c] sm:$0xf]
      %v1180 = vld [vmem:[%s1167 + $0x30] sm:$0xf]
      %v1181 = vld [vmem:[%s1167 + $0x34] sm:$0xf]
      %v1182 = vld [vmem:[%s1167 + $0x38] sm:$0xf]
      %v1183 = vld [vmem:[%s1167 + $0x3c] sm:$0xf]
      %v1186 = vunpack.c.l.b16 %v286
      %v1187 = vunpack.c.l.b16 %v287
      %v1188 = vpack.c.b16 %v1187, %v1186
      %v1206 = vunpack.c.l.b16 %v1168
      %v1207 = vunpack.c.l.b16 %v1169
      %v1208 = vunpack.c.l.b16 %v1170
      %v1209 = vunpack.c.l.b16 %v1171
      %v1210 = vunpack.c.l.b16 %v1172
      %v1211 = vunpack.c.l.b16 %v1173
      %v1212 = vunpack.c.l.b16 %v1174
      %v1213 = vunpack.c.l.b16 %v1175
      %v1214 = vunpack.c.l.b16 %v1176
      %v1215 = vunpack.c.l.b16 %v1177
      %v1216 = vunpack.c.l.b16 %v1178
      %v1217 = vunpack.c.l.b16 %v1179
      %v1218 = vunpack.c.l.b16 %v1180
      %v1219 = vunpack.c.l.b16 %v1181
      %v1220 = vunpack.c.l.b16 %v1182
      %v1221 = vunpack.c.l.b16 %v1183
      %v1222 = vpack.c.b16 %v1207, %v1206
      %v1223 = vpack.c.b16 %v1209, %v1208
      %v1224 = vpack.c.b16 %v1211, %v1210
      %v1225 = vpack.c.b16 %v1213, %v1212
      %v1226 = vpack.c.b16 %v1215, %v1214
      %v1227 = vpack.c.b16 %v1217, %v1216
      %v1228 = vpack.c.b16 %v1219, %v1218
      %v1229 = vpack.c.b16 %v1221, %v1220
      %1238 = vmatprep.subr.bf16.mxu0 0
      %1239 = vmatpush1.bf16.msra.mxu0 %v1222
      %1240 = vmatprep.subr.bf16.mxu0 0
      %1241 = vmatpush1.bf16.msra.mxu0 %v1223
      %1242 = vmatprep.subr.bf16.mxu0 0
      %1243 = vmatpush1.bf16.msra.mxu0 %v1224
      %1244 = vmatprep.subr.bf16.mxu0 0
      %1245 = vmatpush1.bf16.msra.mxu0 %v1225
      %1246 = vmatprep.subr.bf16.mxu0 0
      %1247 = vmatpush1.bf16.msra.mxu0 %v1226
      %1248 = vmatprep.subr.bf16.mxu0 0
      %1249 = vmatpush1.bf16.msra.mxu0 %v1227
      %1250 = vmatprep.subr.bf16.mxu0 0
      %1251 = vmatpush1.bf16.msra.mxu0 %v1228
      %1252 = vmatprep.subr.bf16.mxu0 0
      %1253 = vmatpush1.bf16.msra.mxu0 %v1229
      %1254 = vmatprep.subr.bf16.mxu0 0
      %1255 = vmatpush1.bf16.msra.mxu0 0
      %1256 = vmatprep.subr.bf16.mxu0 0
      %1257 = vmatpush1.bf16.msra.mxu0 0
      %1258 = vmatprep.subr.bf16.mxu0 0
      %1259 = vmatpush1.bf16.msra.mxu0 0
      %1260 = vmatprep.subr.bf16.mxu0 0
      %1261 = vmatpush1.bf16.msra.mxu0 0
      %1262 = vmatprep.subr.bf16.mxu0 0
      %1263 = vmatpush1.bf16.msra.mxu0 0
      %1264 = vmatprep.subr.bf16.mxu0 0
      %1265 = vmatpush1.bf16.msra.mxu0 0
      %1266 = vmatprep.subr.bf16.mxu0 0
      %1267 = vmatpush1.bf16.msra.mxu0 0
      %1268 = vmatprep.subr.bf16.mxu0 0
      %1269 = vmatpush1.bf16.msra.mxu0 0
      %1270 = vmatprep.mubr.bf16.mxu0 0
      %1271 = vmatmul.mubr.bf16.gmra.mrb[0].mxu0 %v730
      %v1272 = vpop.f32.mrb[0].mxu0
      %v1273 = vadd.f32 0.0, %v1272
      %v1274 = vpop.f32.mrb[0].mxu0
      %v1275 = vpop.f32.mrb[0].mxu0
      %v1276 = vadd.f32 0.0, %v1275
      %v1277 = vpop.f32.mrb[0].mxu0
      %1278 = vmatprep.mubr.bf16.mxu0 0
      %1279 = vmatmul.mubr.bf16.gmra.mrb[0].mxu0 %v731
      %v1280 = vpop.f32.mrb[0].mxu0
      %v1281 = vadd.f32 0.0, %v1280
      %v1282 = vpop.f32.mrb[0].mxu0
      %v1283 = vpop.f32.mrb[0].mxu0
      %v1284 = vadd.f32 0.0, %v1283
      %v1285 = vpop.f32.mrb[0].mxu0
      %1286 = vmatprep.mubr.bf16.mxu0 0
      %1287 = vmatmul.mubr.bf16.gmra.mrb[0].mxu0 %v732
      %v1288 = vpop.f32.mrb[0].mxu0
      %v1289 = vadd.f32 0.0, %v1288
      %v1290 = vpop.f32.mrb[0].mxu0
      %v1291 = vpop.f32.mrb[0].mxu0
      %v1292 = vadd.f32 0.0, %v1291
      %v1293 = vpop.f32.mrb[0].mxu0
      %1294 = vmatprep.mubr.bf16.mxu0 0
      %1295 = vmatmul.mubr.bf16.gmra.mrb[0].mxu0 %v733
      %v1296 = vpop.f32.mrb[0].mxu0
      %v1297 = vadd.f32 0.0, %v1296
      %v1298 = vpop.f32.mrb[0].mxu0
      %v1299 = vpop.f32.mrb[0].mxu0
      %v1300 = vadd.f32 0.0, %v1299
      %v1301 = vpop.f32.mrb[0].mxu0
      %1302 = vmatprep.mubr.bf16.mxu0 0
      %1303 = vmatmul.mubr.bf16.gmra.mrb[0].mxu0 %v734
      %v1304 = vpop.f32.mrb[0].mxu0
      %v1305 = vadd.f32 0.0, %v1304
      %v1306 = vpop.f32.mrb[0].mxu0
      %v1307 = vpop.f32.mrb[0].mxu0
      %v1308 = vadd.f32 0.0, %v1307
      %v1309 = vpop.f32.mrb[0].mxu0
      %1310 = vmatprep.mubr.bf16.mxu0 0
      %1311 = vmatmul.mubr.bf16.gmra.mrb[0].mxu0 %v735
      %v1312 = vpop.f32.mrb[0].mxu0
      %v1313 = vadd.f32 0.0, %v1312
      %v1314 = vpop.f32.mrb[0].mxu0
      %v1315 = vpop.f32.mrb[0].mxu0
      %v1316 = vadd.f32 0.0, %v1315
      %v1317 = vpop.f32.mrb[0].mxu0
      %1318 = vmatprep.mubr.bf16.mxu0 0
      %1319 = vmatmul.mubr.bf16.gmra.mrb[0].mxu0 %v736
      %v1320 = vpop.f32.mrb[0].mxu0
      %v1321 = vadd.f32 0.0, %v1320
      %v1322 = vpop.f32.mrb[0].mxu0
      %v1323 = vpop.f32.mrb[0].mxu0
      %v1324 = vadd.f32 0.0, %v1323
      %v1325 = vpop.f32.mrb[0].mxu0
      %1326 = vmatprep.mubr.bf16.mxu0 0
      %1327 = vmatmul.mubr.bf16.gmra.mrb[0].mxu0 %v1188
      %v1328 = vpop.f32.mrb[0].mxu0
      %v1329 = vadd.f32 0.0, %v1328
      %v1330 = vpop.f32.mrb[0].mxu0
      %v1331 = vpop.f32.mrb[0].mxu0
      %v1332 = vadd.f32 0.0, %v1331
      %v1333 = vpop.f32.mrb[0].mxu0
      %1334 = vdwg.mxu0
      %v1335 = vadd.f32 %v1151, %v1273
      %v1336 = vadd.f32 %v1152, %v1276
      %v1337 = vadd.f32 %v1153, %v1281
      %v1338 = vadd.f32 %v1154, %v1284
      %v1339 = vadd.f32 %v1155, %v1289
      %v1340 = vadd.f32 %v1156, %v1292
      %v1341 = vadd.f32 %v1157, %v1297
      %v1342 = vadd.f32 %v1158, %v1300
      %v1343 = vadd.f32 %v1159, %v1305
      %v1344 = vadd.f32 %v1160, %v1308
      %v1345 = vadd.f32 %v1161, %v1313
      %v1346 = vadd.f32 %v1162, %v1316
      %v1347 = vadd.f32 %v1163, %v1321
      %v1348 = vadd.f32 %v1164, %v1324
      %v1349 = vadd.f32 %v1165, %v1329
      %v1350 = vadd.f32 %v1166, %v1332
      %v1352 = vshrl.u32 %v286, 16
      %v1354 = vrot.slane %v1352, 4
      %v1355 = vshll.u32 %v286, 16
      %v1357 = vrot.slane %v1355, 5
      %v1358 = vor.u32 %v1354, %v1357
      %v1359 = vrot.slane %v1358, 4
      %v1361 = vshll.u32 %v287, 16
      %v1363 = vrot.slane %v1361, 5
      %v1364 = vsel %vm310, %v1359, %v1363
      %v1365 = vshrl.u32 %v287, 16
      %v1367 = vrot.slane %v1365, 4
      %v1368 = vor.u32 %v1367, %v1363
      %v1369 = vrot.slane %v1368, 4
      %v1371 = vshll.u32 %v288, 16
      %v1373 = vrot.slane %v1371, 5
      %v1374 = vsel %vm310, %v1369, %v1373
      %s1375 = scalar_lea.vmem %s1, 256
      %v1376 = vld [vmem:[%s1375] sm:$0xf]
      %v1377 = vld [vmem:[%s1375 + $0x4] sm:$0xf]
      %v1378 = vld [vmem:[%s1375 + $0x8] sm:$0xf]
      %v1379 = vld [vmem:[%s1375 + $0xc] sm:$0xf]
      %v1380 = vld [vmem:[%s1375 + $0x10] sm:$0xf]
      %v1381 = vld [vmem:[%s1375 + $0x14] sm:$0xf]
      %v1382 = vld [vmem:[%s1375 + $0x18] sm:$0xf]
      %v1383 = vld [vmem:[%s1375 + $0x1c] sm:$0xf]
      %v1384 = vld [vmem:[%s1375 + $0x20] sm:$0xf]
      %v1385 = vld [vmem:[%s1375 + $0x24] sm:$0xf]
      %v1386 = vld [vmem:[%s1375 + $0x28] sm:$0xf]
      %v1387 = vld [vmem:[%s1375 + $0x2c] sm:$0xf]
      %v1388 = vld [vmem:[%s1375 + $0x30] sm:$0xf]
      %v1389 = vld [vmem:[%s1375 + $0x34] sm:$0xf]
      %v1390 = vld [vmem:[%s1375 + $0x38] sm:$0xf]
      %v1391 = vld [vmem:[%s1375 + $0x3c] sm:$0xf]
      %v1392 = vunpack.c.l.b16 %v1364
      %v1393 = vunpack.c.l.b16 %v1374
      %v1394 = vpack.c.b16 %v1393, %v1392
      %v1412 = vunpack.c.l.b16 %v1376
      %v1413 = vunpack.c.l.b16 %v1377
      %v1414 = vunpack.c.l.b16 %v1378
      %v1415 = vunpack.c.l.b16 %v1379
      %v1416 = vunpack.c.l.b16 %v1380
      %v1417 = vunpack.c.l.b16 %v1381
      %v1418 = vunpack.c.l.b16 %v1382
      %v1419 = vunpack.c.l.b16 %v1383
      %v1420 = vunpack.c.l.b16 %v1384
      %v1421 = vunpack.c.l.b16 %v1385
      %v1422 = vunpack.c.l.b16 %v1386
      %v1423 = vunpack.c.l.b16 %v1387
      %v1424 = vunpack.c.l.b16 %v1388
      %v1425 = vunpack.c.l.b16 %v1389
      %v1426 = vunpack.c.l.b16 %v1390
      %v1427 = vunpack.c.l.b16 %v1391
      %v1428 = vpack.c.b16 %v1413, %v1412
      %v1429 = vpack.c.b16 %v1415, %v1414
      %v1430 = vpack.c.b16 %v1417, %v1416
      %v1431 = vpack.c.b16 %v1419, %v1418
      %v1432 = vpack.c.b16 %v1421, %v1420
      %v1433 = vpack.c.b16 %v1423, %v1422
      %v1434 = vpack.c.b16 %v1425, %v1424
      %v1435 = vpack.c.b16 %v1427, %v1426
      %1444 = vmatprep.subr.bf16.mxu0 0
      %1445 = vmatpush1.bf16.msra.mxu0 %v1428
      %1446 = vmatprep.subr.bf16.mxu0 0
      %1447 = vmatpush1.bf16.msra.mxu0 %v1429
      %1448 = vmatprep.subr.bf16.mxu0 0
      %1449 = vmatpush1.bf16.msra.mxu0 %v1430
      %1450 = vmatprep.subr.bf16.mxu0 0
      %1451 = vmatpush1.bf16.msra.mxu0 %v1431
      %1452 = vmatprep.subr.bf16.mxu0 0
      %1453 = vmatpush1.bf16.msra.mxu0 %v1432
      %1454 = vmatprep.subr.bf16.mxu0 0
      %1455 = vmatpush1.bf16.msra.mxu0 %v1433
      %1456 = vmatprep.subr.bf16.mxu0 0
      %1457 = vmatpush1.bf16.msra.mxu0 %v1434
      %1458 = vmatprep.subr.bf16.mxu0 0
      %1459 = vmatpush1.bf16.msra.mxu0 %v1435
      %1460 = vmatprep.subr.bf16.mxu0 0
      %1461 = vmatpush1.bf16.msra.mxu0 0
      %1462 = vmatprep.subr.bf16.mxu0 0
      %1463 = vmatpush1.bf16.msra.mxu0 0
      %1464 = vmatprep.subr.bf16.mxu0 0
      %1465 = vmatpush1.bf16.msra.mxu0 0
      %1466 = vmatprep.subr.bf16.mxu0 0
      %1467 = vmatpush1.bf16.msra.mxu0 0
      %1468 = vmatprep.subr.bf16.mxu0 0
      %1469 = vmatpush1.bf16.msra.mxu0 0
      %1470 = vmatprep.subr.bf16.mxu0 0
      %1471 = vmatpush1.bf16.msra.mxu0 0
      %1472 = vmatprep.subr.bf16.mxu0 0
      %1473 = vmatpush1.bf16.msra.mxu0 0
      %1474 = vmatprep.subr.bf16.mxu0 0
      %1475 = vmatpush1.bf16.msra.mxu0 0
      %1476 = vmatprep.mubr.bf16.mxu0 0
      %1477 = vmatmul.mubr.bf16.gmra.mrb[0].mxu0 %v537
      %v1478 = vpop.f32.mrb[0].mxu0
      %v1479 = vadd.f32 0.0, %v1478
      %v1480 = vpop.f32.mrb[0].mxu0
      %v1481 = vpop.f32.mrb[0].mxu0
      %v1482 = vadd.f32 0.0, %v1481
      %v1483 = vpop.f32.mrb[0].mxu0
      %1484 = vmatprep.mubr.bf16.mxu0 0
      %1485 = vmatmul.mubr.bf16.gmra.mrb[0].mxu0 %v538
      %v1486 = vpop.f32.mrb[0].mxu0
      %v1487 = vadd.f32 0.0, %v1486
      %v1488 = vpop.f32.mrb[0].mxu0
      %v1489 = vpop.f32.mrb[0].mxu0
      %v1490 = vadd.f32 0.0, %v1489
      %v1491 = vpop.f32.mrb[0].mxu0
      %1492 = vmatprep.mubr.bf16.mxu0 0
      %1493 = vmatmul.mubr.bf16.gmra.mrb[0].mxu0 %v539
      %v1494 = vpop.f32.mrb[0].mxu0
      %v1495 = vadd.f32 0.0, %v1494
      %v1496 = vpop.f32.mrb[0].mxu0
      %v1497 = vpop.f32.mrb[0].mxu0
      %v1498 = vadd.f32 0.0, %v1497
      %v1499 = vpop.f32.mrb[0].mxu0
      %1500 = vmatprep.mubr.bf16.mxu0 0
      %1501 = vmatmul.mubr.bf16.gmra.mrb[0].mxu0 %v540
      %v1502 = vpop.f32.mrb[0].mxu0
      %v1503 = vadd.f32 0.0, %v1502
      %v1504 = vpop.f32.mrb[0].mxu0
      %v1505 = vpop.f32.mrb[0].mxu0
      %v1506 = vadd.f32 0.0, %v1505
      %v1507 = vpop.f32.mrb[0].mxu0
      %1508 = vmatprep.mubr.bf16.mxu0 0
      %1509 = vmatmul.mubr.bf16.gmra.mrb[0].mxu0 %v541
      %v1510 = vpop.f32.mrb[0].mxu0
      %v1511 = vadd.f32 0.0, %v1510
      %v1512 = vpop.f32.mrb[0].mxu0
      %v1513 = vpop.f32.mrb[0].mxu0
      %v1514 = vadd.f32 0.0, %v1513
      %v1515 = vpop.f32.mrb[0].mxu0
      %1516 = vmatprep.mubr.bf16.mxu0 0
      %1517 = vmatmul.mubr.bf16.gmra.mrb[0].mxu0 %v542
      %v1518 = vpop.f32.mrb[0].mxu0
      %v1519 = vadd.f32 0.0, %v1518
      %v1520 = vpop.f32.mrb[0].mxu0
      %v1521 = vpop.f32.mrb[0].mxu0
      %v1522 = vadd.f32 0.0, %v1521
      %v1523 = vpop.f32.mrb[0].mxu0
      %1524 = vmatprep.mubr.bf16.mxu0 0
      %1525 = vmatmul.mubr.bf16.gmra.mrb[0].mxu0 %v543
      %v1526 = vpop.f32.mrb[0].mxu0
      %v1527 = vadd.f32 0.0, %v1526
      %v1528 = vpop.f32.mrb[0].mxu0
      %v1529 = vpop.f32.mrb[0].mxu0
      %v1530 = vadd.f32 0.0, %v1529
      %v1531 = vpop.f32.mrb[0].mxu0
      %1532 = vmatprep.mubr.bf16.mxu0 0
      %1533 = vmatmul.mubr.bf16.gmra.mrb[0].mxu0 %v1394
      %v1534 = vpop.f32.mrb[0].mxu0
      %v1535 = vadd.f32 0.0, %v1534
      %v1536 = vpop.f32.mrb[0].mxu0
      %v1537 = vpop.f32.mrb[0].mxu0
      %v1538 = vadd.f32 0.0, %v1537
      %v1539 = vpop.f32.mrb[0].mxu0
      %1540 = vdwg.mxu0
      %v1541 = vadd.f32 %v1335, %v1479
      %v1542 = vadd.f32 %v1336, %v1482
      %v1543 = vadd.f32 %v1337, %v1487
      %v1544 = vadd.f32 %v1338, %v1490
      %v1545 = vadd.f32 %v1339, %v1495
      %v1546 = vadd.f32 %v1340, %v1498
      %v1547 = vadd.f32 %v1341, %v1503
      %v1548 = vadd.f32 %v1342, %v1506
      %v1549 = vadd.f32 %v1343, %v1511
      %v1550 = vadd.f32 %v1344, %v1514
      %v1551 = vadd.f32 %v1345, %v1519
      %v1552 = vadd.f32 %v1346, %v1522
      %v1553 = vadd.f32 %v1347, %v1527
      %v1554 = vadd.f32 %v1348, %v1530
      %v1555 = vadd.f32 %v1349, %v1535
      %v1556 = vadd.f32 %v1350, %v1538
      %v1558 = vrot.slane %v286, 5
      %v1559 = vrot.slane %v1558, 4
      %v1560 = vrot.slane %v287, 5
      %v1561 = vsel %vm900, %v1559, %v1560
      %v1562 = vrot.slane %v1560, 4
      %v1563 = vrot.slane %v288, 5
      %v1564 = vsel %vm900, %v1562, %v1563
      %s1565 = scalar_lea.vmem %s1, 320
      %v1566 = vld [vmem:[%s1565] sm:$0xf]
      %v1567 = vld [vmem:[%s1565 + $0x4] sm:$0xf]
      %v1568 = vld [vmem:[%s1565 + $0x8] sm:$0xf]
      %v1569 = vld [vmem:[%s1565 + $0xc] sm:$0xf]
      %v1570 = vld [vmem:[%s1565 + $0x10] sm:$0xf]
      %v1571 = vld [vmem:[%s1565 + $0x14] sm:$0xf]
      %v1572 = vld [vmem:[%s1565 + $0x18] sm:$0xf]
      %v1573 = vld [vmem:[%s1565 + $0x1c] sm:$0xf]
      %v1574 = vld [vmem:[%s1565 + $0x20] sm:$0xf]
      %v1575 = vld [vmem:[%s1565 + $0x24] sm:$0xf]
      %v1576 = vld [vmem:[%s1565 + $0x28] sm:$0xf]
      %v1577 = vld [vmem:[%s1565 + $0x2c] sm:$0xf]
      %v1578 = vld [vmem:[%s1565 + $0x30] sm:$0xf]
      %v1579 = vld [vmem:[%s1565 + $0x34] sm:$0xf]
      %v1580 = vld [vmem:[%s1565 + $0x38] sm:$0xf]
      %v1581 = vld [vmem:[%s1565 + $0x3c] sm:$0xf]
      %v1582 = vunpack.c.l.b16 %v1561
      %v1583 = vunpack.c.l.b16 %v1564
      %v1584 = vpack.c.b16 %v1583, %v1582
      %v1602 = vunpack.c.l.b16 %v1566
      %v1603 = vunpack.c.l.b16 %v1567
      %v1604 = vunpack.c.l.b16 %v1568
      %v1605 = vunpack.c.l.b16 %v1569
      %v1606 = vunpack.c.l.b16 %v1570
      %v1607 = vunpack.c.l.b16 %v1571
      %v1608 = vunpack.c.l.b16 %v1572
      %v1609 = vunpack.c.l.b16 %v1573
      %v1610 = vunpack.c.l.b16 %v1574
      %v1611 = vunpack.c.l.b16 %v1575
      %v1612 = vunpack.c.l.b16 %v1576
      %v1613 = vunpack.c.l.b16 %v1577
      %v1614 = vunpack.c.l.b16 %v1578
      %v1615 = vunpack.c.l.b16 %v1579
      %v1616 = vunpack.c.l.b16 %v1580
      %v1617 = vunpack.c.l.b16 %v1581
      %v1618 = vpack.c.b16 %v1603, %v1602
      %v1619 = vpack.c.b16 %v1605, %v1604
      %v1620 = vpack.c.b16 %v1607, %v1606
      %v1621 = vpack.c.b16 %v1609, %v1608
      %v1622 = vpack.c.b16 %v1611, %v1610
      %v1623 = vpack.c.b16 %v1613, %v1612
      %v1624 = vpack.c.b16 %v1615, %v1614
      %v1625 = vpack.c.b16 %v1617, %v1616
      %1634 = vmatprep.subr.bf16.mxu0 0
      %1635 = vmatpush1.bf16.msra.mxu0 %v1618
      %1636 = vmatprep.subr.bf16.mxu0 0
      %1637 = vmatpush1.bf16.msra.mxu0 %v1619
      %1638 = vmatprep.subr.bf16.mxu0 0
      %1639 = vmatpush1.bf16.msra.mxu0 %v1620
      %1640 = vmatprep.subr.bf16.mxu0 0
      %1641 = vmatpush1.bf16.msra.mxu0 %v1621
      %1642 = vmatprep.subr.bf16.mxu0 0
      %1643 = vmatpush1.bf16.msra.mxu0 %v1622
      %1644 = vmatprep.subr.bf16.mxu0 0
      %1645 = vmatpush1.bf16.msra.mxu0 %v1623
      %1646 = vmatprep.subr.bf16.mxu0 0
      %1647 = vmatpush1.bf16.msra.mxu0 %v1624
      %1648 = vmatprep.subr.bf16.mxu0 0
      %1649 = vmatpush1.bf16.msra.mxu0 %v1625
      %1650 = vmatprep.subr.bf16.mxu0 0
      %1651 = vmatpush1.bf16.msra.mxu0 0
      %1652 = vmatprep.subr.bf16.mxu0 0
      %1653 = vmatpush1.bf16.msra.mxu0 0
      %1654 = vmatprep.subr.bf16.mxu0 0
      %1655 = vmatpush1.bf16.msra.mxu0 0
      %1656 = vmatprep.subr.bf16.mxu0 0
      %1657 = vmatpush1.bf16.msra.mxu0 0
      %1658 = vmatprep.subr.bf16.mxu0 0
      %1659 = vmatpush1.bf16.msra.mxu0 0
      %1660 = vmatprep.subr.bf16.mxu0 0
      %1661 = vmatpush1.bf16.msra.mxu0 0
      %1662 = vmatprep.subr.bf16.mxu0 0
      %1663 = vmatpush1.bf16.msra.mxu0 0
      %1664 = vmatprep.subr.bf16.mxu0 0
      %1665 = vmatpush1.bf16.msra.mxu0 0
      %1666 = vmatprep.mubr.bf16.mxu0 0
      %1667 = vmatmul.mubr.bf16.gmra.mrb[0].mxu0 %v991
      %v1668 = vpop.f32.mrb[0].mxu0
      %v1669 = vadd.f32 0.0, %v1668
      %v1670 = vpop.f32.mrb[0].mxu0
      %v1671 = vpop.f32.mrb[0].mxu0
      %v1672 = vadd.f32 0.0, %v1671
      %v1673 = vpop.f32.mrb[0].mxu0
      %1674 = vmatprep.mubr.bf16.mxu0 0
      %1675 = vmatmul.mubr.bf16.gmra.mrb[0].mxu0 %v992
      %v1676 = vpop.f32.mrb[0].mxu0
      %v1677 = vadd.f32 0.0, %v1676
      %v1678 = vpop.f32.mrb[0].mxu0
      %v1679 = vpop.f32.mrb[0].mxu0
      %v1680 = vadd.f32 0.0, %v1679
      %v1681 = vpop.f32.mrb[0].mxu0
      %1682 = vmatprep.mubr.bf16.mxu0 0
      %1683 = vmatmul.mubr.bf16.gmra.mrb[0].mxu0 %v993
      %v1684 = vpop.f32.mrb[0].mxu0
      %v1685 = vadd.f32 0.0, %v1684
      %v1686 = vpop.f32.mrb[0].mxu0
      %v1687 = vpop.f32.mrb[0].mxu0
      %v1688 = vadd.f32 0.0, %v1687
      %v1689 = vpop.f32.mrb[0].mxu0
      %1690 = vmatprep.mubr.bf16.mxu0 0
      %1691 = vmatmul.mubr.bf16.gmra.mrb[0].mxu0 %v994
      %v1692 = vpop.f32.mrb[0].mxu0
      %v1693 = vadd.f32 0.0, %v1692
      %v1694 = vpop.f32.mrb[0].mxu0
      %v1695 = vpop.f32.mrb[0].mxu0
      %v1696 = vadd.f32 0.0, %v1695
      %v1697 = vpop.f32.mrb[0].mxu0
      %1698 = vmatprep.mubr.bf16.mxu0 0
      %1699 = vmatmul.mubr.bf16.gmra.mrb[0].mxu0 %v995
      %v1700 = vpop.f32.mrb[0].mxu0
      %v1701 = vadd.f32 0.0, %v1700
      %v1702 = vpop.f32.mrb[0].mxu0
      %v1703 = vpop.f32.mrb[0].mxu0
      %v1704 = vadd.f32 0.0, %v1703
      %v1705 = vpop.f32.mrb[0].mxu0
      %1706 = vmatprep.mubr.bf16.mxu0 0
      %1707 = vmatmul.mubr.bf16.gmra.mrb[0].mxu0 %v996
      %v1708 = vpop.f32.mrb[0].mxu0
      %v1709 = vadd.f32 0.0, %v1708
      %v1710 = vpop.f32.mrb[0].mxu0
      %v1711 = vpop.f32.mrb[0].mxu0
      %v1712 = vadd.f32 0.0, %v1711
      %v1713 = vpop.f32.mrb[0].mxu0
      %1714 = vmatprep.mubr.bf16.mxu0 0
      %1715 = vmatmul.mubr.bf16.gmra.mrb[0].mxu0 %v997
      %v1716 = vpop.f32.mrb[0].mxu0
      %v1717 = vadd.f32 0.0, %v1716
      %v1718 = vpop.f32.mrb[0].mxu0
      %v1719 = vpop.f32.mrb[0].mxu0
      %v1720 = vadd.f32 0.0, %v1719
      %v1721 = vpop.f32.mrb[0].mxu0
      %1722 = vmatprep.mubr.bf16.mxu0 0
      %1723 = vmatmul.mubr.bf16.gmra.mrb[0].mxu0 %v1584
      %v1724 = vpop.f32.mrb[0].mxu0
      %v1725 = vadd.f32 0.0, %v1724
      %v1726 = vpop.f32.mrb[0].mxu0
      %v1727 = vpop.f32.mrb[0].mxu0
      %v1728 = vadd.f32 0.0, %v1727
      %v1729 = vpop.f32.mrb[0].mxu0
      %1730 = vdwg.mxu0
      %v1731 = vadd.f32 %v1541, %v1669
      %v1732 = vadd.f32 %v1542, %v1672
      %v1733 = vadd.f32 %v1543, %v1677
      %v1734 = vadd.f32 %v1544, %v1680
      %v1735 = vadd.f32 %v1545, %v1685
      %v1736 = vadd.f32 %v1546, %v1688
      %v1737 = vadd.f32 %v1547, %v1693
      %v1738 = vadd.f32 %v1548, %v1696
      %v1739 = vadd.f32 %v1549, %v1701
      %v1740 = vadd.f32 %v1550, %v1704
      %v1741 = vadd.f32 %v1551, %v1709
      %v1742 = vadd.f32 %v1552, %v1712
      %v1743 = vadd.f32 %v1553, %v1717
      %v1744 = vadd.f32 %v1554, %v1720
      %v1745 = vadd.f32 %v1555, %v1725
      %v1746 = vadd.f32 %v1556, %v1728
      %s1747 = scalar_lea.vmem %s1, 384
      %v1748 = vld [vmem:[%s1747] sm:$0xf]
      %v1749 = vld [vmem:[%s1747 + $0x4] sm:$0xf]
      %v1750 = vld [vmem:[%s1747 + $0x8] sm:$0xf]
      %v1751 = vld [vmem:[%s1747 + $0xc] sm:$0xf]
      %v1752 = vld [vmem:[%s1747 + $0x10] sm:$0xf]
      %v1753 = vld [vmem:[%s1747 + $0x14] sm:$0xf]
      %v1754 = vld [vmem:[%s1747 + $0x18] sm:$0xf]
      %v1755 = vld [vmem:[%s1747 + $0x1c] sm:$0xf]
      %v1756 = vld [vmem:[%s1747 + $0x20] sm:$0xf]
      %v1757 = vld [vmem:[%s1747 + $0x24] sm:$0xf]
      %v1758 = vld [vmem:[%s1747 + $0x28] sm:$0xf]
      %v1759 = vld [vmem:[%s1747 + $0x2c] sm:$0xf]
      %v1760 = vld [vmem:[%s1747 + $0x30] sm:$0xf]
      %v1761 = vld [vmem:[%s1747 + $0x34] sm:$0xf]
      %v1762 = vld [vmem:[%s1747 + $0x38] sm:$0xf]
      %v1763 = vld [vmem:[%s1747 + $0x3c] sm:$0xf]
      %v1766 = vunpack.c.l.b16 %v289
      %v1767 = vunpack.c.l.b16 %v290
      %v1768 = vpack.c.b16 %v1767, %v1766
      %v1786 = vunpack.c.l.b16 %v1748
      %v1787 = vunpack.c.l.b16 %v1749
      %v1788 = vunpack.c.l.b16 %v1750
      %v1789 = vunpack.c.l.b16 %v1751
      %v1790 = vunpack.c.l.b16 %v1752
      %v1791 = vunpack.c.l.b16 %v1753
      %v1792 = vunpack.c.l.b16 %v1754
      %v1793 = vunpack.c.l.b16 %v1755
      %v1794 = vunpack.c.l.b16 %v1756
      %v1795 = vunpack.c.l.b16 %v1757
      %v1796 = vunpack.c.l.b16 %v1758
      %v1797 = vunpack.c.l.b16 %v1759
      %v1798 = vunpack.c.l.b16 %v1760
      %v1799 = vunpack.c.l.b16 %v1761
      %v1800 = vunpack.c.l.b16 %v1762
      %v1801 = vunpack.c.l.b16 %v1763
      %v1802 = vpack.c.b16 %v1787, %v1786
      %v1803 = vpack.c.b16 %v1789, %v1788
      %v1804 = vpack.c.b16 %v1791, %v1790
      %v1805 = vpack.c.b16 %v1793, %v1792
      %v1806 = vpack.c.b16 %v1795, %v1794
      %v1807 = vpack.c.b16 %v1797, %v1796
      %v1808 = vpack.c.b16 %v1799, %v1798
      %v1809 = vpack.c.b16 %v1801, %v1800
      %1818 = vmatprep.subr.bf16.mxu0 0
      %1819 = vmatpush1.bf16.msra.mxu0 %v1802
      %1820 = vmatprep.subr.bf16.mxu0 0
      %1821 = vmatpush1.bf16.msra.mxu0 %v1803
      %1822 = vmatprep.subr.bf16.mxu0 0
      %1823 = vmatpush1.bf16.msra.mxu0 %v1804
      %1824 = vmatprep.subr.bf16.mxu0 0
      %1825 = vmatpush1.bf16.msra.mxu0 %v1805
      %1826 = vmatprep.subr.bf16.mxu0 0
      %1827 = vmatpush1.bf16.msra.mxu0 %v1806
      %1828 = vmatprep.subr.bf16.mxu0 0
      %1829 = vmatpush1.bf16.msra.mxu0 %v1807
      %1830 = vmatprep.subr.bf16.mxu0 0
      %1831 = vmatpush1.bf16.msra.mxu0 %v1808
      %1832 = vmatprep.subr.bf16.mxu0 0
      %1833 = vmatpush1.bf16.msra.mxu0 %v1809
      %1834 = vmatprep.subr.bf16.mxu0 0
      %1835 = vmatpush1.bf16.msra.mxu0 0
      %1836 = vmatprep.subr.bf16.mxu0 0
      %1837 = vmatpush1.bf16.msra.mxu0 0
      %1838 = vmatprep.subr.bf16.mxu0 0
      %1839 = vmatpush1.bf16.msra.mxu0 0
      %1840 = vmatprep.subr.bf16.mxu0 0
      %1841 = vmatpush1.bf16.msra.mxu0 0
      %1842 = vmatprep.subr.bf16.mxu0 0
      %1843 = vmatpush1.bf16.msra.mxu0 0
      %1844 = vmatprep.subr.bf16.mxu0 0
      %1845 = vmatpush1.bf16.msra.mxu0 0
      %1846 = vmatprep.subr.bf16.mxu0 0
      %1847 = vmatpush1.bf16.msra.mxu0 0
      %1848 = vmatprep.subr.bf16.mxu0 0
      %1849 = vmatpush1.bf16.msra.mxu0 0
      %1850 = vmatprep.mubr.bf16.mxu0 0
      %1851 = vmatmul.mubr.bf16.gmra.mrb[0].mxu0 %v731
      %v1852 = vpop.f32.mrb[0].mxu0
      %v1853 = vadd.f32 0.0, %v1852
      %v1854 = vpop.f32.mrb[0].mxu0
      %v1855 = vpop.f32.mrb[0].mxu0
      %v1856 = vadd.f32 0.0, %v1855
      %v1857 = vpop.f32.mrb[0].mxu0
      %1858 = vmatprep.mubr.bf16.mxu0 0
      %1859 = vmatmul.mubr.bf16.gmra.mrb[0].mxu0 %v732
      %v1860 = vpop.f32.mrb[0].mxu0
      %v1861 = vadd.f32 0.0, %v1860
      %v1862 = vpop.f32.mrb[0].mxu0
      %v1863 = vpop.f32.mrb[0].mxu0
      %v1864 = vadd.f32 0.0, %v1863
      %v1865 = vpop.f32.mrb[0].mxu0
      %1866 = vmatprep.mubr.bf16.mxu0 0
      %1867 = vmatmul.mubr.bf16.gmra.mrb[0].mxu0 %v733
      %v1868 = vpop.f32.mrb[0].mxu0
      %v1869 = vadd.f32 0.0, %v1868
      %v1870 = vpop.f32.mrb[0].mxu0
      %v1871 = vpop.f32.mrb[0].mxu0
      %v1872 = vadd.f32 0.0, %v1871
      %v1873 = vpop.f32.mrb[0].mxu0
      %1874 = vmatprep.mubr.bf16.mxu0 0
      %1875 = vmatmul.mubr.bf16.gmra.mrb[0].mxu0 %v734
      %v1876 = vpop.f32.mrb[0].mxu0
      %v1877 = vadd.f32 0.0, %v1876
      %v1878 = vpop.f32.mrb[0].mxu0
      %v1879 = vpop.f32.mrb[0].mxu0
      %v1880 = vadd.f32 0.0, %v1879
      %v1881 = vpop.f32.mrb[0].mxu0
      %1882 = vmatprep.mubr.bf16.mxu0 0
      %1883 = vmatmul.mubr.bf16.gmra.mrb[0].mxu0 %v735
      %v1884 = vpop.f32.mrb[0].mxu0
      %v1885 = vadd.f32 0.0, %v1884
      %v1886 = vpop.f32.mrb[0].mxu0
      %v1887 = vpop.f32.mrb[0].mxu0
      %v1888 = vadd.f32 0.0, %v1887
      %v1889 = vpop.f32.mrb[0].mxu0
      %1890 = vmatprep.mubr.bf16.mxu0 0
      %1891 = vmatmul.mubr.bf16.gmra.mrb[0].mxu0 %v736
      %v1892 = vpop.f32.mrb[0].mxu0
      %v1893 = vadd.f32 0.0, %v1892
      %v1894 = vpop.f32.mrb[0].mxu0
      %v1895 = vpop.f32.mrb[0].mxu0
      %v1896 = vadd.f32 0.0, %v1895
      %v1897 = vpop.f32.mrb[0].mxu0
      %1898 = vmatprep.mubr.bf16.mxu0 0
      %1899 = vmatmul.mubr.bf16.gmra.mrb[0].mxu0 %v1188
      %v1900 = vpop.f32.mrb[0].mxu0
      %v1901 = vadd.f32 0.0, %v1900
      %v1902 = vpop.f32.mrb[0].mxu0
      %v1903 = vpop.f32.mrb[0].mxu0
      %v1904 = vadd.f32 0.0, %v1903
      %v1905 = vpop.f32.mrb[0].mxu0
      %1906 = vmatprep.mubr.bf16.mxu0 0
      %1907 = vmatmul.mubr.bf16.gmra.mrb[0].mxu0 %v1768
      %v1908 = vpop.f32.mrb[0].mxu0
      %v1909 = vadd.f32 0.0, %v1908
      %v1910 = vpop.f32.mrb[0].mxu0
      %v1911 = vpop.f32.mrb[0].mxu0
      %v1912 = vadd.f32 0.0, %v1911
      %v1913 = vpop.f32.mrb[0].mxu0
      %1914 = vdwg.mxu0
      %v1915 = vadd.f32 %v1731, %v1853
      %v1916 = vadd.f32 %v1732, %v1856
      %v1917 = vadd.f32 %v1733, %v1861
      %v1918 = vadd.f32 %v1734, %v1864
      %v1919 = vadd.f32 %v1735, %v1869
      %v1920 = vadd.f32 %v1736, %v1872
      %v1921 = vadd.f32 %v1737, %v1877
      %v1922 = vadd.f32 %v1738, %v1880
      %v1923 = vadd.f32 %v1739, %v1885
      %v1924 = vadd.f32 %v1740, %v1888
      %v1925 = vadd.f32 %v1741, %v1893
      %v1926 = vadd.f32 %v1742, %v1896
      %v1927 = vadd.f32 %v1743, %v1901
      %v1928 = vadd.f32 %v1744, %v1904
      %v1929 = vadd.f32 %v1745, %v1909
      %v1930 = vadd.f32 %v1746, %v1912
      %v1932 = vshrl.u32 %v289, 16
      %v1934 = vrot.slane %v1932, 4
      %v1935 = vshll.u32 %v289, 16
      %v1937 = vrot.slane %v1935, 5
      %v1938 = vor.u32 %v1934, %v1937
      %v1939 = vrot.slane %v1938, 4
      %v1941 = vshll.u32 %v290, 16
      %v1943 = vrot.slane %v1941, 5
      %v1944 = vsel %vm310, %v1939, %v1943
      %v1945 = vshrl.u32 %v290, 16
      %v1947 = vrot.slane %v1945, 4
      %v1948 = vor.u32 %v1947, %v1943
      %v1949 = vrot.slane %v1948, 4
      %v1951 = vshll.u32 %v291, 16
      %v1953 = vrot.slane %v1951, 5
      %v1954 = vsel %vm310, %v1949, %v1953
      %s1955 = scalar_lea.vmem %s1, 448
      %v1956 = vld [vmem:[%s1955] sm:$0xf]
      %v1957 = vld [vmem:[%s1955 + $0x4] sm:$0xf]
      %v1958 = vld [vmem:[%s1955 + $0x8] sm:$0xf]
      %v1959 = vld [vmem:[%s1955 + $0xc] sm:$0xf]
      %v1960 = vld [vmem:[%s1955 + $0x10] sm:$0xf]
      %v1961 = vld [vmem:[%s1955 + $0x14] sm:$0xf]
      %v1962 = vld [vmem:[%s1955 + $0x18] sm:$0xf]
      %v1963 = vld [vmem:[%s1955 + $0x1c] sm:$0xf]
      %v1964 = vld [vmem:[%s1955 + $0x20] sm:$0xf]
      %v1965 = vld [vmem:[%s1955 + $0x24] sm:$0xf]
      %v1966 = vld [vmem:[%s1955 + $0x28] sm:$0xf]
      %v1967 = vld [vmem:[%s1955 + $0x2c] sm:$0xf]
      %v1968 = vld [vmem:[%s1955 + $0x30] sm:$0xf]
      %v1969 = vld [vmem:[%s1955 + $0x34] sm:$0xf]
      %v1970 = vld [vmem:[%s1955 + $0x38] sm:$0xf]
      %v1971 = vld [vmem:[%s1955 + $0x3c] sm:$0xf]
      %v1972 = vunpack.c.l.b16 %v1944
      %v1973 = vunpack.c.l.b16 %v1954
      %v1974 = vpack.c.b16 %v1973, %v1972
      %v1992 = vunpack.c.l.b16 %v1956
      %v1993 = vunpack.c.l.b16 %v1957
      %v1994 = vunpack.c.l.b16 %v1958
      %v1995 = vunpack.c.l.b16 %v1959
      %v1996 = vunpack.c.l.b16 %v1960
      %v1997 = vunpack.c.l.b16 %v1961
      %v1998 = vunpack.c.l.b16 %v1962
      %v1999 = vunpack.c.l.b16 %v1963
      %v2000 = vunpack.c.l.b16 %v1964
      %v2001 = vunpack.c.l.b16 %v1965
      %v2002 = vunpack.c.l.b16 %v1966
      %v2003 = vunpack.c.l.b16 %v1967
      %v2004 = vunpack.c.l.b16 %v1968
      %v2005 = vunpack.c.l.b16 %v1969
      %v2006 = vunpack.c.l.b16 %v1970
      %v2007 = vunpack.c.l.b16 %v1971
      %v2008 = vpack.c.b16 %v1993, %v1992
      %v2009 = vpack.c.b16 %v1995, %v1994
      %v2010 = vpack.c.b16 %v1997, %v1996
      %v2011 = vpack.c.b16 %v1999, %v1998
      %v2012 = vpack.c.b16 %v2001, %v2000
      %v2013 = vpack.c.b16 %v2003, %v2002
      %v2014 = vpack.c.b16 %v2005, %v2004
      %v2015 = vpack.c.b16 %v2007, %v2006
      %2024 = vmatprep.subr.bf16.mxu0 0
      %2025 = vmatpush1.bf16.msra.mxu0 %v2008
      %2026 = vmatprep.subr.bf16.mxu0 0
      %2027 = vmatpush1.bf16.msra.mxu0 %v2009
      %2028 = vmatprep.subr.bf16.mxu0 0
      %2029 = vmatpush1.bf16.msra.mxu0 %v2010
      %2030 = vmatprep.subr.bf16.mxu0 0
      %2031 = vmatpush1.bf16.msra.mxu0 %v2011
      %2032 = vmatprep.subr.bf16.mxu0 0
      %2033 = vmatpush1.bf16.msra.mxu0 %v2012
      %2034 = vmatprep.subr.bf16.mxu0 0
      %2035 = vmatpush1.bf16.msra.mxu0 %v2013
      %2036 = vmatprep.subr.bf16.mxu0 0
      %2037 = vmatpush1.bf16.msra.mxu0 %v2014
      %2038 = vmatprep.subr.bf16.mxu0 0
      %2039 = vmatpush1.bf16.msra.mxu0 %v2015
      %2040 = vmatprep.subr.bf16.mxu0 0
      %2041 = vmatpush1.bf16.msra.mxu0 0
      %2042 = vmatprep.subr.bf16.mxu0 0
      %2043 = vmatpush1.bf16.msra.mxu0 0
      %2044 = vmatprep.subr.bf16.mxu0 0
      %2045 = vmatpush1.bf16.msra.mxu0 0
      %2046 = vmatprep.subr.bf16.mxu0 0
      %2047 = vmatpush1.bf16.msra.mxu0 0
      %2048 = vmatprep.subr.bf16.mxu0 0
      %2049 = vmatpush1.bf16.msra.mxu0 0
      %2050 = vmatprep.subr.bf16.mxu0 0
      %2051 = vmatpush1.bf16.msra.mxu0 0
      %2052 = vmatprep.subr.bf16.mxu0 0
      %2053 = vmatpush1.bf16.msra.mxu0 0
      %2054 = vmatprep.subr.bf16.mxu0 0
      %2055 = vmatpush1.bf16.msra.mxu0 0
      %2056 = vmatprep.mubr.bf16.mxu0 0
      %2057 = vmatmul.mubr.bf16.gmra.mrb[0].mxu0 %v538
      %v2058 = vpop.f32.mrb[0].mxu0
      %v2059 = vadd.f32 0.0, %v2058
      %v2060 = vpop.f32.mrb[0].mxu0
      %v2061 = vpop.f32.mrb[0].mxu0
      %v2062 = vadd.f32 0.0, %v2061
      %v2063 = vpop.f32.mrb[0].mxu0
      %2064 = vmatprep.mubr.bf16.mxu0 0
      %2065 = vmatmul.mubr.bf16.gmra.mrb[0].mxu0 %v539
      %v2066 = vpop.f32.mrb[0].mxu0
      %v2067 = vadd.f32 0.0, %v2066
      %v2068 = vpop.f32.mrb[0].mxu0
      %v2069 = vpop.f32.mrb[0].mxu0
      %v2070 = vadd.f32 0.0, %v2069
      %v2071 = vpop.f32.mrb[0].mxu0
      %2072 = vmatprep.mubr.bf16.mxu0 0
      %2073 = vmatmul.mubr.bf16.gmra.mrb[0].mxu0 %v540
      %v2074 = vpop.f32.mrb[0].mxu0
      %v2075 = vadd.f32 0.0, %v2074
      %v2076 = vpop.f32.mrb[0].mxu0
      %v2077 = vpop.f32.mrb[0].mxu0
      %v2078 = vadd.f32 0.0, %v2077
      %v2079 = vpop.f32.mrb[0].mxu0
      %2080 = vmatprep.mubr.bf16.mxu0 0
      %2081 = vmatmul.mubr.bf16.gmra.mrb[0].mxu0 %v541
      %v2082 = vpop.f32.mrb[0].mxu0
      %v2083 = vadd.f32 0.0, %v2082
      %v2084 = vpop.f32.mrb[0].mxu0
      %v2085 = vpop.f32.mrb[0].mxu0
      %v2086 = vadd.f32 0.0, %v2085
      %v2087 = vpop.f32.mrb[0].mxu0
      %2088 = vmatprep.mubr.bf16.mxu0 0
      %2089 = vmatmul.mubr.bf16.gmra.mrb[0].mxu0 %v542
      %v2090 = vpop.f32.mrb[0].mxu0
      %v2091 = vadd.f32 0.0, %v2090
      %v2092 = vpop.f32.mrb[0].mxu0
      %v2093 = vpop.f32.mrb[0].mxu0
      %v2094 = vadd.f32 0.0, %v2093
      %v2095 = vpop.f32.mrb[0].mxu0
      %2096 = vmatprep.mubr.bf16.mxu0 0
      %2097 = vmatmul.mubr.bf16.gmra.mrb[0].mxu0 %v543
      %v2098 = vpop.f32.mrb[0].mxu0
      %v2099 = vadd.f32 0.0, %v2098
      %v2100 = vpop.f32.mrb[0].mxu0
      %v2101 = vpop.f32.mrb[0].mxu0
      %v2102 = vadd.f32 0.0, %v2101
      %v2103 = vpop.f32.mrb[0].mxu0
      %2104 = vmatprep.mubr.bf16.mxu0 0
      %2105 = vmatmul.mubr.bf16.gmra.mrb[0].mxu0 %v1394
      %v2106 = vpop.f32.mrb[0].mxu0
      %v2107 = vadd.f32 0.0, %v2106
      %v2108 = vpop.f32.mrb[0].mxu0
      %v2109 = vpop.f32.mrb[0].mxu0
      %v2110 = vadd.f32 0.0, %v2109
      %v2111 = vpop.f32.mrb[0].mxu0
      %2112 = vmatprep.mubr.bf16.mxu0 0
      %2113 = vmatmul.mubr.bf16.gmra.mrb[0].mxu0 %v1974
      %v2114 = vpop.f32.mrb[0].mxu0
      %v2115 = vadd.f32 0.0, %v2114
      %v2116 = vpop.f32.mrb[0].mxu0
      %v2117 = vpop.f32.mrb[0].mxu0
      %v2118 = vadd.f32 0.0, %v2117
      %v2119 = vpop.f32.mrb[0].mxu0
      %2120 = vdwg.mxu0
      %v2121 = vadd.f32 %v1915, %v2059
      %v2122 = vadd.f32 %v1916, %v2062
      %v2123 = vadd.f32 %v1917, %v2067
      %v2124 = vadd.f32 %v1918, %v2070
      %v2125 = vadd.f32 %v1919, %v2075
      %v2126 = vadd.f32 %v1920, %v2078
      %v2127 = vadd.f32 %v1921, %v2083
      %v2128 = vadd.f32 %v1922, %v2086
      %v2129 = vadd.f32 %v1923, %v2091
      %v2130 = vadd.f32 %v1924, %v2094
      %v2131 = vadd.f32 %v1925, %v2099
      %v2132 = vadd.f32 %v1926, %v2102
      %v2133 = vadd.f32 %v1927, %v2107
      %v2134 = vadd.f32 %v1928, %v2110
      %v2135 = vadd.f32 %v1929, %v2115
      %v2136 = vadd.f32 %v1930, %v2118
      %v2138 = vrot.slane %v289, 5
      %v2139 = vrot.slane %v2138, 4
      %v2140 = vrot.slane %v290, 5
      %v2141 = vsel %vm900, %v2139, %v2140
      %v2142 = vrot.slane %v2140, 4
      %v2143 = vrot.slane %v291, 5
      %v2144 = vsel %vm900, %v2142, %v2143
      %s2145 = scalar_lea.vmem %s1, 512
      %v2146 = vld [vmem:[%s2145] sm:$0xf]
      %v2147 = vld [vmem:[%s2145 + $0x4] sm:$0xf]
      %v2148 = vld [vmem:[%s2145 + $0x8] sm:$0xf]
      %v2149 = vld [vmem:[%s2145 + $0xc] sm:$0xf]
      %v2150 = vld [vmem:[%s2145 + $0x10] sm:$0xf]
      %v2151 = vld [vmem:[%s2145 + $0x14] sm:$0xf]
      %v2152 = vld [vmem:[%s2145 + $0x18] sm:$0xf]
      %v2153 = vld [vmem:[%s2145 + $0x1c] sm:$0xf]
      %v2154 = vld [vmem:[%s2145 + $0x20] sm:$0xf]
      %v2155 = vld [vmem:[%s2145 + $0x24] sm:$0xf]
      %v2156 = vld [vmem:[%s2145 + $0x28] sm:$0xf]
      %v2157 = vld [vmem:[%s2145 + $0x2c] sm:$0xf]
      %v2158 = vld [vmem:[%s2145 + $0x30] sm:$0xf]
      %v2159 = vld [vmem:[%s2145 + $0x34] sm:$0xf]
      %v2160 = vld [vmem:[%s2145 + $0x38] sm:$0xf]
      %v2161 = vld [vmem:[%s2145 + $0x3c] sm:$0xf]
      %v2162 = vunpack.c.l.b16 %v2141
      %v2163 = vunpack.c.l.b16 %v2144
      %v2164 = vpack.c.b16 %v2163, %v2162
      %v2182 = vunpack.c.l.b16 %v2146
      %v2183 = vunpack.c.l.b16 %v2147
      %v2184 = vunpack.c.l.b16 %v2148
      %v2185 = vunpack.c.l.b16 %v2149
      %v2186 = vunpack.c.l.b16 %v2150
      %v2187 = vunpack.c.l.b16 %v2151
      %v2188 = vunpack.c.l.b16 %v2152
      %v2189 = vunpack.c.l.b16 %v2153
      %v2190 = vunpack.c.l.b16 %v2154
      %v2191 = vunpack.c.l.b16 %v2155
      %v2192 = vunpack.c.l.b16 %v2156
      %v2193 = vunpack.c.l.b16 %v2157
      %v2194 = vunpack.c.l.b16 %v2158
      %v2195 = vunpack.c.l.b16 %v2159
      %v2196 = vunpack.c.l.b16 %v2160
      %v2197 = vunpack.c.l.b16 %v2161
      %v2198 = vpack.c.b16 %v2183, %v2182
      %v2199 = vpack.c.b16 %v2185, %v2184
      %v2200 = vpack.c.b16 %v2187, %v2186
      %v2201 = vpack.c.b16 %v2189, %v2188
      %v2202 = vpack.c.b16 %v2191, %v2190
      %v2203 = vpack.c.b16 %v2193, %v2192
      %v2204 = vpack.c.b16 %v2195, %v2194
      %v2205 = vpack.c.b16 %v2197, %v2196
      %2214 = vmatprep.subr.bf16.mxu0 0
      %2215 = vmatpush1.bf16.msra.mxu0 %v2198
      %2216 = vmatprep.subr.bf16.mxu0 0
      %2217 = vmatpush1.bf16.msra.mxu0 %v2199
      %2218 = vmatprep.subr.bf16.mxu0 0
      %2219 = vmatpush1.bf16.msra.mxu0 %v2200
      %2220 = vmatprep.subr.bf16.mxu0 0
      %2221 = vmatpush1.bf16.msra.mxu0 %v2201
      %2222 = vmatprep.subr.bf16.mxu0 0
      %2223 = vmatpush1.bf16.msra.mxu0 %v2202
      %2224 = vmatprep.subr.bf16.mxu0 0
      %2225 = vmatpush1.bf16.msra.mxu0 %v2203
      %2226 = vmatprep.subr.bf16.mxu0 0
      %2227 = vmatpush1.bf16.msra.mxu0 %v2204
      %2228 = vmatprep.subr.bf16.mxu0 0
      %2229 = vmatpush1.bf16.msra.mxu0 %v2205
      %2230 = vmatprep.subr.bf16.mxu0 0
      %2231 = vmatpush1.bf16.msra.mxu0 0
      %2232 = vmatprep.subr.bf16.mxu0 0
      %2233 = vmatpush1.bf16.msra.mxu0 0
      %2234 = vmatprep.subr.bf16.mxu0 0
      %2235 = vmatpush1.bf16.msra.mxu0 0
      %2236 = vmatprep.subr.bf16.mxu0 0
      %2237 = vmatpush1.bf16.msra.mxu0 0
      %2238 = vmatprep.subr.bf16.mxu0 0
      %2239 = vmatpush1.bf16.msra.mxu0 0
      %2240 = vmatprep.subr.bf16.mxu0 0
      %2241 = vmatpush1.bf16.msra.mxu0 0
      %2242 = vmatprep.subr.bf16.mxu0 0
      %2243 = vmatpush1.bf16.msra.mxu0 0
      %2244 = vmatprep.subr.bf16.mxu0 0
      %2245 = vmatpush1.bf16.msra.mxu0 0
      %2246 = vmatprep.mubr.bf16.mxu0 0
      %2247 = vmatmul.mubr.bf16.gmra.mrb[0].mxu0 %v992
      %v2248 = vpop.f32.mrb[0].mxu0
      %v2249 = vadd.f32 0.0, %v2248
      %v2250 = vpop.f32.mrb[0].mxu0
      %v2251 = vpop.f32.mrb[0].mxu0
      %v2252 = vadd.f32 0.0, %v2251
      %v2253 = vpop.f32.mrb[0].mxu0
      %2254 = vmatprep.mubr.bf16.mxu0 0
      %2255 = vmatmul.mubr.bf16.gmra.mrb[0].mxu0 %v993
      %v2256 = vpop.f32.mrb[0].mxu0
      %v2257 = vadd.f32 0.0, %v2256
      %v2258 = vpop.f32.mrb[0].mxu0
      %v2259 = vpop.f32.mrb[0].mxu0
      %v2260 = vadd.f32 0.0, %v2259
      %v2261 = vpop.f32.mrb[0].mxu0
      %2262 = vmatprep.mubr.bf16.mxu0 0
      %2263 = vmatmul.mubr.bf16.gmra.mrb[0].mxu0 %v994
      %v2264 = vpop.f32.mrb[0].mxu0
      %v2265 = vadd.f32 0.0, %v2264
      %v2266 = vpop.f32.mrb[0].mxu0
      %v2267 = vpop.f32.mrb[0].mxu0
      %v2268 = vadd.f32 0.0, %v2267
      %v2269 = vpop.f32.mrb[0].mxu0
      %2270 = vmatprep.mubr.bf16.mxu0 0
      %2271 = vmatmul.mubr.bf16.gmra.mrb[0].mxu0 %v995
      %v2272 = vpop.f32.mrb[0].mxu0
      %v2273 = vadd.f32 0.0, %v2272
      %v2274 = vpop.f32.mrb[0].mxu0
      %v2275 = vpop.f32.mrb[0].mxu0
      %v2276 = vadd.f32 0.0, %v2275
      %v2277 = vpop.f32.mrb[0].mxu0
      %2278 = vmatprep.mubr.bf16.mxu0 0
      %2279 = vmatmul.mubr.bf16.gmra.mrb[0].mxu0 %v996
      %v2280 = vpop.f32.mrb[0].mxu0
      %v2281 = vadd.f32 0.0, %v2280
      %v2282 = vpop.f32.mrb[0].mxu0
      %v2283 = vpop.f32.mrb[0].mxu0
      %v2284 = vadd.f32 0.0, %v2283
      %v2285 = vpop.f32.mrb[0].mxu0
      %2286 = vmatprep.mubr.bf16.mxu0 0
      %2287 = vmatmul.mubr.bf16.gmra.mrb[0].mxu0 %v997
      %v2288 = vpop.f32.mrb[0].mxu0
      %v2289 = vadd.f32 0.0, %v2288
      %v2290 = vpop.f32.mrb[0].mxu0
      %v2291 = vpop.f32.mrb[0].mxu0
      %v2292 = vadd.f32 0.0, %v2291
      %v2293 = vpop.f32.mrb[0].mxu0
      %2294 = vmatprep.mubr.bf16.mxu0 0
      %2295 = vmatmul.mubr.bf16.gmra.mrb[0].mxu0 %v1584
      %v2296 = vpop.f32.mrb[0].mxu0
      %v2297 = vadd.f32 0.0, %v2296
      %v2298 = vpop.f32.mrb[0].mxu0
      %v2299 = vpop.f32.mrb[0].mxu0
      %v2300 = vadd.f32 0.0, %v2299
      %v2301 = vpop.f32.mrb[0].mxu0
      %2302 = vmatprep.mubr.bf16.mxu0 0
      %2303 = vmatmul.mubr.bf16.gmra.mrb[0].mxu0 %v2164
      %v2304 = vpop.f32.mrb[0].mxu0
      %v2305 = vadd.f32 0.0, %v2304
      %v2306 = vpop.f32.mrb[0].mxu0
      %v2307 = vpop.f32.mrb[0].mxu0
      %v2308 = vadd.f32 0.0, %v2307
      %v2309 = vpop.f32.mrb[0].mxu0
      %2310 = vdwg.mxu0
      %v2311 = vadd.f32 %v2121, %v2249
      %v2312 = vadd.f32 %v2122, %v2252
      %v2313 = vadd.f32 %v2123, %v2257
      %v2314 = vadd.f32 %v2124, %v2260
      %v2315 = vadd.f32 %v2125, %v2265
      %v2316 = vadd.f32 %v2126, %v2268
      %v2317 = vadd.f32 %v2127, %v2273
      %v2318 = vadd.f32 %v2128, %v2276
      %v2319 = vadd.f32 %v2129, %v2281
      %v2320 = vadd.f32 %v2130, %v2284
      %v2321 = vadd.f32 %v2131, %v2289
      %v2322 = vadd.f32 %v2132, %v2292
      %v2323 = vadd.f32 %v2133, %v2297
      %v2324 = vadd.f32 %v2134, %v2300
      %v2325 = vadd.f32 %v2135, %v2305
      %v2326 = vadd.f32 %v2136, %v2308
      %v2327 = vpack.c.bf16 %v2312, %v2311
      %v2328 = vpack.c.bf16 %v2314, %v2313
      %v2329 = vpack.c.bf16 %v2316, %v2315
      %v2330 = vpack.c.bf16 %v2318, %v2317
      %v2331 = vpack.c.bf16 %v2320, %v2319
      %v2332 = vpack.c.bf16 %v2322, %v2321
      %v2333 = vpack.c.bf16 %v2324, %v2323
      %v2334 = vpack.c.bf16 %v2326, %v2325
      %v2343 = vunpack.c.l.b16 %v2327
      %v2344 = vunpack.c.h.b16 %v2327
      %v2345 = vunpack.c.l.b16 %v2328
      %v2346 = vunpack.c.h.b16 %v2328
      %v2347 = vunpack.c.l.b16 %v2329
      %v2348 = vunpack.c.h.b16 %v2329
      %v2349 = vunpack.c.l.b16 %v2330
      %v2350 = vunpack.c.h.b16 %v2330
      %v2351 = vunpack.c.l.b16 %v2331
      %v2352 = vunpack.c.h.b16 %v2331
      %v2353 = vunpack.c.l.b16 %v2332
      %v2354 = vunpack.c.h.b16 %v2332
      %v2355 = vunpack.c.l.b16 %v2333
      %v2356 = vunpack.c.h.b16 %v2333
      %v2357 = vunpack.c.l.b16 %v2334
      %v2358 = vunpack.c.h.b16 %v2334
      %v2359 = vpack.c.b16 %v2343, %v2343
      %v2360 = vpack.c.b16 %v2344, %v2344
      %v2361 = vpack.c.b16 %v2345, %v2345
      %v2362 = vpack.c.b16 %v2346, %v2346
      %v2363 = vpack.c.b16 %v2347, %v2347
      %v2364 = vpack.c.b16 %v2348, %v2348
      %v2365 = vpack.c.b16 %v2349, %v2349
      %v2366 = vpack.c.b16 %v2350, %v2350
      %v2367 = vpack.c.b16 %v2351, %v2351
      %v2368 = vpack.c.b16 %v2352, %v2352
      %v2369 = vpack.c.b16 %v2353, %v2353
      %v2370 = vpack.c.b16 %v2354, %v2354
      %v2371 = vpack.c.b16 %v2355, %v2355
      %v2372 = vpack.c.b16 %v2356, %v2356
      %v2373 = vpack.c.b16 %v2357, %v2357
      %v2374 = vpack.c.b16 %v2358, %v2358
      %2391 = vst [vmem:[%s240] sm:$0xf] %v2359
      %2392 = vst [vmem:[%s240 + $0x4] sm:$0xf] %v2360
      %2393 = vst [vmem:[%s240 + $0x8] sm:$0xf] %v2361
      %2394 = vst [vmem:[%s240 + $0xc] sm:$0xf] %v2362
      %2395 = vst [vmem:[%s240 + $0x10] sm:$0xf] %v2363
      %2396 = vst [vmem:[%s240 + $0x14] sm:$0xf] %v2364
      %2397 = vst [vmem:[%s240 + $0x18] sm:$0xf] %v2365
      %2398 = vst [vmem:[%s240 + $0x1c] sm:$0xf] %v2366
      %2399 = vst [vmem:[%s240 + $0x20] sm:$0xf] %v2367
      %2400 = vst [vmem:[%s240 + $0x24] sm:$0xf] %v2368
      %2401 = vst [vmem:[%s240 + $0x28] sm:$0xf] %v2369
      %2402 = vst [vmem:[%s240 + $0x2c] sm:$0xf] %v2370
      %2403 = vst [vmem:[%s240 + $0x30] sm:$0xf] %v2371
      %2404 = vst [vmem:[%s240 + $0x34] sm:$0xf] %v2372
      %2405 = vst [vmem:[%s240 + $0x38] sm:$0xf] %v2373
      %2406 = vst [vmem:[%s240 + $0x3c] sm:$0xf] %v2374
      %v2407 = vadd.f32 %v2311, %v2312
      %v2408 = vadd.f32 %v2407, %v2313
      %v2409 = vadd.f32 %v2408, %v2314
      %v2410 = vadd.f32 %v2409, %v2315
      %v2411 = vadd.f32 %v2410, %v2316
      %v2412 = vadd.f32 %v2411, %v2317
      %v2413 = vadd.f32 %v2412, %v2318
      %v2414 = vadd.f32 %v2413, %v2319
      %v2415 = vadd.f32 %v2414, %v2320
      %v2416 = vadd.f32 %v2415, %v2321
      %v2417 = vadd.f32 %v2416, %v2322
      %v2418 = vadd.f32 %v2417, %v2323
      %v2419 = vadd.f32 %v2418, %v2324
      %v2420 = vadd.f32 %v2419, %v2325
      %v2421 = vadd.f32 %v2420, %v2326
      %v2422 = vrot.slane %v2421, 4
      %v2423 = vadd.f32 %v2421, %v2422
      %v2424 = vrot.slane %v2423, 2
      %v2425 = vadd.f32 %v2423, %v2424
      %v2426 = vrot.slane %v2425, 1
      %v2427 = vadd.f32 %v2425, %v2426
      %2428 = vst [vmem:[%s247] sm:$0x1] %v2427
      %v2429 = vmul.f32 %v2311, %v2311
      %v2430 = vmul.f32 %v2312, %v2312
      %v2431 = vmul.f32 %v2313, %v2313
      %v2432 = vmul.f32 %v2314, %v2314
      %v2433 = vmul.f32 %v2315, %v2315
      %v2434 = vmul.f32 %v2316, %v2316
      %v2435 = vmul.f32 %v2317, %v2317
      %v2436 = vmul.f32 %v2318, %v2318
      %v2437 = vmul.f32 %v2319, %v2319
      %v2438 = vmul.f32 %v2320, %v2320
      %v2439 = vmul.f32 %v2321, %v2321
      %v2440 = vmul.f32 %v2322, %v2322
      %v2441 = vmul.f32 %v2323, %v2323
      %v2442 = vmul.f32 %v2324, %v2324
      %v2443 = vmul.f32 %v2325, %v2325
      %v2444 = vmul.f32 %v2326, %v2326
      %v2445 = vadd.f32 %v2429, %v2430
      %v2446 = vadd.f32 %v2445, %v2431
      %v2447 = vadd.f32 %v2446, %v2432
      %v2448 = vadd.f32 %v2447, %v2433
      %v2449 = vadd.f32 %v2448, %v2434
      %v2450 = vadd.f32 %v2449, %v2435
      %v2451 = vadd.f32 %v2450, %v2436
      %v2452 = vadd.f32 %v2451, %v2437
      %v2453 = vadd.f32 %v2452, %v2438
      %v2454 = vadd.f32 %v2453, %v2439
      %v2455 = vadd.f32 %v2454, %v2440
      %v2456 = vadd.f32 %v2455, %v2441
      %v2457 = vadd.f32 %v2456, %v2442
      %v2458 = vadd.f32 %v2457, %v2443
      %v2459 = vadd.f32 %v2458, %v2444
      %v2460 = vrot.slane %v2459, 4
      %v2461 = vadd.f32 %v2459, %v2460
      %v2462 = vrot.slane %v2461, 2
      %v2463 = vadd.f32 %v2461, %v2462
      %v2464 = vrot.slane %v2463, 1
      %v2465 = vadd.f32 %v2463, %v2464
      %2466 = vst [vmem:[%s254] sm:$0x1] %v2465
      %s2467 = smul.u32 %s20, 2
      %s2468 = sadd.s32 %s2467, %s21
      %p2469 = scmp.lt.s32.totalorder %s2468, 3
      %s2470 = scalar_select %p2469, %s2468, 3
      %s2471 = smul.addr %s2470, 16
      %s2472 = smul.addr %s2471, 4
      %s2473 = scalar_lea.vmem %s2, %s2472
      %s2474 = smul.u32 %s20, 2
      %s2475 = sadd.s32 %s2474, %s21
      %p2476 = scmp.lt.s32.totalorder %s2475, 3
      %s2477 = scalar_select %p2476, %s2475, 3
      %s2478 = scalar_lea.vmem %s3, %s2477
      %s2479 = smul.u32 %s20, 2
      %s2480 = sadd.s32 %s2479, %s21
      %p2481 = scmp.lt.s32.totalorder %s2480, 3
      %s2482 = scalar_select %p2481, %s2480, 3
      %s2483 = scalar_lea.vmem %s4, %s2482
      // Predicated region
      $region29: #{resnet_block_forward.2} parent=27 // pred_check
        %p2484 = pneg %p97
      $region30: #{resnet_block_forward.2} parent=27 // pred_check_branch
        %2486 = sbr.rel (%p2484) target = $region32
      $region31: #{resnet_block_forward.2} parent=27 // pred_region
        %s2487 = smul.u32 %s20, 2
        %s2488 = sadd.s32 %s2487, %s21
      $region32: #{resnet_block_forward.2} parent=27 // pred_fallthru
        _
      // Predicated region
      $region33: #{resnet_block_forward.2} parent=27 // pred_check
        %p2489 = pneg %p127
      $region34: #{resnet_block_forward.2} parent=27 // pred_check_branch
        %2491 = sbr.rel (%p2489) target = $region36
      $region35: #{resnet_block_forward.2} parent=27 // pred_region
        %s2492 = smul.u32 %s20, 2
        %s2493 = sadd.s32 %s2492, %s21
      $region36: #{resnet_block_forward.2} parent=27 // pred_fallthru
        _
      // Predicated region
      $region37: #{resnet_block_forward.2} parent=27 // pred_check
        %p2494 = pneg %p157
      $region38: #{resnet_block_forward.2} parent=27 // pred_check_branch
        %2496 = sbr.rel (%p2494) target = $region40
      $region39: #{resnet_block_forward.2} parent=27 // pred_region
        %s2497 = smul.u32 %s20, 2
        %s2498 = sadd.s32 %s2497, %s21
      $region40: #{resnet_block_forward.2} parent=27 // pred_fallthru
        _
    $region28: #{resnet_block_forward.2} parent=5 // pred_fallthru
      _
    %p2499 = scmp.le.s32.totalorder 2, %s11
    // Predicated region
    $region41: #{resnet_block_forward.2} parent=5 // pred_check
      %p2500 = pneg %p2499
    $region42: #{resnet_block_forward.2} parent=5 // pred_check_branch
      %2502 = sbr.rel (%p2500) target = $region44
    $region43: #{resnet_block_forward.2} parent=5 // pred_region
      %s2503 = ssub.s32 %s11, 2
      // Predicated region
      $region45: #{resnet_block_forward.2} parent=43 // pred_check
        %p2504 = pneg %p103
      $region46: #{resnet_block_forward.2} parent=43 // pred_check_branch
        %2506 = sbr.rel (%p2504) target = $region48
      $region47: #{resnet_block_forward.2} parent=43 // pred_region
        %s2507 = smul.u32 %s22, 2
        %s2508 = sadd.s32 %s2507, %s23
        %p2509 = scmp.lt.s32.totalorder %s2508, 3
        %s2510 = scalar_select %p2509, %s2508, 3
        %s2511 = smul.addr %s2510, 16
        %s2512 = smul.addr %s2511, 4
        %s2513 = scalar_lea.vmem %s2, %s2512
      $region48: #{resnet_block_forward.2} parent=43 // pred_fallthru
        _
      // Predicated region
      $region49: #{resnet_block_forward.2} parent=43 // pred_check
        %p2514 = pneg %p133
      $region50: #{resnet_block_forward.2} parent=43 // pred_check_branch
        %2516 = sbr.rel (%p2514) target = $region52
      $region51: #{resnet_block_forward.2} parent=43 // pred_region
        %s2517 = smul.u32 %s22, 2
        %s2518 = sadd.s32 %s2517, %s23
        %p2519 = scmp.lt.s32.totalorder %s2518, 3
        %s2520 = scalar_select %p2519, %s2518, 3
        %s2521 = scalar_lea.vmem %s3, %s2520
      $region52: #{resnet_block_forward.2} parent=43 // pred_fallthru
        _
      // Predicated region
      $region53: #{resnet_block_forward.2} parent=43 // pred_check
        %p2522 = pneg %p163
      $region54: #{resnet_block_forward.2} parent=43 // pred_check_branch
        %2524 = sbr.rel (%p2522) target = $region56
      $region55: #{resnet_block_forward.2} parent=43 // pred_region
        %s2525 = smul.u32 %s22, 2
        %s2526 = sadd.s32 %s2525, %s23
        %p2527 = scmp.lt.s32.totalorder %s2526, 3
        %s2528 = scalar_select %p2527, %s2526, 3
        %s2529 = scalar_lea.vmem %s4, %s2528
      $region56: #{resnet_block_forward.2} parent=43 // pred_fallthru
        _
    $region44: #{resnet_block_forward.2} parent=5 // pred_fallthru
      _
  $region6: #{resnet_block_forward.2} parent=0 // loop_footer
    %s15 = sadd.s32 1, %s11
  $region7: #{resnet_block_forward.2} parent=0 // loop_footer_branch
    %10 = sbr.rel target = $region3
  $region8: #{resnet_block_forward.2} parent=0 // loop_exit
    _

// kernel: resnet_block_forward.3
$region0: #{resnet_block_forward.3}
  #allocation0 [shape = 'u32[]', space=smem, size = 0x4, offset = 0x4, fixed_abs, tag = 'smem constant byte address 0x4 - core index']
  #allocation1 [shape = 'u32[144,128]{1,0:T(1,128)}', space=vmem, size = 0x12000, scoped, tag = 'internal scratch']
  %s0 = inlined_call_operand.vmem [shape: bf16[2,18,18,128], index: 0, kind: input, shape index: {}]
  %s1 = inlined_call_operand.vmem [shape: bf16[9,128,128], index: 1, kind: input, shape index: {}]
  %s2 = inlined_call_operand.vmem [shape: f32[1,128], index: 2, kind: input, shape index: {}]
  %s3 = inlined_call_operand.vmem [shape: f32[1,128], index: 3, kind: input, shape index: {}]
  %s4 = inlined_call_operand.vmem [shape: f32[1,128], index: 4, kind: input, shape index: {}]
  %s5 = inlined_call_operand.vmem [shape: f32[4,128,128], index: 5, kind: input, shape index: {}]
  %s6 = inlined_call_operand.vmem [shape: f32[4,128,128], index: 6, kind: output, shape index: {}]
  %s7 = sld [smem:[#allocation0]]
  $region57: #{resnet_block_forward.3} parent=0
    _
  %s9 = ssub.s32 1, %s7
  %s10 = scalar_select 0, %s9, %s7
  loop: start=0, step=1, limit=6
  $region2: #{resnet_block_forward.3} parent=0 // loop_pre_header
    _
  $region3: #{resnet_block_forward.3} parent=0 // loop_header
    %s12 = sphi 0, %s16
    %p13 = scmp.ge.s32.totalorder %s12, 6
    %s19 = sphi 0, %s31
    %s20 = sphi 0, %s27
    %s21 = sphi 0, %s19
    %s22 = sphi 0, %s20
    %s23 = sphi 0, %s21
    %s24 = sphi 0, %s22
    %s34 = sphi 0, %s36
    %s37 = sphi 0, %s34
    %s38 = sphi 0, %s37
    %s54 = sphi 0, %s38
    %s58 = sphi 0, %s58
    %s60 = sphi 0, %s58
    %s61 = sphi 0, %s60
    %s75 = sphi 0, %s61
    %s79 = sphi 0, %s79
    %s81 = sphi 0, %s79
    %s82 = sphi 0, %s81
    %s96 = sphi 0, %s82
    %s100 = sphi 0, %s100
    %s102 = sphi 0, %s100
    %s103 = sphi 0, %s102
    %s117 = sphi 0, %s103
    %s121 = sphi 0, %s121
    %s123 = sphi 0, %s121
    %s124 = sphi 0, %s123
    %s138 = sphi 0, %s124
    %s148 = sphi 0, %s150
    %s151 = sphi 0, %s148
    %s152 = sphi 0, %s151
    %s168 = sphi 0, %s152
    %s178 = sphi 0, %s180
    %s181 = sphi 0, %s178
    %s182 = sphi 0, %s181
    %s198 = sphi 0, %s182
  $region4: #{resnet_block_forward.3} parent=0 // loop_header_branch
    %15 = sbr.rel (%p13) target = $region8
  $region5: #{resnet_block_forward.3} parent=0 // loop_body
    %s17 = ssub.s32 %s12, 1
    %s18 = ssub.s32 %s12, 2
    %s25 = sadd.s32 1, %s20
    %p26 = scmp.ge.s32.totalorder %s25, 2
    %s27 = scalar_select %p26, 0, %s25
    %s28 = sadd.s32 1, %s19
    %s29 = scalar_select %p26, %s28, %s19
    %p30 = scmp.ge.s32.totalorder %s29, 2
    %s31 = scalar_select %p30, 0, %s29
    %s32 = ssub.s32 %s19, %s31
    %p33 = scmp.eq.s32.totalorder %s32, 0
    %s35 = sadd.s32 %s34, 1
    %s36 = scalar_select %p33, %s34, %s35
    %p39 = pneg %p33
    %p40 = scmp.eq.s32.totalorder %s12, 3
    %p41 = por %p39, %p40
    %p42 = scmp.ne.s32.totalorder %s34, %s37
    %p43 = scmp.eq.s32.totalorder %s12, 0
    %p44 = por %p42, %p43
    %p45 = scmp.ne.s32.totalorder %s34, %s37
    %p46 = scmp.eq.s32.totalorder %s17, 3
    %p47 = por %p45, %p46
    %p48 = scmp.ne.s32.totalorder %s37, %s38
    %p49 = scmp.eq.s32.totalorder %s17, 0
    %p50 = por %p48, %p49
    %p51 = scmp.ne.s32.totalorder %s37, %s38
    %p52 = scmp.eq.s32.totalorder %s18, 3
    %p53 = por %p51, %p52
    %p55 = scmp.ne.s32.totalorder %s38, %s54
    %p56 = scmp.eq.s32.totalorder %s18, 0
    %p57 = por %p55, %p56
    %s59 = sadd.s32 %s58, 1
    %p62 = scmp.eq.s32.totalorder %s12, 3
    %p63 = scmp.ne.s32.totalorder %s58, %s60
    %p64 = scmp.eq.s32.totalorder %s12, 0
    %p65 = por %p63, %p64
    %p66 = scmp.ne.s32.totalorder %s58, %s60
    %p67 = scmp.eq.s32.totalorder %s17, 3
    %p68 = por %p66, %p67
    %p69 = scmp.ne.s32.totalorder %s60, %s61
    %p70 = scmp.eq.s32.totalorder %s17, 0
    %p71 = por %p69, %p70
    %p72 = scmp.ne.s32.totalorder %s60, %s61
    %p73 = scmp.eq.s32.totalorder %s18, 3
    %p74 = por %p72, %p73
    %p76 = scmp.ne.s32.totalorder %s61, %s75
    %p77 = scmp.eq.s32.totalorder %s18, 0
    %p78 = por %p76, %p77
    %s80 = sadd.s32 %s79, 1
    %p83 = scmp.eq.s32.totalorder %s12, 3
    %p84 = scmp.ne.s32.totalorder %s79, %s81
    %p85 = scmp.eq.s32.totalorder %s12, 0
    %p86 = por %p84, %p85
    %p87 = scmp.ne.s32.totalorder %s79, %s81
    %p88 = scmp.eq.s32.totalorder %s17, 3
    %p89 = por %p87, %p88
    %p90 = scmp.ne.s32.totalorder %s81, %s82
    %p91 = scmp.eq.s32.totalorder %s17, 0
    %p92 = por %p90, %p91
    %p93 = scmp.ne.s32.totalorder %s81, %s82
    %p94 = scmp.eq.s32.totalorder %s18, 3
    %p95 = por %p93, %p94
    %p97 = scmp.ne.s32.totalorder %s82, %s96
    %p98 = scmp.eq.s32.totalorder %s18, 0
    %p99 = por %p97, %p98
    %s101 = sadd.s32 %s100, 1
    %p104 = scmp.eq.s32.totalorder %s12, 3
    %p105 = scmp.ne.s32.totalorder %s100, %s102
    %p106 = scmp.eq.s32.totalorder %s12, 0
    %p107 = por %p105, %p106
    %p108 = scmp.ne.s32.totalorder %s100, %s102
    %p109 = scmp.eq.s32.totalorder %s17, 3
    %p110 = por %p108, %p109
    %p111 = scmp.ne.s32.totalorder %s102, %s103
    %p112 = scmp.eq.s32.totalorder %s17, 0
    %p113 = por %p111, %p112
    %p114 = scmp.ne.s32.totalorder %s102, %s103
    %p115 = scmp.eq.s32.totalorder %s18, 3
    %p116 = por %p114, %p115
    %p118 = scmp.ne.s32.totalorder %s103, %s117
    %p119 = scmp.eq.s32.totalorder %s18, 0
    %p120 = por %p118, %p119
    %s122 = sadd.s32 %s121, 1
    %p125 = scmp.eq.s32.totalorder %s12, 3
    %p126 = scmp.ne.s32.totalorder %s121, %s123
    %p127 = scmp.eq.s32.totalorder %s12, 0
    %p128 = por %p126, %p127
    %p129 = scmp.ne.s32.totalorder %s121, %s123
    %p130 = scmp.eq.s32.totalorder %s17, 3
    %p131 = por %p129, %p130
    %p132 = scmp.ne.s32.totalorder %s123, %s124
    %p133 = scmp.eq.s32.totalorder %s17, 0
    %p134 = por %p132, %p133
    %p135 = scmp.ne.s32.totalorder %s123, %s124
    %p136 = scmp.eq.s32.totalorder %s18, 3
    %p137 = por %p135, %p136
    %p139 = scmp.ne.s32.totalorder %s124, %s138
    %p140 = scmp.eq.s32.totalorder %s18, 0
    %p141 = por %p139, %p140
    %s142 = smul.u32 %s19, 2
    %s143 = sadd.s32 %s142, %s20
    %s144 = smul.u32 %s31, 2
    %s145 = sadd.s32 %s144, %s27
    %s146 = ssub.s32 %s143, %s145
    %p147 = scmp.eq.s32.totalorder %s146, 0
    %s149 = sadd.s32 %s148, 1
    %s150 = scalar_select %p147, %s148, %s149
    %p153 = pneg %p147
    %p154 = scmp.eq.s32.totalorder %s12, 3
    %p155 = por %p153, %p154
    %p156 = scmp.ne.s32.totalorder %s148, %s151
    %p157 = scmp.eq.s32.totalorder %s12, 0
    %p158 = por %p156, %p157
    %p159 = scmp.ne.s32.totalorder %s148, %s151
    %p160 = scmp.eq.s32.totalorder %s17, 3
    %p161 = por %p159, %p160
    %p162 = scmp.ne.s32.totalorder %s151, %s152
    %p163 = scmp.eq.s32.totalorder %s17, 0
    %p164 = por %p162, %p163
    %p165 = scmp.ne.s32.totalorder %s151, %s152
    %p166 = scmp.eq.s32.totalorder %s18, 3
    %p167 = por %p165, %p166
    %p169 = scmp.ne.s32.totalorder %s152, %s168
    %p170 = scmp.eq.s32.totalorder %s18, 0
    %p171 = por %p169, %p170
    %s172 = smul.u32 %s19, 2
    %s173 = sadd.s32 %s172, %s20
    %s174 = smul.u32 %s31, 2
    %s175 = sadd.s32 %s174, %s27
    %s176 = ssub.s32 %s173, %s175
    %p177 = scmp.eq.s32.totalorder %s176, 0
    %s179 = sadd.s32 %s178, 1
    %s180 = scalar_select %p177, %s178, %s179
    %p183 = pneg %p177
    %p184 = scmp.eq.s32.totalorder %s12, 3
    %p185 = por %p183, %p184
    %p186 = scmp.ne.s32.totalorder %s178, %s181
    %p187 = scmp.eq.s32.totalorder %s12, 0
    %p188 = por %p186, %p187
    %p189 = scmp.ne.s32.totalorder %s178, %s181
    %p190 = scmp.eq.s32.totalorder %s17, 3
    %p191 = por %p189, %p190
    %p192 = scmp.ne.s32.totalorder %s181, %s182
    %p193 = scmp.eq.s32.totalorder %s17, 0
    %p194 = por %p192, %p193
    %p195 = scmp.ne.s32.totalorder %s181, %s182
    %p196 = scmp.eq.s32.totalorder %s18, 3
    %p197 = por %p195, %p196
    %p199 = scmp.ne.s32.totalorder %s182, %s198
    %p200 = scmp.eq.s32.totalorder %s18, 0
    %p201 = por %p199, %p200
    %p202 = scmp.le.s32.totalorder 1, %s12
    %p203 = scmp.lt.s32.totalorder %s12, 5
    %p204 = pnand %p202, %p203
    %p205 = pneg %p204
    // Predicated region
    $region9: #{resnet_block_forward.3} parent=5 // pred_check
      _
    $region10: #{resnet_block_forward.3} parent=5 // pred_check_branch
      %207 = sbr.rel (%p204) target = $region12
    $region11: #{resnet_block_forward.3} parent=5 // pred_region
      %s208 = ssub.s32 %s12, 1
      // Predicated region
      $region13: #{resnet_block_forward.3} parent=11 // pred_check
        %p209 = pneg %p71
      $region14: #{resnet_block_forward.3} parent=11 // pred_check_branch
        %211 = sbr.rel (%p209) target = $region16
      $region15: #{resnet_block_forward.3} parent=11 // pred_region
        _
      $region16: #{resnet_block_forward.3} parent=11 // pred_fallthru
        _
      // Predicated region
      $region17: #{resnet_block_forward.3} parent=11 // pred_check
        %p212 = pneg %p92
      $region18: #{resnet_block_forward.3} parent=11 // pred_check_branch
        %214 = sbr.rel (%p212) target = $region20
      $region19: #{resnet_block_forward.3} parent=11 // pred_region
        _
      $region20: #{resnet_block_forward.3} parent=11 // pred_fallthru
        _
      // Predicated region
      $region21: #{resnet_block_forward.3} parent=11 // pred_check
        %p215 = pneg %p113
      $region22: #{resnet_block_forward.3} parent=11 // pred_check_branch
        %217 = sbr.rel (%p215) target = $region24
      $region23: #{resnet_block_forward.3} parent=11 // pred_region
        _
      $region24: #{resnet_block_forward.3} parent=11 // pred_fallthru
        _
      // Predicated region
      $region25: #{resnet_block_forward.3} parent=11 // pred_check
        %p218 = pneg %p134
      $region26: #{resnet_block_forward.3} parent=11 // pred_check_branch
        %220 = sbr.rel (%p218) target = $region28
      $region27: #{resnet_block_forward.3} parent=11 // pred_region
        _
      $region28: #{resnet_block_forward.3} parent=11 // pred_fallthru
        _
    $region12: #{resnet_block_forward.3} parent=5 // pred_fallthru
      _
    %p221 = scmp.lt.s32.totalorder %s12, 4
    // Predicated region
    $region29: #{resnet_block_forward.3} parent=5 // pred_check
      %p222 = pneg %p221
    $region30: #{resnet_block_forward.3} parent=5 // pred_check_branch
      %224 = sbr.rel (%p222) target = $region32
    $region31: #{resnet_block_forward.3} parent=5 // pred_region
      // Predicated region
      $region33: #{resnet_block_forward.3} parent=31 // pred_check
        %p225 = pneg %p44
      $region34: #{resnet_block_forward.3} parent=31 // pred_check_branch
        %227 = sbr.rel (%p225) target = $region36
      $region35: #{resnet_block_forward.3} parent=31 // pred_region
        %p228 = scmp.lt.s32.totalorder %s19, 1
        %s229 = scalar_select %p228, %s19, 1
        %s230 = smul.addr %s229, 54
        %s231 = smul.addr %s230, 4
        %s232 = scalar_lea.vmem %s0, %s231
      $region36: #{resnet_block_forward.3} parent=31 // pred_fallthru
        _
      // Predicated region
      $region37: #{resnet_block_forward.3} parent=31 // pred_check
        %p233 = pneg %p158
      $region38: #{resnet_block_forward.3} parent=31 // pred_check_branch
        %235 = sbr.rel (%p233) target = $region40
      $region39: #{resnet_block_forward.3} parent=31 // pred_region
        %s236 = smul.u32 %s19, 2
        %s237 = sadd.s32 %s236, %s20
        %p238 = scmp.lt.s32.totalorder %s237, 3
        %s239 = scalar_select %p238, %s237, 3
        %s240 = smul.addr %s239, 16
        %s241 = smul.addr %s240, 8
        %s242 = scalar_lea.vmem %s5, %s241
        %s243 = smul.u32 %s19, 2
        %s244 = sadd.s32 %s243, %s20
      $region40: #{resnet_block_forward.3} parent=31 // pred_fallthru
        _
    $region32: #{resnet_block_forward.3} parent=5 // pred_fallthru
      _
    %p245 = scmp.le.s32.totalorder 1, %s12
    %p246 = scmp.lt.s32.totalorder %s12, 5
    %p247 = pnand %p245, %p246
    %p248 = pneg %p247
    // Predicated region
    $region41: #{resnet_block_forward.3} parent=5 // pred_check
      _
    $region42: #{resnet_block_forward.3} parent=5 // pred_check_branch
      %250 = sbr.rel (%p247) target = $region44
    $region43: #{resnet_block_forward.3} parent=5 // pred_region
      %s251 = ssub.s32 %s12, 1
      %p252 = scmp.lt.s32.totalorder %s21, 1
      %s253 = scalar_select %p252, %s21, 1
      %s254 = smul.addr %s253, 54
      %s255 = smul.addr %s254, 4
      %s256 = scalar_lea.vmem %s0, %s255
      %p257 = pneg %p50
      %p258 = pneg %p47
      %p259 = pneg %p71
      %p260 = pneg %p68
      %p261 = pneg %p92
      %p262 = pneg %p89
      %p263 = pneg %p113
      %p264 = pneg %p110
      %p265 = pneg %p134
      %p266 = pneg %p131
      %s267 = smul.u32 %s21, 2
      %s268 = sadd.s32 %s267, %s22
      %p269 = scmp.lt.s32.totalorder %s268, 3
      %s270 = scalar_select %p269, %s268, 3
      %s271 = smul.addr %s270, 16
      %s272 = smul.addr %s271, 8
      %s273 = scalar_lea.vmem %s5, %s272
      %p274 = pneg %p164
      %p275 = pneg %p161
      %p276 = pneg %p194
      %p277 = pneg %p191
      %s278 = smul.u32 %s21, 2
      %s279 = sadd.s32 %s278, %s22
      %p280 = scmp.lt.s32.totalorder %s279, 3
      %s281 = scalar_select %p280, %s279, 3
      %s282 = smul.addr %s281, 16
      %s283 = smul.addr %s282, 8
      %s284 = scalar_lea.vmem %s6, %s283
      %p285 = scmp.lt.s32.totalorder %s21, 1
      %s286 = scalar_select %p285, %s21, 1
      %s287 = smul.addr %s286, 54
      %s288 = smul.addr %s287, 4
      %s289 = scalar_lea.vmem %s0, %s288
      %s290 = smul.u32 %s21, 2
      %s291 = sadd.s32 %s290, %s22
      %p292 = scmp.lt.s32.totalorder %s291, 3
      %s293 = scalar_select %p292, %s291, 3
      %s294 = smul.addr %s293, 16
      %s295 = smul.addr %s294, 8
      %s296 = scalar_lea.vmem %s5, %s295
      %s297 = smul.u32 %s21, 2
      %s298 = sadd.s32 %s297, %s22
      %s299 = smul.u32 %s21, 2
      %s300 = sadd.s32 %s299, %s22
      %p301 = scmp.lt.s32.totalorder %s300, 3
      %s302 = scalar_select %p301, %s300, 3
      %s303 = smul.addr %s302, 16
      %s304 = smul.addr %s303, 8
      %s305 = scalar_lea.vmem %s6, %s304
      %s306 = smul.u32 %s21, 2
      %s307 = sadd.s32 %s306, %s22
      %s309 = smul.u32 %s22, 8
      %s310 = smul.u32 %s309, 3
      %s311 = smul.addr %s310, 4
      %s312 = scalar_lea.vmem %s289, %s311
      %v313 = vld [vmem:[%s312] sm:$0xf]
      %v314 = vld [vmem:[%s312 + $0x4] sm:$0xf]
      %v315 = vld [vmem:[%s312 + $0x8] sm:$0x1]
      %v316 = vld [vmem:[%s312 + $0xc] sm:$0xf]
      %v317 = vld [vmem:[%s312 + $0x10] sm:$0xf]
      %v318 = vld [vmem:[%s312 + $0x14] sm:$0x1]
      %v319 = vld [vmem:[%s312 + $0x18] sm:$0xf]
      %v320 = vld [vmem:[%s312 + $0x1c] sm:$0xf]
      %v321 = vld [vmem:[%s312 + $0x20] sm:$0x1]
      %v322 = vld [vmem:[%s312 + $0x24] sm:$0xf]
      %v323 = vld [vmem:[%s312 + $0x28] sm:$0xf]
      %v324 = vld [vmem:[%s312 + $0x2c] sm:$0x1]
      %v325 = vld [vmem:[%s312 + $0x30] sm:$0xf]
      %v326 = vld [vmem:[%s312 + $0x34] sm:$0xf]
      %v327 = vld [vmem:[%s312 + $0x38] sm:$0x1]
      %v328 = vld [vmem:[%s312 + $0x3c] sm:$0xf]
      %v329 = vld [vmem:[%s312 + $0x40] sm:$0xf]
      %v330 = vld [vmem:[%s312 + $0x44] sm:$0x1]
      %v331 = vld [vmem:[%s312 + $0x48] sm:$0xf]
      %v332 = vld [vmem:[%s312 + $0x4c] sm:$0xf]
      %v333 = vld [vmem:[%s312 + $0x50] sm:$0x1]
      %v334 = vld [vmem:[%s312 + $0x54] sm:$0xf]
      %v335 = vld [vmem:[%s312 + $0x58] sm:$0xf]
      %v336 = vld [vmem:[%s312 + $0x5c] sm:$0x1]
      %v337 = vld [vmem:[%s312 + $0x60] sm:$0xf]
      %v338 = vld [vmem:[%s312 + $0x64] sm:$0xf]
      %v339 = vld [vmem:[%s312 + $0x68] sm:$0x1]
      %v340 = vld [vmem:[%s312 + $0x6c] sm:$0xf]
      %v341 = vld [vmem:[%s312 + $0x70] sm:$0xf]
      %v342 = vld [vmem:[%s312 + $0x74] sm:$0x1]
      %v343 = vunpack.c.l.bf16 %v313
      %v344 = vunpack.c.l.bf16 %v314
      %v345 = vunpack.c.l.bf16 %v315
      %v346 = vunpack.c.l.bf16 %v316
      %v347 = vunpack.c.l.bf16 %v317
      %v348 = vunpack.c.l.bf16 %v318
      %v349 = vunpack.c.l.bf16 %v319
      %v350 = vunpack.c.l.bf16 %v320
      %v351 = vunpack.c.l.bf16 %v321
      %v352 = vunpack.c.l.bf16 %v322
      %v353 = vunpack.c.l.bf16 %v323
      %v354 = vunpack.c.l.bf16 %v324
      %v355 = vunpack.c.l.bf16 %v325
      %v356 = vunpack.c.l.bf16 %v326
      %v357 = vunpack.c.l.bf16 %v327
      %v358 = vunpack.c.l.bf16 %v328
      %v359 = vunpack.c.l.bf16 %v329
      %v360 = vunpack.c.l.bf16 %v330
      %v361 = vunpack.c.l.bf16 %v331
      %v362 = vunpack.c.l.bf16 %v332
      %v363 = vunpack.c.l.bf16 %v333
      %v364 = vunpack.c.l.bf16 %v334
      %v365 = vunpack.c.l.bf16 %v335
      %v366 = vunpack.c.l.bf16 %v336
      %v367 = vunpack.c.l.bf16 %v337
      %v368 = vunpack.c.l.bf16 %v338
      %v369 = vunpack.c.l.bf16 %v339
      %v370 = vunpack.c.l.bf16 %v340
      %v371 = vunpack.c.l.bf16 %v341
      %v372 = vunpack.c.l.bf16 %v342
      %v373 = vld [vmem:[%s2] sm:$0x1]
      %v375 = vlaneseq
      %v376 = vshrl.u32 %v375, 7
      %v377 = vsub.s32 0, %v376
      %v378 = vrot.slane %v373, %v377
      %v380 = vmul.f32 %v343, %v378
      %v381 = vmul.f32 %v344, %v378
      %v382 = vmul.f32 %v345, %v378
      %v383 = vmul.f32 %v346, %v378
      %v384 = vmul.f32 %v347, %v378
      %v385 = vmul.f32 %v348, %v378
      %v386 = vmul.f32 %v349, %v378
      %v387 = vmul.f32 %v350, %v378
      %v388 = vmul.f32 %v351, %v378
      %v389 = vmul.f32 %v352, %v378
      %v390 = vmul.f32 %v353, %v378
      %v391 = vmul.f32 %v354, %v378
      %v392 = vmul.f32 %v355, %v378
      %v393 = vmul.f32 %v356, %v378
      %v394 = vmul.f32 %v357, %v378
      %v395 = vmul.f32 %v358, %v378
      %v396 = vmul.f32 %v359, %v378
      %v397 = vmul.f32 %v360, %v378
      %v398 = vmul.f32 %v361, %v378
      %v399 = vmul.f32 %v362, %v378
      %v400 = vmul.f32 %v363, %v378
      %v401 = vmul.f32 %v364, %v378
      %v402 = vmul.f32 %v365, %v378
      %v403 = vmul.f32 %v366, %v378
      %v404 = vmul.f32 %v367, %v378
      %v405 = vmul.f32 %v368, %v378
      %v406 = vmul.f32 %v369, %v378
      %v407 = vmul.f32 %v370, %v378
      %v408 = vmul.f32 %v371, %v378
      %v409 = vmul.f32 %v372, %v378
      %v410 = vld [vmem:[%s3] sm:$0x1]
      %v412 = vlaneseq
      %v413 = vshrl.u32 %v412, 7
      %v414 = vsub.s32 0, %v413
      %v415 = vrot.slane %v410, %v414
      %v417 = vadd.f32 %v380, %v415
      %v418 = vadd.f32 %v381, %v415
      %v419 = vadd.f32 %v382, %v415
      %v420 = vadd.f32 %v383, %v415
      %v421 = vadd.f32 %v384, %v415
      %v422 = vadd.f32 %v385, %v415
      %v423 = vadd.f32 %v386, %v415
      %v424 = vadd.f32 %v387, %v415
      %v425 = vadd.f32 %v388, %v415
      %v426 = vadd.f32 %v389, %v415
      %v427 = vadd.f32 %v390, %v415
      %v428 = vadd.f32 %v391, %v415
      %v429 = vadd.f32 %v392, %v415
      %v430 = vadd.f32 %v393, %v415
      %v431 = vadd.f32 %v394, %v415
      %v432 = vadd.f32 %v395, %v415
      %v433 = vadd.f32 %v396, %v415
      %v434 = vadd.f32 %v397, %v415
      %v435 = vadd.f32 %v398, %v415
      %v436 = vadd.f32 %v399, %v415
      %v437 = vadd.f32 %v400, %v415
      %v438 = vadd.f32 %v401, %v415
      %v439 = vadd.f32 %v402, %v415
      %v440 = vadd.f32 %v403, %v415
      %v441 = vadd.f32 %v404, %v415
      %v442 = vadd.f32 %v405, %v415
      %v443 = vadd.f32 %v406, %v415
      %v444 = vadd.f32 %v407, %v415
      %v445 = vadd.f32 %v408, %v415
      %v446 = vadd.f32 %v409, %v415
      %v447 = vmax.f32 %v417, 0.0
      %v448 = vmax.f32 %v418, 0.0
      %v449 = vmax.f32 %v419, 0.0
      %v450 = vmax.f32 %v420, 0.0
      %v451 = vmax.f32 %v421, 0.0
      %v452 = vmax.f32 %v422, 0.0
      %v453 = vmax.f32 %v423, 0.0
      %v454 = vmax.f32 %v424, 0.0
      %v455 = vmax.f32 %v425, 0.0
      %v456 = vmax.f32 %v426, 0.0
      %v457 = vmax.f32 %v427, 0.0
      %v458 = vmax.f32 %v428, 0.0
      %v459 = vmax.f32 %v429, 0.0
      %v460 = vmax.f32 %v430, 0.0
      %v461 = vmax.f32 %v431, 0.0
      %v462 = vmax.f32 %v432, 0.0
      %v463 = vmax.f32 %v433, 0.0
      %v464 = vmax.f32 %v434, 0.0
      %v465 = vmax.f32 %v435, 0.0
      %v466 = vmax.f32 %v436, 0.0
      %v467 = vmax.f32 %v437, 0.0
      %v468 = vmax.f32 %v438, 0.0
      %v469 = vmax.f32 %v439, 0.0
      %v470 = vmax.f32 %v440, 0.0
      %v471 = vmax.f32 %v441, 0.0
      %v472 = vmax.f32 %v442, 0.0
      %v473 = vmax.f32 %v443, 0.0
      %v474 = vmax.f32 %v444, 0.0
      %v475 = vmax.f32 %v445, 0.0
      %v476 = vmax.f32 %v446, 0.0
      %v477 = vstv %s309
      %v478 = vadd.s32 %v477, 1
      %v479 = vadd.s32 %v477, 2
      %v480 = vadd.s32 %v477, 3
      %v481 = vadd.s32 %v477, 4
      %v482 = vadd.s32 %v477, 5
      %v483 = vadd.s32 %v477, 6
      %v484 = vadd.s32 %v477, 7
      %v485 = vadd.s32 %v477, 8
      %v486 = vadd.s32 %v477, 9
      %v487 = vlaneseq
      %v488 = vshrl.u32 %v487, 7
      %v489 = vadd.s32 %v488, 8
      %v490 = vadd.s32 %v488, 16
      %vm491 = vcmp.ge.s32.totalorder %v477, 1
      %vm492 = vcmp.ge.s32.totalorder %v478, 1
      %vm493 = vcmp.ge.s32.totalorder %v479, 1
      %vm494 = vcmp.ge.s32.totalorder %v480, 1
      %vm495 = vcmp.ge.s32.totalorder %v481, 1
      %vm496 = vcmp.ge.s32.totalorder %v482, 1
      %vm497 = vcmp.ge.s32.totalorder %v483, 1
      %vm498 = vcmp.ge.s32.totalorder %v484, 1
      %vm499 = vcmp.ge.s32.totalorder %v485, 1
      %vm500 = vcmp.ge.s32.totalorder %v486, 1
      %vm501 = vcmp.le.s32.totalorder %v477, 16
      %vm502 = vcmp.le.s32.totalorder %v478, 16
      %vm503 = vcmp.le.s32.totalorder %v479, 16
      %vm504 = vcmp.le.s32.totalorder %v480, 16
      %vm505 = vcmp.le.s32.totalorder %v481, 16
      %vm506 = vcmp.le.s32.totalorder %v482, 16
      %vm507 = vcmp.le.s32.totalorder %v483, 16
      %vm508 = vcmp.le.s32.totalorder %v484, 16
      %vm509 = vcmp.le.s32.totalorder %v485, 16
      %vm510 = vcmp.le.s32.totalorder %v486, 16
      %vm511 = vmand %vm491, %vm501
      %vm512 = vmand %vm492, %vm502
      %vm513 = vmand %vm493, %vm503
      %vm514 = vmand %vm494, %vm504
      %vm515 = vmand %vm495, %vm505
      %vm516 = vmand %vm496, %vm506
      %vm517 = vmand %vm497, %vm507
      %vm518 = vmand %vm498, %vm508
      %vm519 = vmand %vm499, %vm509
      %vm520 = vmand %vm500, %vm510
      %vm521 = vcmp.ge.s32.totalorder %v488, 1
      %vm522 = vcmp.ge.s32.totalorder %v489, 1
      %vm523 = vcmp.ge.s32.totalorder %v490, 1
      %vm524 = vmand %vm511, %vm521
      %vm525 = vmand %vm511, %vm522
      %vm526 = vmand %vm511, %vm523
      %vm527 = vmand %vm512, %vm521
      %vm528 = vmand %vm512, %vm522
      %vm529 = vmand %vm512, %vm523
      %vm530 = vmand %vm513, %vm521
      %vm531 = vmand %vm513, %vm522
      %vm532 = vmand %vm513, %vm523
      %vm533 = vmand %vm514, %vm521
      %vm534 = vmand %vm514, %vm522
      %vm535 = vmand %vm514, %vm523
      %vm536 = vmand %vm515, %vm521
      %vm537 = vmand %vm515, %vm522
      %vm538 = vmand %vm515, %vm523
      %vm539 = vmand %vm516, %vm521
      %vm540 = vmand %vm516, %vm522
      %vm541 = vmand %vm516, %vm523
      %vm542 = vmand %vm517, %vm521
      %vm543 = vmand %vm517, %vm522
      %vm544 = vmand %vm517, %vm523
      %vm545 = vmand %vm518, %vm521
      %vm546 = vmand %vm518, %vm522
      %vm547 = vmand %vm518, %vm523
      %vm548 = vmand %vm519, %vm521
      %vm549 = vmand %vm519, %vm522
      %vm550 = vmand %vm519, %vm523
      %vm551 = vmand %vm520, %vm521
      %vm552 = vmand %vm520, %vm522
      %vm553 = vmand %vm520, %vm523
      %vm554 = vcmp.le.s32.totalorder %v488, 16
      %vm555 = vcmp.le.s32.totalorder %v489, 16
      %vm556 = vcmp.le.s32.totalorder %v490, 16
      %vm557 = vmand %vm524, %vm554
      %vm558 = vmand %vm525, %vm555
      %vm559 = vmand %vm526, %vm556
      %vm560 = vmand %vm527, %vm554
      %vm561 = vmand %vm528, %vm555
      %vm562 = vmand %vm529, %vm556
      %vm563 = vmand %vm530, %vm554
      %vm564 = vmand %vm531, %vm555
      %vm565 = vmand %vm532, %vm556
      %vm566 = vmand %vm533, %vm554
      %vm567 = vmand %vm534, %vm555
      %vm568 = vmand %vm535, %vm556
      %vm569 = vmand %vm536, %vm554
      %vm570 = vmand %vm537, %vm555
      %vm571 = vmand %vm538, %vm556
      %vm572 = vmand %vm539, %vm554
      %vm573 = vmand %vm540, %vm555
      %vm574 = vmand %vm541, %vm556
      %vm575 = vmand %vm542, %vm554
      %vm576 = vmand %vm543, %vm555
      %vm577 = vmand %vm544, %vm556
      %vm578 = vmand %vm545, %vm554
      %vm579 = vmand %vm546, %vm555
      %vm580 = vmand %vm547, %vm556
      %vm581 = vmand %vm548, %vm554
      %vm582 = vmand %vm549, %vm555
      %vm583 = vmand %vm550, %vm556
      %vm584 = vmand %vm551, %vm554
      %vm585 = vmand %vm552, %vm555
      %vm586 = vmand %vm553, %vm556
      %v587 = vsel %vm557, %v447, 0.0
      %v588 = vsel %vm558, %v448, 0.0
      %v589 = vsel %vm559, %v449, 0.0
      %v590 = vsel %vm560, %v450, 0.0
      %v591 = vsel %vm561, %v451, 0.0
      %v592 = vsel %vm562, %v452, 0.0
      %v593 = vsel %vm563, %v453, 0.0
      %v594 = vsel %vm564, %v454, 0.0
      %v595 = vsel %vm565, %v455, 0.0
      %v596 = vsel %vm566, %v456, 0.0
      %v597 = vsel %vm567, %v457, 0.0
      %v598 = vsel %vm568, %v458, 0.0
      %v599 = vsel %vm569, %v459, 0.0
      %v600 = vsel %vm570, %v460, 0.0
      %v601 = vsel %vm571, %v461, 0.0
      %v602 = vsel %vm572, %v462, 0.0
      %v603 = vsel %vm573, %v463, 0.0
      %v604 = vsel %vm574, %v464, 0.0
      %v605 = vsel %vm575, %v465, 0.0
      %v606 = vsel %vm576, %v466, 0.0
      %v607 = vsel %vm577, %v467, 0.0
      %v608 = vsel %vm578, %v468, 0.0
      %v609 = vsel %vm579, %v469, 0.0
      %v610 = vsel %vm580, %v470, 0.0
      %v611 = vsel %vm581, %v471, 0.0
      %v612 = vsel %vm582, %v472, 0.0
      %v613 = vsel %vm583, %v473, 0.0
      %v614 = vsel %vm584, %v474, 0.0
      %v615 = vsel %vm585, %v475, 0.0
      %v616 = vsel %vm586, %v476, 0.0
      %v617 = vpack.c.bf16 %v588, %v587
      %v618 = vpack.c.bf16 %v589, %v589
      %v619 = vpack.c.bf16 %v591, %v590
      %v620 = vpack.c.bf16 %v592, %v592
      %v621 = vpack.c.bf16 %v594, %v593
      %v622 = vpack.c.bf16 %v595, %v595
      %v623 = vpack.c.bf16 %v597, %v596
      %v624 = vpack.c.bf16 %v598, %v598
      %v625 = vpack.c.bf16 %v600, %v599
      %v626 = vpack.c.bf16 %v601, %v601
      %v627 = vpack.c.bf16 %v603, %v602
      %v628 = vpack.c.bf16 %v604, %v604
      %v629 = vpack.c.bf16 %v606, %v605
      %v630 = vpack.c.bf16 %v607, %v607
      %v631 = vpack.c.bf16 %v609, %v608
      %v632 = vpack.c.bf16 %v610, %v610
      %v633 = vpack.c.bf16 %v612, %v611
      %v634 = vpack.c.bf16 %v613, %v613
      %v635 = vpack.c.bf16 %v615, %v614
      %v636 = vpack.c.bf16 %v616, %v616
      %v637 = vld [vmem:[%s1] sm:$0xf]
      %v638 = vld [vmem:[%s1 + $0x4] sm:$0xf]
      %v639 = vld [vmem:[%s1 + $0x8] sm:$0xf]
      %v640 = vld [vmem:[%s1 + $0xc] sm:$0xf]
      %v641 = vld [vmem:[%s1 + $0x10] sm:$0xf]
      %v642 = vld [vmem:[%s1 + $0x14] sm:$0xf]
      %v643 = vld [vmem:[%s1 + $0x18] sm:$0xf]
      %v644 = vld [vmem:[%s1 + $0x1c] sm:$0xf]
      %v645 = vld [vmem:[%s1 + $0x20] sm:$0xf]
      %v646 = vld [vmem:[%s1 + $0x24] sm:$0xf]
      %v647 = vld [vmem:[%s1 + $0x28] sm:$0xf]
      %v648 = vld [vmem:[%s1 + $0x2c] sm:$0xf]
      %v649 = vld [vmem:[%s1 + $0x30] sm:$0xf]
      %v650 = vld [vmem:[%s1 + $0x34] sm:$0xf]
      %v651 = vld [vmem:[%s1 + $0x38] sm:$0xf]
      %v652 = vld [vmem:[%s1 + $0x3c] sm:$0xf]
      %vm653 = vsmask.f32 7424
      %v655 = vshrl.u32 %v617, 16
      %v657 = vshll.u32 %v617, 16
      %v659 = vrot.slane %v657, 1
      %v660 = vor.u32 %v655, %v659
      %v662 = vshll.u32 %v618, 16
      %v664 = vrot.slane %v662, 1
      %v665 = vsel %vm653, %v660, %v664
      %v667 = vshrl.u32 %v619, 16
      %v669 = vshll.u32 %v619, 16
      %v671 = vrot.slane %v669, 1
      %v672 = vor.u32 %v667, %v671
      %v674 = vshll.u32 %v620, 16
      %v676 = vrot.slane %v674, 1
      %v677 = vsel %vm653, %v672, %v676
      %v679 = vshrl.u32 %v621, 16
      %v681 = vshll.u32 %v621, 16
      %v683 = vrot.slane %v681, 1
      %v684 = vor.u32 %v679, %v683
      %v686 = vshll.u32 %v622, 16
      %v688 = vrot.slane %v686, 1
      %v689 = vsel %vm653, %v684, %v688
      %v691 = vshrl.u32 %v623, 16
      %v693 = vshll.u32 %v623, 16
      %v695 = vrot.slane %v693, 1
      %v696 = vor.u32 %v691, %v695
      %v698 = vshll.u32 %v624, 16
      %v700 = vrot.slane %v698, 1
      %v701 = vsel %vm653, %v696, %v700
      %v703 = vshrl.u32 %v625, 16
      %v705 = vshll.u32 %v625, 16
      %v707 = vrot.slane %v705, 1
      %v708 = vor.u32 %v703, %v707
      %v710 = vshll.u32 %v626, 16
      %v712 = vrot.slane %v710, 1
      %v713 = vsel %vm653, %v708, %v712
      %v715 = vshrl.u32 %v627, 16
      %v717 = vshll.u32 %v627, 16
      %v719 = vrot.slane %v717, 1
      %v720 = vor.u32 %v715, %v719
      %v722 = vshll.u32 %v628, 16
      %v724 = vrot.slane %v722, 1
      %v725 = vsel %vm653, %v720, %v724
      %v727 = vshrl.u32 %v629, 16
      %v729 = vshll.u32 %v629, 16
      %v731 = vrot.slane %v729, 1
      %v732 = vor.u32 %v727, %v731
      %v734 = vshll.u32 %v630, 16
      %v736 = vrot.slane %v734, 1
      %v737 = vsel %vm653, %v732, %v736
      %v739 = vshrl.u32 %v631, 16
      %v741 = vshll.u32 %v631, 16
      %v743 = vrot.slane %v741, 1
      %v744 = vor.u32 %v739, %v743
      %v746 = vshll.u32 %v632, 16
      %v748 = vrot.slane %v746, 1
      %v749 = vsel %vm653, %v744, %v748
      %s758 = scalar_lea.vmem %s1, 64
      %v759 = vld [vmem:[%s758] sm:$0xf]
      %v760 = vld [vmem:[%s758 + $0x4] sm:$0xf]
      %v761 = vld [vmem:[%s758 + $0x8] sm:$0xf]
      %v762 = vld [vmem:[%s758 + $0xc] sm:$0xf]
      %v763 = vld [vmem:[%s758 + $0x10] sm:$0xf]
      %v764 = vld [vmem:[%s758 + $0x14] sm:$0xf]
      %v765 = vld [vmem:[%s758 + $0x18] sm:$0xf]
      %v766 = vld [vmem:[%s758 + $0x1c] sm:$0xf]
      %v767 = vld [vmem:[%s758 + $0x20] sm:$0xf]
      %v768 = vld [vmem:[%s758 + $0x24] sm:$0xf]
      %v769 = vld [vmem:[%s758 + $0x28] sm:$0xf]
      %v770 = vld [vmem:[%s758 + $0x2c] sm:$0xf]
      %v771 = vld [vmem:[%s758 + $0x30] sm:$0xf]
      %v772 = vld [vmem:[%s758 + $0x34] sm:$0xf]
      %v773 = vld [vmem:[%s758 + $0x38] sm:$0xf]
      %v774 = vld [vmem:[%s758 + $0x3c] sm:$0xf]
      %v791 = vunpack.c.l.b16 %v759
      %v792 = vunpack.c.l.b16 %v760
      %v793 = vunpack.c.l.b16 %v761
      %v794 = vunpack.c.l.b16 %v762
      %v795 = vunpack.c.l.b16 %v763
      %v796 = vunpack.c.l.b16 %v764
      %v797 = vunpack.c.l.b16 %v765
      %v798 = vunpack.c.l.b16 %v766
      %v799 = vunpack.c.l.b16 %v767
      %v800 = vunpack.c.l.b16 %v768
      %v801 = vunpack.c.l.b16 %v769
      %v802 = vunpack.c.l.b16 %v770
      %v803 = vunpack.c.l.b16 %v771
      %v804 = vunpack.c.l.b16 %v772
      %v805 = vunpack.c.l.b16 %v773
      %v806 = vunpack.c.l.b16 %v774
      %v807 = vpack.c.b16 %v792, %v791
      %v808 = vpack.c.b16 %v794, %v793
      %v809 = vpack.c.b16 %v796, %v795
      %v810 = vpack.c.b16 %v798, %v797
      %v811 = vpack.c.b16 %v800, %v799
      %v812 = vpack.c.b16 %v802, %v801
      %v813 = vpack.c.b16 %v804, %v803
      %v814 = vpack.c.b16 %v806, %v805
      %823 = vmatprep.subr.bf16.mxu0 0
      %824 = vmatpush1.bf16.msra.mxu0 %v807
      %825 = vmatprep.subr.bf16.mxu0 0
      %826 = vmatpush1.bf16.msra.mxu0 %v808
      %827 = vmatprep.subr.bf16.mxu0 0
      %828 = vmatpush1.bf16.msra.mxu0 %v809
      %829 = vmatprep.subr.bf16.mxu0 0
      %830 = vmatpush1.bf16.msra.mxu0 %v810
      %831 = vmatprep.subr.bf16.mxu0 0
      %832 = vmatpush1.bf16.msra.mxu0 %v811
      %833 = vmatprep.subr.bf16.mxu0 0
      %834 = vmatpush1.bf16.msra.mxu0 %v812
      %835 = vmatprep.subr.bf16.mxu0 0
      %836 = vmatpush1.bf16.msra.mxu0 %v813
      %837 = vmatprep.subr.bf16.mxu0 0
      %838 = vmatpush1.bf16.msra.mxu0 %v814
      %839 = vmatprep.subr.bf16.mxu0 0
      %840 = vmatpush1.bf16.msra.mxu0 0
      %841 = vmatprep.subr.bf16.mxu0 0
      %842 = vmatpush1.bf16.msra.mxu0 0
      %843 = vmatprep.subr.bf16.mxu0 0
      %844 = vmatpush1.bf16.msra.mxu0 0
      %845 = vmatprep.subr.bf16.mxu0 0
      %846 = vmatpush1.bf16.msra.mxu0 0
      %847 = vmatprep.subr.bf16.mxu0 0
      %848 = vmatpush1.bf16.msra.mxu0 0
      %849 = vmatprep.subr.bf16.mxu0 0
      %850 = vmatpush1.bf16.msra.mxu0 0
      %851 = vmatprep.subr.bf16.mxu0 0
      %852 = vmatpush1.bf16.msra.mxu0 0
      %853 = vmatprep.subr.bf16.mxu0 0
      %854 = vmatpush1.bf16.msra.mxu0 0
      %855 = vmatprep.mubr.bf16.mxu0 0
      %856 = vmatmul.mubr.bf16.gmra.mrb[0].mxu0 %v665
      %v857 = vpop.f32.mrb[0].mxu0
      %v858 = vadd.f32 0.0, %v857
      %v859 = vpop.f32.mrb[0].mxu0
      %v860 = vpop.f32.mrb[0].mxu0
      %v861 = vadd.f32 0.0, %v860
      %v862 = vpop.f32.mrb[0].mxu0
      %863 = vmatprep.mubr.bf16.mxu0 0
      %864 = vmatmul.mubr.bf16.gmra.mrb[0].mxu0 %v677
      %v865 = vpop.f32.mrb[0].mxu0
      %v866 = vadd.f32 0.0, %v865
      %v867 = vpop.f32.mrb[0].mxu0
      %v868 = vpop.f32.mrb[0].mxu0
      %v869 = vadd.f32 0.0, %v868
      %v870 = vpop.f32.mrb[0].mxu0
      %871 = vmatprep.mubr.bf16.mxu0 0
      %872 = vmatmul.mubr.bf16.gmra.mrb[0].mxu0 %v689
      %v873 = vpop.f32.mrb[0].mxu0
      %v874 = vadd.f32 0.0, %v873
      %v875 = vpop.f32.mrb[0].mxu0
      %v876 = vpop.f32.mrb[0].mxu0
      %v877 = vadd.f32 0.0, %v876
      %v878 = vpop.f32.mrb[0].mxu0
      %879 = vmatprep.mubr.bf16.mxu0 0
      %880 = vmatmul.mubr.bf16.gmra.mrb[0].mxu0 %v701
      %v881 = vpop.f32.mrb[0].mxu0
      %v882 = vadd.f32 0.0, %v881
      %v883 = vpop.f32.mrb[0].mxu0
      %v884 = vpop.f32.mrb[0].mxu0
      %v885 = vadd.f32 0.0, %v884
      %v886 = vpop.f32.mrb[0].mxu0
      %887 = vmatprep.mubr.bf16.mxu0 0
      %888 = vmatmul.mubr.bf16.gmra.mrb[0].mxu0 %v713
      %v889 = vpop.f32.mrb[0].mxu0
      %v890 = vadd.f32 0.0, %v889
      %v891 = vpop.f32.mrb[0].mxu0
      %v892 = vpop.f32.mrb[0].mxu0
      %v893 = vadd.f32 0.0, %v892
      %v894 = vpop.f32.mrb[0].mxu0
      %895 = vmatprep.mubr.bf16.mxu0 0
      %896 = vmatmul.mubr.bf16.gmra.mrb[0].mxu0 %v725
      %v897 = vpop.f32.mrb[0].mxu0
      %v898 = vadd.f32 0.0, %v897
      %v899 = vpop.f32.mrb[0].mxu0
      %v900 = vpop.f32.mrb[0].mxu0
      %v901 = vadd.f32 0.0, %v900
      %v902 = vpop.f32.mrb[0].mxu0
      %903 = vmatprep.mubr.bf16.mxu0 0
      %904 = vmatmul.mubr.bf16.gmra.mrb[0].mxu0 %v737
      %v905 = vpop.f32.mrb[0].mxu0
      %v906 = vadd.f32 0.0, %v905
      %v907 = vpop.f32.mrb[0].mxu0
      %v908 = vpop.f32.mrb[0].mxu0
      %v909 = vadd.f32 0.0, %v908
      %v910 = vpop.f32.mrb[0].mxu0
      %911 = vmatprep.mubr.bf16.mxu0 0
      %912 = vmatmul.mubr.bf16.gmra.mrb[0].mxu0 %v749
      %v913 = vpop.f32.mrb[0].mxu0
      %v914 = vadd.f32 0.0, %v913
      %v915 = vpop.f32.mrb[0].mxu0
      %v916 = vpop.f32.mrb[0].mxu0
      %v917 = vadd.f32 0.0, %v916
      %v918 = vpop.f32.mrb[0].mxu0
      %919 = vdwg.mxu0
      %v936 = vunpack.c.l.b16 %v637
      %v937 = vunpack.c.l.b16 %v638
      %v938 = vunpack.c.l.b16 %v639
      %v939 = vunpack.c.l.b16 %v640
      %v940 = vunpack.c.l.b16 %v641
      %v941 = vunpack.c.l.b16 %v642
      %v942 = vunpack.c.l.b16 %v643
      %v943 = vunpack.c.l.b16 %v644
      %v944 = vunpack.c.l.b16 %v645
      %v945 = vunpack.c.l.b16 %v646
      %v946 = vunpack.c.l.b16 %v647
      %v947 = vunpack.c.l.b16 %v648
      %v948 = vunpack.c.l.b16 %v649
      %v949 = vunpack.c.l.b16 %v650
      %v950 = vunpack.c.l.b16 %v651
      %v951 = vunpack.c.l.b16 %v652
      %v952 = vpack.c.b16 %v937, %v936
      %v953 = vpack.c.b16 %v939, %v938
      %v954 = vpack.c.b16 %v941, %v940
      %v955 = vpack.c.b16 %v943, %v942
      %v956 = vpack.c.b16 %v945, %v944
      %v957 = vpack.c.b16 %v947, %v946
      %v958 = vpack.c.b16 %v949, %v948
      %v959 = vpack.c.b16 %v951, %v950
      %968 = vmatprep.subr.bf16.mxu0 0
      %969 = vmatpush1.bf16.msra.mxu0 %v952
      %970 = vmatprep.subr.bf16.mxu0 0
      %971 = vmatpush1.bf16.msra.mxu0 %v953
      %972 = vmatprep.subr.bf16.mxu0 0
      %973 = vmatpush1.bf16.msra.mxu0 %v954
      %974 = vmatprep.subr.bf16.mxu0 0
      %975 = vmatpush1.bf16.msra.mxu0 %v955
      %976 = vmatprep.subr.bf16.mxu0 0
      %977 = vmatpush1.bf16.msra.mxu0 %v956
      %978 = vmatprep.subr.bf16.mxu0 0
      %979 = vmatpush1.bf16.msra.mxu0 %v957
      %980 = vmatprep.subr.bf16.mxu0 0
      %981 = vmatpush1.bf16.msra.mxu0 %v958
      %982 = vmatprep.subr.bf16.mxu0 0
      %983 = vmatpush1.bf16.msra.mxu0 %v959
      %984 = vmatprep.subr.bf16.mxu0 0
      %985 = vmatpush1.bf16.msra.mxu0 0
      %986 = vmatprep.subr.bf16.mxu0 0
      %987 = vmatpush1.bf16.msra.mxu0 0
      %988 = vmatprep.subr.bf16.mxu0 0
      %989 = vmatpush1.bf16.msra.mxu0 0
      %990 = vmatprep.subr.bf16.mxu0 0
      %991 = vmatpush1.bf16.msra.mxu0 0
      %992 = vmatprep.subr.bf16.mxu0 0
      %993 = vmatpush1.bf16.msra.mxu0 0
      %994 = vmatprep.subr.bf16.mxu0 0
      %995 = vmatpush1.bf16.msra.mxu0 0
      %996 = vmatprep.subr.bf16.mxu0 0
      %997 = vmatpush1.bf16.msra.mxu0 0
      %998 = vmatprep.subr.bf16.mxu0 0
      %999 = vmatpush1.bf16.msra.mxu0 0
      %1000 = vmatprep.mubr.bf16.mxu0 0
      %1001 = vmatmul.mubr.bf16.gmra.mrb[0].mxu0 %v617
      %v1002 = vpop.f32.mrb[0].mxu0
      %v1003 = vadd.f32 %v858, %v1002
      %v1004 = vpop.f32.mrb[0].mxu0
      %v1005 = vpop.f32.mrb[0].mxu0
      %v1006 = vadd.f32 %v861, %v1005
      %v1007 = vpop.f32.mrb[0].mxu0
      %1008 = vmatprep.mubr.bf16.mxu0 0
      %1009 = vmatmul.mubr.bf16.gmra.mrb[0].mxu0 %v619
      %v1010 = vpop.f32.mrb[0].mxu0
      %v1011 = vadd.f32 %v866, %v1010
      %v1012 = vpop.f32.mrb[0].mxu0
      %v1013 = vpop.f32.mrb[0].mxu0
      %v1014 = vadd.f32 %v869, %v1013
      %v1015 = vpop.f32.mrb[0].mxu0
      %1016 = vmatprep.mubr.bf16.mxu0 0
      %1017 = vmatmul.mubr.bf16.gmra.mrb[0].mxu0 %v621
      %v1018 = vpop.f32.mrb[0].mxu0
      %v1019 = vadd.f32 %v874, %v1018
      %v1020 = vpop.f32.mrb[0].mxu0
      %v1021 = vpop.f32.mrb[0].mxu0
      %v1022 = vadd.f32 %v877, %v1021
      %v1023 = vpop.f32.mrb[0].mxu0
      %1024 = vmatprep.mubr.bf16.mxu0 0
      %1025 = vmatmul.mubr.bf16.gmra.mrb[0].mxu0 %v623
      %v1026 = vpop.f32.mrb[0].mxu0
      %v1027 = vadd.f32 %v882, %v1026
      %v1028 = vpop.f32.mrb[0].mxu0
      %v1029 = vpop.f32.mrb[0].mxu0
      %v1030 = vadd.f32 %v885, %v1029
      %v1031 = vpop.f32.mrb[0].mxu0
      %1032 = vmatprep.mubr.bf16.mxu0 0
      %1033 = vmatmul.mubr.bf16.gmra.mrb[0].mxu0 %v625
      %v1034 = vpop.f32.mrb[0].mxu0
      %v1035 = vadd.f32 %v890, %v1034
      %v1036 = vpop.f32.mrb[0].mxu0
      %v1037 = vpop.f32.mrb[0].mxu0
      %v1038 = vadd.f32 %v893, %v1037
      %v1039 = vpop.f32.mrb[0].mxu0
      %1040 = vmatprep.mubr.bf16.mxu0 0
      %1041 = vmatmul.mubr.bf16.gmra.mrb[0].mxu0 %v627
      %v1042 = vpop.f32.mrb[0].mxu0
      %v1043 = vadd.f32 %v898, %v1042
      %v1044 = vpop.f32.mrb[0].mxu0
      %v1045 = vpop.f32.mrb[0].mxu0
      %v1046 = vadd.f32 %v901, %v1045
      %v1047 = vpop.f32.mrb[0].mxu0
      %1048 = vmatprep.mubr.bf16.mxu0 0
      %1049 = vmatmul.mubr.bf16.gmra.mrb[0].mxu0 %v629
      %v1050 = vpop.f32.mrb[0].mxu0
      %v1051 = vadd.f32 %v906, %v1050
      %v1052 = vpop.f32.mrb[0].mxu0
      %v1053 = vpop.f32.mrb[0].mxu0
      %v1054 = vadd.f32 %v909, %v1053
      %v1055 = vpop.f32.mrb[0].mxu0
      %1056 = vmatprep.mubr.bf16.mxu0 0
      %1057 = vmatmul.mubr.bf16.gmra.mrb[0].mxu0 %v631
      %v1058 = vpop.f32.mrb[0].mxu0
      %v1059 = vadd.f32 %v914, %v1058
      %v1060 = vpop.f32.mrb[0].mxu0
      %v1061 = vpop.f32.mrb[0].mxu0
      %v1062 = vadd.f32 %v917, %v1061
      %v1063 = vpop.f32.mrb[0].mxu0
      %1064 = vdwg.mxu0
      %vm1081 = vcmask 1046528
      %v1082 = vrot.slane %v617, 1
      %v1083 = vrot.slane %v618, 1
      %v1084 = vsel %vm1081, %v1082, %v1083
      %v1085 = vrot.slane %v619, 1
      %v1086 = vrot.slane %v620, 1
      %v1087 = vsel %vm1081, %v1085, %v1086
      %v1088 = vrot.slane %v621, 1
      %v1089 = vrot.slane %v622, 1
      %v1090 = vsel %vm1081, %v1088, %v1089
      %v1091 = vrot.slane %v623, 1
      %v1092 = vrot.slane %v624, 1
      %v1093 = vsel %vm1081, %v1091, %v1092
      %v1094 = vrot.slane %v625, 1
      %v1095 = vrot.slane %v626, 1
      %v1096 = vsel %vm1081, %v1094, %v1095
      %v1097 = vrot.slane %v627, 1
      %v1098 = vrot.slane %v628, 1
      %v1099 = vsel %vm1081, %v1097, %v1098
      %v1100 = vrot.slane %v629, 1
      %v1101 = vrot.slane %v630, 1
      %v1102 = vsel %vm1081, %v1100, %v1101
      %v1103 = vrot.slane %v631, 1
      %v1104 = vrot.slane %v632, 1
      %v1105 = vsel %vm1081, %v1103, %v1104
      %s1114 = scalar_lea.vmem %s1, 128
      %v1115 = vld [vmem:[%s1114] sm:$0xf]
      %v1116 = vld [vmem:[%s1114 + $0x4] sm:$0xf]
      %v1117 = vld [vmem:[%s1114 + $0x8] sm:$0xf]
      %v1118 = vld [vmem:[%s1114 + $0xc] sm:$0xf]
      %v1119 = vld [vmem:[%s1114 + $0x10] sm:$0xf]
      %v1120 = vld [vmem:[%s1114 + $0x14] sm:$0xf]
      %v1121 = vld [vmem:[%s1114 + $0x18] sm:$0xf]
      %v1122 = vld [vmem:[%s1114 + $0x1c] sm:$0xf]
      %v1123 = vld [vmem:[%s1114 + $0x20] sm:$0xf]
      %v1124 = vld [vmem:[%s1114 + $0x24] sm:$0xf]
      %v1125 = vld [vmem:[%s1114 + $0x28] sm:$0xf]
      %v1126 = vld [vmem:[%s1114 + $0x2c] sm:$0xf]
      %v1127 = vld [vmem:[%s1114 + $0x30] sm:$0xf]
      %v1128 = vld [vmem:[%s1114 + $0x34] sm:$0xf]
      %v1129 = vld [vmem:[%s1114 + $0x38] sm:$0xf]
      %v1130 = vld [vmem:[%s1114 + $0x3c] sm:$0xf]
      %v1147 = vunpack.c.l.b16 %v1115
      %v1148 = vunpack.c.l.b16 %v1116
      %v1149 = vunpack.c.l.b16 %v1117
      %v1150 = vunpack.c.l.b16 %v1118
      %v1151 = vunpack.c.l.b16 %v1119
      %v1152 = vunpack.c.l.b16 %v1120
      %v1153 = vunpack.c.l.b16 %v1121
      %v1154 = vunpack.c.l.b16 %v1122
      %v1155 = vunpack.c.l.b16 %v1123
      %v1156 = vunpack.c.l.b16 %v1124
      %v1157 = vunpack.c.l.b16 %v1125
      %v1158 = vunpack.c.l.b16 %v1126
      %v1159 = vunpack.c.l.b16 %v1127
      %v1160 = vunpack.c.l.b16 %v1128
      %v1161 = vunpack.c.l.b16 %v1129
      %v1162 = vunpack.c.l.b16 %v1130
      %v1163 = vpack.c.b16 %v1148, %v1147
      %v1164 = vpack.c.b16 %v1150, %v1149
      %v1165 = vpack.c.b16 %v1152, %v1151
      %v1166 = vpack.c.b16 %v1154, %v1153
      %v1167 = vpack.c.b16 %v1156, %v1155
      %v1168 = vpack.c.b16 %v1158, %v1157
      %v1169 = vpack.c.b16 %v1160, %v1159
      %v1170 = vpack.c.b16 %v1162, %v1161
      %1179 = vmatprep.subr.bf16.mxu0 0
      %1180 = vmatpush1.bf16.msra.mxu0 %v1163
      %1181 = vmatprep.subr.bf16.mxu0 0
      %1182 = vmatpush1.bf16.msra.mxu0 %v1164
      %1183 = vmatprep.subr.bf16.mxu0 0
      %1184 = vmatpush1.bf16.msra.mxu0 %v1165
      %1185 = vmatprep.subr.bf16.mxu0 0
      %1186 = vmatpush1.bf16.msra.mxu0 %v1166
      %1187 = vmatprep.subr.bf16.mxu0 0
      %1188 = vmatpush1.bf16.msra.mxu0 %v1167
      %1189 = vmatprep.subr.bf16.mxu0 0
      %1190 = vmatpush1.bf16.msra.mxu0 %v1168
      %1191 = vmatprep.subr.bf16.mxu0 0
      %1192 = vmatpush1.bf16.msra.mxu0 %v1169
      %1193 = vmatprep.subr.bf16.mxu0 0
      %1194 = vmatpush1.bf16.msra.mxu0 %v1170
      %1195 = vmatprep.subr.bf16.mxu0 0
      %1196 = vmatpush1.bf16.msra.mxu0 0
      %1197 = vmatprep.subr.bf16.mxu0 0
      %1198 = vmatpush1.bf16.msra.mxu0 0
      %1199 = vmatprep.subr.bf16.mxu0 0
      %1200 = vmatpush1.bf16.msra.mxu0 0
      %1201 = vmatprep.subr.bf16.mxu0 0
      %1202 = vmatpush1.bf16.msra.mxu0 0
      %1203 = vmatprep.subr.bf16.mxu0 0
      %1204 = vmatpush1.bf16.msra.mxu0 0
      %1205 = vmatprep.subr.bf16.mxu0 0
      %1206 = vmatpush1.bf16.msra.mxu0 0
      %1207 = vmatprep.subr.bf16.mxu0 0
      %1208 = vmatpush1.bf16.msra.mxu0 0
      %1209 = vmatprep.subr.bf16.mxu0 0
      %1210 = vmatpush1.bf16.msra.mxu0 0
      %1211 = vmatprep.mubr.bf16.mxu0 0
      %1212 = vmatmul.mubr.bf16.gmra.mrb[0].mxu0 %v1084
      %v1213 = vpop.f32.mrb[0].mxu0
      %v1214 = vadd.f32 0.0, %v1213
      %v1215 = vpop.f32.mrb[0].mxu0
      %v1216 = vpop.f32.mrb[0].mxu0
      %v1217 = vadd.f32 0.0, %v1216
      %v1218 = vpop.f32.mrb[0].mxu0
      %1219 = vmatprep.mubr.bf16.mxu0 0
      %1220 = vmatmul.mubr.bf16.gmra.mrb[0].mxu0 %v1087
      %v1221 = vpop.f32.mrb[0].mxu0
      %v1222 = vadd.f32 0.0, %v1221
      %v1223 = vpop.f32.mrb[0].mxu0
      %v1224 = vpop.f32.mrb[0].mxu0
      %v1225 = vadd.f32 0.0, %v1224
      %v1226 = vpop.f32.mrb[0].mxu0
      %1227 = vmatprep.mubr.bf16.mxu0 0
      %1228 = vmatmul.mubr.bf16.gmra.mrb[0].mxu0 %v1090
      %v1229 = vpop.f32.mrb[0].mxu0
      %v1230 = vadd.f32 0.0, %v1229
      %v1231 = vpop.f32.mrb[0].mxu0
      %v1232 = vpop.f32.mrb[0].mxu0
      %v1233 = vadd.f32 0.0, %v1232
      %v1234 = vpop.f32.mrb[0].mxu0
      %1235 = vmatprep.mubr.bf16.mxu0 0
      %1236 = vmatmul.mubr.bf16.gmra.mrb[0].mxu0 %v1093
      %v1237 = vpop.f32.mrb[0].mxu0
      %v1238 = vadd.f32 0.0, %v1237
      %v1239 = vpop.f32.mrb[0].mxu0
      %v1240 = vpop.f32.mrb[0].mxu0
      %v1241 = vadd.f32 0.0, %v1240
      %v1242 = vpop.f32.mrb[0].mxu0
      %1243 = vmatprep.mubr.bf16.mxu0 0
      %1244 = vmatmul.mubr.bf16.gmra.mrb[0].mxu0 %v1096
      %v1245 = vpop.f32.mrb[0].mxu0
      %v1246 = vadd.f32 0.0, %v1245
      %v1247 = vpop.f32.mrb[0].mxu0
      %v1248 = vpop.f32.mrb[0].mxu0
      %v1249 = vadd.f32 0.0, %v1248
      %v1250 = vpop.f32.mrb[0].mxu0
      %1251 = vmatprep.mubr.bf16.mxu0 0
      %1252 = vmatmul.mubr.bf16.gmra.mrb[0].mxu0 %v1099
      %v1253 = vpop.f32.mrb[0].mxu0
      %v1254 = vadd.f32 0.0, %v1253
      %v1255 = vpop.f32.mrb[0].mxu0
      %v1256 = vpop.f32.mrb[0].mxu0
      %v1257 = vadd.f32 0.0, %v1256
      %v1258 = vpop.f32.mrb[0].mxu0
      %1259 = vmatprep.mubr.bf16.mxu0 0
      %1260 = vmatmul.mubr.bf16.gmra.mrb[0].mxu0 %v1102
      %v1261 = vpop.f32.mrb[0].mxu0
      %v1262 = vadd.f32 0.0, %v1261
      %v1263 = vpop.f32.mrb[0].mxu0
      %v1264 = vpop.f32.mrb[0].mxu0
      %v1265 = vadd.f32 0.0, %v1264
      %v1266 = vpop.f32.mrb[0].mxu0
      %1267 = vmatprep.mubr.bf16.mxu0 0
      %1268 = vmatmul.mubr.bf16.gmra.mrb[0].mxu0 %v1105
      %v1269 = vpop.f32.mrb[0].mxu0
      %v1270 = vadd.f32 0.0, %v1269
      %v1271 = vpop.f32.mrb[0].mxu0
      %v1272 = vpop.f32.mrb[0].mxu0
      %v1273 = vadd.f32 0.0, %v1272
      %v1274 = vpop.f32.mrb[0].mxu0
      %1275 = vdwg.mxu0
      %v1276 = vadd.f32 %v1003, %v1214
      %v1277 = vadd.f32 %v1006, %v1217
      %v1278 = vadd.f32 %v1011, %v1222
      %v1279 = vadd.f32 %v1014, %v1225
      %v1280 = vadd.f32 %v1019, %v1230
      %v1281 = vadd.f32 %v1022, %v1233
      %v1282 = vadd.f32 %v1027, %v1238
      %v1283 = vadd.f32 %v1030, %v1241
      %v1284 = vadd.f32 %v1035, %v1246
      %v1285 = vadd.f32 %v1038, %v1249
      %v1286 = vadd.f32 %v1043, %v1254
      %v1287 = vadd.f32 %v1046, %v1257
      %v1288 = vadd.f32 %v1051, %v1262
      %v1289 = vadd.f32 %v1054, %v1265
      %v1290 = vadd.f32 %v1059, %v1270
      %v1291 = vadd.f32 %v1062, %v1273
      %s1292 = scalar_lea.vmem %s1, 192
      %v1293 = vld [vmem:[%s1292] sm:$0xf]
      %v1294 = vld [vmem:[%s1292 + $0x4] sm:$0xf]
      %v1295 = vld [vmem:[%s1292 + $0x8] sm:$0xf]
      %v1296 = vld [vmem:[%s1292 + $0xc] sm:$0xf]
      %v1297 = vld [vmem:[%s1292 + $0x10] sm:$0xf]
      %v1298 = vld [vmem:[%s1292 + $0x14] sm:$0xf]
      %v1299 = vld [vmem:[%s1292 + $0x18] sm:$0xf]
      %v1300 = vld [vmem:[%s1292 + $0x1c] sm:$0xf]
      %v1301 = vld [vmem:[%s1292 + $0x20] sm:$0xf]
      %v1302 = vld [vmem:[%s1292 + $0x24] sm:$0xf]
      %v1303 = vld [vmem:[%s1292 + $0x28] sm:$0xf]
      %v1304 = vld [vmem:[%s1292 + $0x2c] sm:$0xf]
      %v1305 = vld [vmem:[%s1292 + $0x30] sm:$0xf]
      %v1306 = vld [vmem:[%s1292 + $0x34] sm:$0xf]
      %v1307 = vld [vmem:[%s1292 + $0x38] sm:$0xf]
      %v1308 = vld [vmem:[%s1292 + $0x3c] sm:$0xf]
      %v1325 = vunpack.c.l.b16 %v1293
      %v1326 = vunpack.c.l.b16 %v1294
      %v1327 = vunpack.c.l.b16 %v1295
      %v1328 = vunpack.c.l.b16 %v1296
      %v1329 = vunpack.c.l.b16 %v1297
      %v1330 = vunpack.c.l.b16 %v1298
      %v1331 = vunpack.c.l.b16 %v1299
      %v1332 = vunpack.c.l.b16 %v1300
      %v1333 = vunpack.c.l.b16 %v1301
      %v1334 = vunpack.c.l.b16 %v1302
      %v1335 = vunpack.c.l.b16 %v1303
      %v1336 = vunpack.c.l.b16 %v1304
      %v1337 = vunpack.c.l.b16 %v1305
      %v1338 = vunpack.c.l.b16 %v1306
      %v1339 = vunpack.c.l.b16 %v1307
      %v1340 = vunpack.c.l.b16 %v1308
      %v1341 = vpack.c.b16 %v1326, %v1325
      %v1342 = vpack.c.b16 %v1328, %v1327
      %v1343 = vpack.c.b16 %v1330, %v1329
      %v1344 = vpack.c.b16 %v1332, %v1331
      %v1345 = vpack.c.b16 %v1334, %v1333
      %v1346 = vpack.c.b16 %v1336, %v1335
      %v1347 = vpack.c.b16 %v1338, %v1337
      %v1348 = vpack.c.b16 %v1340, %v1339
      %1357 = vmatprep.subr.bf16.mxu0 0
      %1358 = vmatpush1.bf16.msra.mxu0 %v1341
      %1359 = vmatprep.subr.bf16.mxu0 0
      %1360 = vmatpush1.bf16.msra.mxu0 %v1342
      %1361 = vmatprep.subr.bf16.mxu0 0
      %1362 = vmatpush1.bf16.msra.mxu0 %v1343
      %1363 = vmatprep.subr.bf16.mxu0 0
      %1364 = vmatpush1.bf16.msra.mxu0 %v1344
      %1365 = vmatprep.subr.bf16.mxu0 0
      %1366 = vmatpush1.bf16.msra.mxu0 %v1345
      %1367 = vmatprep.subr.bf16.mxu0 0
      %1368 = vmatpush1.bf16.msra.mxu0 %v1346
      %1369 = vmatprep.subr.bf16.mxu0 0
      %1370 = vmatpush1.bf16.msra.mxu0 %v1347
      %1371 = vmatprep.subr.bf16.mxu0 0
      %1372 = vmatpush1.bf16.msra.mxu0 %v1348
      %1373 = vmatprep.subr.bf16.mxu0 0
      %1374 = vmatpush1.bf16.msra.mxu0 0
      %1375 = vmatprep.subr.bf16.mxu0 0
      %1376 = vmatpush1.bf16.msra.mxu0 0
      %1377 = vmatprep.subr.bf16.mxu0 0
      %1378 = vmatpush1.bf16.msra.mxu0 0
      %1379 = vmatprep.subr.bf16.mxu0 0
      %1380 = vmatpush1.bf16.msra.mxu0 0
      %1381 = vmatprep.subr.bf16.mxu0 0
      %1382 = vmatpush1.bf16.msra.mxu0 0
      %1383 = vmatprep.subr.bf16.mxu0 0
      %1384 = vmatpush1.bf16.msra.mxu0 0
      %1385 = vmatprep.subr.bf16.mxu0 0
      %1386 = vmatpush1.bf16.msra.mxu0 0
      %1387 = vmatprep.subr.bf16.mxu0 0
      %1388 = vmatpush1.bf16.msra.mxu0 0
      %1389 = vmatprep.mubr.bf16.mxu0 0
      %1390 = vmatmul.mubr.bf16.gmra.mrb[0].mxu0 %v619
      %v1391 = vpop.f32.mrb[0].mxu0
      %v1392 = vadd.f32 0.0, %v1391
      %v1393 = vpop.f32.mrb[0].mxu0
      %v1394 = vpop.f32.mrb[0].mxu0
      %v1395 = vadd.f32 0.0, %v1394
      %v1396 = vpop.f32.mrb[0].mxu0
      %1397 = vmatprep.mubr.bf16.mxu0 0
      %1398 = vmatmul.mubr.bf16.gmra.mrb[0].mxu0 %v621
      %v1399 = vpop.f32.mrb[0].mxu0
      %v1400 = vadd.f32 0.0, %v1399
      %v1401 = vpop.f32.mrb[0].mxu0
      %v1402 = vpop.f32.mrb[0].mxu0
      %v1403 = vadd.f32 0.0, %v1402
      %v1404 = vpop.f32.mrb[0].mxu0
      %1405 = vmatprep.mubr.bf16.mxu0 0
      %1406 = vmatmul.mubr.bf16.gmra.mrb[0].mxu0 %v623
      %v1407 = vpop.f32.mrb[0].mxu0
      %v1408 = vadd.f32 0.0, %v1407
      %v1409 = vpop.f32.mrb[0].mxu0
      %v1410 = vpop.f32.mrb[0].mxu0
      %v1411 = vadd.f32 0.0, %v1410
      %v1412 = vpop.f32.mrb[0].mxu0
      %1413 = vmatprep.mubr.bf16.mxu0 0
      %1414 = vmatmul.mubr.bf16.gmra.mrb[0].mxu0 %v625
      %v1415 = vpop.f32.mrb[0].mxu0
      %v1416 = vadd.f32 0.0, %v1415
      %v1417 = vpop.f32.mrb[0].mxu0
      %v1418 = vpop.f32.mrb[0].mxu0
      %v1419 = vadd.f32 0.0, %v1418
      %v1420 = vpop.f32.mrb[0].mxu0
      %1421 = vmatprep.mubr.bf16.mxu0 0
      %1422 = vmatmul.mubr.bf16.gmra.mrb[0].mxu0 %v627
      %v1423 = vpop.f32.mrb[0].mxu0
      %v1424 = vadd.f32 0.0, %v1423
      %v1425 = vpop.f32.mrb[0].mxu0
      %v1426 = vpop.f32.mrb[0].mxu0
      %v1427 = vadd.f32 0.0, %v1426
      %v1428 = vpop.f32.mrb[0].mxu0
      %1429 = vmatprep.mubr.bf16.mxu0 0
      %1430 = vmatmul.mubr.bf16.gmra.mrb[0].mxu0 %v629
      %v1431 = vpop.f32.mrb[0].mxu0
      %v1432 = vadd.f32 0.0, %v1431
      %v1433 = vpop.f32.mrb[0].mxu0
      %v1434 = vpop.f32.mrb[0].mxu0
      %v1435 = vadd.f32 0.0, %v1434
      %v1436 = vpop.f32.mrb[0].mxu0
      %1437 = vmatprep.mubr.bf16.mxu0 0
      %1438 = vmatmul.mubr.bf16.gmra.mrb[0].mxu0 %v631
      %v1439 = vpop.f32.mrb[0].mxu0
      %v1440 = vadd.f32 0.0, %v1439
      %v1441 = vpop.f32.mrb[0].mxu0
      %v1442 = vpop.f32.mrb[0].mxu0
      %v1443 = vadd.f32 0.0, %v1442
      %v1444 = vpop.f32.mrb[0].mxu0
      %1445 = vmatprep.mubr.bf16.mxu0 0
      %1446 = vmatmul.mubr.bf16.gmra.mrb[0].mxu0 %v633
      %v1447 = vpop.f32.mrb[0].mxu0
      %v1448 = vadd.f32 0.0, %v1447
      %v1449 = vpop.f32.mrb[0].mxu0
      %v1450 = vpop.f32.mrb[0].mxu0
      %v1451 = vadd.f32 0.0, %v1450
      %v1452 = vpop.f32.mrb[0].mxu0
      %1453 = vdwg.mxu0
      %v1454 = vadd.f32 %v1276, %v1392
      %v1455 = vadd.f32 %v1277, %v1395
      %v1456 = vadd.f32 %v1278, %v1400
      %v1457 = vadd.f32 %v1279, %v1403
      %v1458 = vadd.f32 %v1280, %v1408
      %v1459 = vadd.f32 %v1281, %v1411
      %v1460 = vadd.f32 %v1282, %v1416
      %v1461 = vadd.f32 %v1283, %v1419
      %v1462 = vadd.f32 %v1284, %v1424
      %v1463 = vadd.f32 %v1285, %v1427
      %v1464 = vadd.f32 %v1286, %v1432
      %v1465 = vadd.f32 %v1287, %v1435
      %v1466 = vadd.f32 %v1288, %v1440
      %v1467 = vadd.f32 %v1289, %v1443
      %v1468 = vadd.f32 %v1290, %v1448
      %v1469 = vadd.f32 %v1291, %v1451
      %v1471 = vshrl.u32 %v633, 16
      %v1473 = vshll.u32 %v633, 16
      %v1475 = vrot.slane %v1473, 1
      %v1476 = vor.u32 %v1471, %v1475
      %v1478 = vshll.u32 %v634, 16
      %v1480 = vrot.slane %v1478, 1
      %v1481 = vsel %vm653, %v1476, %v1480
      %s1483 = scalar_lea.vmem %s1, 256
      %v1484 = vld [vmem:[%s1483] sm:$0xf]
      %v1485 = vld [vmem:[%s1483 + $0x4] sm:$0xf]
      %v1486 = vld [vmem:[%s1483 + $0x8] sm:$0xf]
      %v1487 = vld [vmem:[%s1483 + $0xc] sm:$0xf]
      %v1488 = vld [vmem:[%s1483 + $0x10] sm:$0xf]
      %v1489 = vld [vmem:[%s1483 + $0x14] sm:$0xf]
      %v1490 = vld [vmem:[%s1483 + $0x18] sm:$0xf]
      %v1491 = vld [vmem:[%s1483 + $0x1c] sm:$0xf]
      %v1492 = vld [vmem:[%s1483 + $0x20] sm:$0xf]
      %v1493 = vld [vmem:[%s1483 + $0x24] sm:$0xf]
      %v1494 = vld [vmem:[%s1483 + $0x28] sm:$0xf]
      %v1495 = vld [vmem:[%s1483 + $0x2c] sm:$0xf]
      %v1496 = vld [vmem:[%s1483 + $0x30] sm:$0xf]
      %v1497 = vld [vmem:[%s1483 + $0x34] sm:$0xf]
      %v1498 = vld [vmem:[%s1483 + $0x38] sm:$0xf]
      %v1499 = vld [vmem:[%s1483 + $0x3c] sm:$0xf]
      %v1516 = vunpack.c.l.b16 %v1484
      %v1517 = vunpack.c.l.b16 %v1485
      %v1518 = vunpack.c.l.b16 %v1486
      %v1519 = vunpack.c.l.b16 %v1487
      %v1520 = vunpack.c.l.b16 %v1488
      %v1521 = vunpack.c.l.b16 %v1489
      %v1522 = vunpack.c.l.b16 %v1490
      %v1523 = vunpack.c.l.b16 %v1491
      %v1524 = vunpack.c.l.b16 %v1492
      %v1525 = vunpack.c.l.b16 %v1493
      %v1526 = vunpack.c.l.b16 %v1494
      %v1527 = vunpack.c.l.b16 %v1495
      %v1528 = vunpack.c.l.b16 %v1496
      %v1529 = vunpack.c.l.b16 %v1497
      %v1530 = vunpack.c.l.b16 %v1498
      %v1531 = vunpack.c.l.b16 %v1499
      %v1532 = vpack.c.b16 %v1517, %v1516
      %v1533 = vpack.c.b16 %v1519, %v1518
      %v1534 = vpack.c.b16 %v1521, %v1520
      %v1535 = vpack.c.b16 %v1523, %v1522
      %v1536 = vpack.c.b16 %v1525, %v1524
      %v1537 = vpack.c.b16 %v1527, %v1526
      %v1538 = vpack.c.b16 %v1529, %v1528
      %v1539 = vpack.c.b16 %v1531, %v1530
      %1548 = vmatprep.subr.bf16.mxu0 0
      %1549 = vmatpush1.bf16.msra.mxu0 %v1532
      %1550 = vmatprep.subr.bf16.mxu0 0
      %1551 = vmatpush1.bf16.msra.mxu0 %v1533
      %1552 = vmatprep.subr.bf16.mxu0 0
      %1553 = vmatpush1.bf16.msra.mxu0 %v1534
      %1554 = vmatprep.subr.bf16.mxu0 0
      %1555 = vmatpush1.bf16.msra.mxu0 %v1535
      %1556 = vmatprep.subr.bf16.mxu0 0
      %1557 = vmatpush1.bf16.msra.mxu0 %v1536
      %1558 = vmatprep.subr.bf16.mxu0 0
      %1559 = vmatpush1.bf16.msra.mxu0 %v1537
      %1560 = vmatprep.subr.bf16.mxu0 0
      %1561 = vmatpush1.bf16.msra.mxu0 %v1538
      %1562 = vmatprep.subr.bf16.mxu0 0
      %1563 = vmatpush1.bf16.msra.mxu0 %v1539
      %1564 = vmatprep.subr.bf16.mxu0 0
      %1565 = vmatpush1.bf16.msra.mxu0 0
      %1566 = vmatprep.subr.bf16.mxu0 0
      %1567 = vmatpush1.bf16.msra.mxu0 0
      %1568 = vmatprep.subr.bf16.mxu0 0
      %1569 = vmatpush1.bf16.msra.mxu0 0
      %1570 = vmatprep.subr.bf16.mxu0 0
      %1571 = vmatpush1.bf16.msra.mxu0 0
      %1572 = vmatprep.subr.bf16.mxu0 0
      %1573 = vmatpush1.bf16.msra.mxu0 0
      %1574 = vmatprep.subr.bf16.mxu0 0
      %1575 = vmatpush1.bf16.msra.mxu0 0
      %1576 = vmatprep.subr.bf16.mxu0 0
      %1577 = vmatpush1.bf16.msra.mxu0 0
      %1578 = vmatprep.subr.bf16.mxu0 0
      %1579 = vmatpush1.bf16.msra.mxu0 0
      %1580 = vmatprep.mubr.bf16.mxu0 0
      %1581 = vmatmul.mubr.bf16.gmra.mrb[0].mxu0 %v677
      %v1582 = vpop.f32.mrb[0].mxu0
      %v1583 = vadd.f32 0.0, %v1582
      %v1584 = vpop.f32.mrb[0].mxu0
      %v1585 = vpop.f32.mrb[0].mxu0
      %v1586 = vadd.f32 0.0, %v1585
      %v1587 = vpop.f32.mrb[0].mxu0
      %1588 = vmatprep.mubr.bf16.mxu0 0
      %1589 = vmatmul.mubr.bf16.gmra.mrb[0].mxu0 %v689
      %v1590 = vpop.f32.mrb[0].mxu0
      %v1591 = vadd.f32 0.0, %v1590
      %v1592 = vpop.f32.mrb[0].mxu0
      %v1593 = vpop.f32.mrb[0].mxu0
      %v1594 = vadd.f32 0.0, %v1593
      %v1595 = vpop.f32.mrb[0].mxu0
      %1596 = vmatprep.mubr.bf16.mxu0 0
      %1597 = vmatmul.mubr.bf16.gmra.mrb[0].mxu0 %v701
      %v1598 = vpop.f32.mrb[0].mxu0
      %v1599 = vadd.f32 0.0, %v1598
      %v1600 = vpop.f32.mrb[0].mxu0
      %v1601 = vpop.f32.mrb[0].mxu0
      %v1602 = vadd.f32 0.0, %v1601
      %v1603 = vpop.f32.mrb[0].mxu0
      %1604 = vmatprep.mubr.bf16.mxu0 0
      %1605 = vmatmul.mubr.bf16.gmra.mrb[0].mxu0 %v713
      %v1606 = vpop.f32.mrb[0].mxu0
      %v1607 = vadd.f32 0.0, %v1606
      %v1608 = vpop.f32.mrb[0].mxu0
      %v1609 = vpop.f32.mrb[0].mxu0
      %v1610 = vadd.f32 0.0, %v1609
      %v1611 = vpop.f32.mrb[0].mxu0
      %1612 = vmatprep.mubr.bf16.mxu0 0
      %1613 = vmatmul.mubr.bf16.gmra.mrb[0].mxu0 %v725
      %v1614 = vpop.f32.mrb[0].mxu0
      %v1615 = vadd.f32 0.0, %v1614
      %v1616 = vpop.f32.mrb[0].mxu0
      %v1617 = vpop.f32.mrb[0].mxu0
      %v1618 = vadd.f32 0.0, %v1617
      %v1619 = vpop.f32.mrb[0].mxu0
      %1620 = vmatprep.mubr.bf16.mxu0 0
      %1621 = vmatmul.mubr.bf16.gmra.mrb[0].mxu0 %v737
      %v1622 = vpop.f32.mrb[0].mxu0
      %v1623 = vadd.f32 0.0, %v1622
      %v1624 = vpop.f32.mrb[0].mxu0
      %v1625 = vpop.f32.mrb[0].mxu0
      %v1626 = vadd.f32 0.0, %v1625
      %v1627 = vpop.f32.mrb[0].mxu0
      %1628 = vmatprep.mubr.bf16.mxu0 0
      %1629 = vmatmul.mubr.bf16.gmra.mrb[0].mxu0 %v749
      %v1630 = vpop.f32.mrb[0].mxu0
      %v1631 = vadd.f32 0.0, %v1630
      %v1632 = vpop.f32.mrb[0].mxu0
      %v1633 = vpop.f32.mrb[0].mxu0
      %v1634 = vadd.f32 0.0, %v1633
      %v1635 = vpop.f32.mrb[0].mxu0
      %1636 = vmatprep.mubr.bf16.mxu0 0
      %1637 = vmatmul.mubr.bf16.gmra.mrb[0].mxu0 %v1481
      %v1638 = vpop.f32.mrb[0].mxu0
      %v1639 = vadd.f32 0.0, %v1638
      %v1640 = vpop.f32.mrb[0].mxu0
      %v1641 = vpop.f32.mrb[0].mxu0
      %v1642 = vadd.f32 0.0, %v1641
      %v1643 = vpop.f32.mrb[0].mxu0
      %1644 = vdwg.mxu0
      %v1645 = vadd.f32 %v1454, %v1583
      %v1646 = vadd.f32 %v1455, %v1586
      %v1647 = vadd.f32 %v1456, %v1591
      %v1648 = vadd.f32 %v1457, %v1594
      %v1649 = vadd.f32 %v1458, %v1599
      %v1650 = vadd.f32 %v1459, %v1602
      %v1651 = vadd.f32 %v1460, %v1607
      %v1652 = vadd.f32 %v1461, %v1610
      %v1653 = vadd.f32 %v1462, %v1615
      %v1654 = vadd.f32 %v1463, %v1618
      %v1655 = vadd.f32 %v1464, %v1623
      %v1656 = vadd.f32 %v1465, %v1626
      %v1657 = vadd.f32 %v1466, %v1631
      %v1658 = vadd.f32 %v1467, %v1634
      %v1659 = vadd.f32 %v1468, %v1639
      %v1660 = vadd.f32 %v1469, %v1642
      %v1663 = vrot.slane %v633, 1
      %v1664 = vrot.slane %v634, 1
      %v1665 = vsel %vm1081, %v1663, %v1664
      %s1667 = scalar_lea.vmem %s1, 320
      %v1668 = vld [vmem:[%s1667] sm:$0xf]
      %v1669 = vld [vmem:[%s1667 + $0x4] sm:$0xf]
      %v1670 = vld [vmem:[%s1667 + $0x8] sm:$0xf]
      %v1671 = vld [vmem:[%s1667 + $0xc] sm:$0xf]
      %v1672 = vld [vmem:[%s1667 + $0x10] sm:$0xf]
      %v1673 = vld [vmem:[%s1667 + $0x14] sm:$0xf]
      %v1674 = vld [vmem:[%s1667 + $0x18] sm:$0xf]
      %v1675 = vld [vmem:[%s1667 + $0x1c] sm:$0xf]
      %v1676 = vld [vmem:[%s1667 + $0x20] sm:$0xf]
      %v1677 = vld [vmem:[%s1667 + $0x24] sm:$0xf]
      %v1678 = vld [vmem:[%s1667 + $0x28] sm:$0xf]
      %v1679 = vld [vmem:[%s1667 + $0x2c] sm:$0xf]
      %v1680 = vld [vmem:[%s1667 + $0x30] sm:$0xf]
      %v1681 = vld [vmem:[%s1667 + $0x34] sm:$0xf]
      %v1682 = vld [vmem:[%s1667 + $0x38] sm:$0xf]
      %v1683 = vld [vmem:[%s1667 + $0x3c] sm:$0xf]
      %v1700 = vunpack.c.l.b16 %v1668
      %v1701 = vunpack.c.l.b16 %v1669
      %v1702 = vunpack.c.l.b16 %v1670
      %v1703 = vunpack.c.l.b16 %v1671
      %v1704 = vunpack.c.l.b16 %v1672
      %v1705 = vunpack.c.l.b16 %v1673
      %v1706 = vunpack.c.l.b16 %v1674
      %v1707 = vunpack.c.l.b16 %v1675
      %v1708 = vunpack.c.l.b16 %v1676
      %v1709 = vunpack.c.l.b16 %v1677
      %v1710 = vunpack.c.l.b16 %v1678
      %v1711 = vunpack.c.l.b16 %v1679
      %v1712 = vunpack.c.l.b16 %v1680
      %v1713 = vunpack.c.l.b16 %v1681
      %v1714 = vunpack.c.l.b16 %v1682
      %v1715 = vunpack.c.l.b16 %v1683
      %v1716 = vpack.c.b16 %v1701, %v1700
      %v1717 = vpack.c.b16 %v1703, %v1702
      %v1718 = vpack.c.b16 %v1705, %v1704
      %v1719 = vpack.c.b16 %v1707, %v1706
      %v1720 = vpack.c.b16 %v1709, %v1708
      %v1721 = vpack.c.b16 %v1711, %v1710
      %v1722 = vpack.c.b16 %v1713, %v1712
      %v1723 = vpack.c.b16 %v1715, %v1714
      %1732 = vmatprep.subr.bf16.mxu0 0
      %1733 = vmatpush1.bf16.msra.mxu0 %v1716
      %1734 = vmatprep.subr.bf16.mxu0 0
      %1735 = vmatpush1.bf16.msra.mxu0 %v1717
      %1736 = vmatprep.subr.bf16.mxu0 0
      %1737 = vmatpush1.bf16.msra.mxu0 %v1718
      %1738 = vmatprep.subr.bf16.mxu0 0
      %1739 = vmatpush1.bf16.msra.mxu0 %v1719
      %1740 = vmatprep.subr.bf16.mxu0 0
      %1741 = vmatpush1.bf16.msra.mxu0 %v1720
      %1742 = vmatprep.subr.bf16.mxu0 0
      %1743 = vmatpush1.bf16.msra.mxu0 %v1721
      %1744 = vmatprep.subr.bf16.mxu0 0
      %1745 = vmatpush1.bf16.msra.mxu0 %v1722
      %1746 = vmatprep.subr.bf16.mxu0 0
      %1747 = vmatpush1.bf16.msra.mxu0 %v1723
      %1748 = vmatprep.subr.bf16.mxu0 0
      %1749 = vmatpush1.bf16.msra.mxu0 0
      %1750 = vmatprep.subr.bf16.mxu0 0
      %1751 = vmatpush1.bf16.msra.mxu0 0
      %1752 = vmatprep.subr.bf16.mxu0 0
      %1753 = vmatpush1.bf16.msra.mxu0 0
      %1754 = vmatprep.subr.bf16.mxu0 0
      %1755 = vmatpush1.bf16.msra.mxu0 0
      %1756 = vmatprep.subr.bf16.mxu0 0
      %1757 = vmatpush1.bf16.msra.mxu0 0
      %1758 = vmatprep.subr.bf16.mxu0 0
      %1759 = vmatpush1.bf16.msra.mxu0 0
      %1760 = vmatprep.subr.bf16.mxu0 0
      %1761 = vmatpush1.bf16.msra.mxu0 0
      %1762 = vmatprep.subr.bf16.mxu0 0
      %1763 = vmatpush1.bf16.msra.mxu0 0
      %1764 = vmatprep.mubr.bf16.mxu0 0
      %1765 = vmatmul.mubr.bf16.gmra.mrb[0].mxu0 %v1087
      %v1766 = vpop.f32.mrb[0].mxu0
      %v1767 = vadd.f32 0.0, %v1766
      %v1768 = vpop.f32.mrb[0].mxu0
      %v1769 = vpop.f32.mrb[0].mxu0
      %v1770 = vadd.f32 0.0, %v1769
      %v1771 = vpop.f32.mrb[0].mxu0
      %1772 = vmatprep.mubr.bf16.mxu0 0
      %1773 = vmatmul.mubr.bf16.gmra.mrb[0].mxu0 %v1090
      %v1774 = vpop.f32.mrb[0].mxu0
      %v1775 = vadd.f32 0.0, %v1774
      %v1776 = vpop.f32.mrb[0].mxu0
      %v1777 = vpop.f32.mrb[0].mxu0
      %v1778 = vadd.f32 0.0, %v1777
      %v1779 = vpop.f32.mrb[0].mxu0
      %1780 = vmatprep.mubr.bf16.mxu0 0
      %1781 = vmatmul.mubr.bf16.gmra.mrb[0].mxu0 %v1093
      %v1782 = vpop.f32.mrb[0].mxu0
      %v1783 = vadd.f32 0.0, %v1782
      %v1784 = vpop.f32.mrb[0].mxu0
      %v1785 = vpop.f32.mrb[0].mxu0
      %v1786 = vadd.f32 0.0, %v1785
      %v1787 = vpop.f32.mrb[0].mxu0
      %1788 = vmatprep.mubr.bf16.mxu0 0
      %1789 = vmatmul.mubr.bf16.gmra.mrb[0].mxu0 %v1096
      %v1790 = vpop.f32.mrb[0].mxu0
      %v1791 = vadd.f32 0.0, %v1790
      %v1792 = vpop.f32.mrb[0].mxu0
      %v1793 = vpop.f32.mrb[0].mxu0
      %v1794 = vadd.f32 0.0, %v1793
      %v1795 = vpop.f32.mrb[0].mxu0
      %1796 = vmatprep.mubr.bf16.mxu0 0
      %1797 = vmatmul.mubr.bf16.gmra.mrb[0].mxu0 %v1099
      %v1798 = vpop.f32.mrb[0].mxu0
      %v1799 = vadd.f32 0.0, %v1798
      %v1800 = vpop.f32.mrb[0].mxu0
      %v1801 = vpop.f32.mrb[0].mxu0
      %v1802 = vadd.f32 0.0, %v1801
      %v1803 = vpop.f32.mrb[0].mxu0
      %1804 = vmatprep.mubr.bf16.mxu0 0
      %1805 = vmatmul.mubr.bf16.gmra.mrb[0].mxu0 %v1102
      %v1806 = vpop.f32.mrb[0].mxu0
      %v1807 = vadd.f32 0.0, %v1806
      %v1808 = vpop.f32.mrb[0].mxu0
      %v1809 = vpop.f32.mrb[0].mxu0
      %v1810 = vadd.f32 0.0, %v1809
      %v1811 = vpop.f32.mrb[0].mxu0
      %1812 = vmatprep.mubr.bf16.mxu0 0
      %1813 = vmatmul.mubr.bf16.gmra.mrb[0].mxu0 %v1105
      %v1814 = vpop.f32.mrb[0].mxu0
      %v1815 = vadd.f32 0.0, %v1814
      %v1816 = vpop.f32.mrb[0].mxu0
      %v1817 = vpop.f32.mrb[0].mxu0
      %v1818 = vadd.f32 0.0, %v1817
      %v1819 = vpop.f32.mrb[0].mxu0
      %1820 = vmatprep.mubr.bf16.mxu0 0
      %1821 = vmatmul.mubr.bf16.gmra.mrb[0].mxu0 %v1665
      %v1822 = vpop.f32.mrb[0].mxu0
      %v1823 = vadd.f32 0.0, %v1822
      %v1824 = vpop.f32.mrb[0].mxu0
      %v1825 = vpop.f32.mrb[0].mxu0
      %v1826 = vadd.f32 0.0, %v1825
      %v1827 = vpop.f32.mrb[0].mxu0
      %1828 = vdwg.mxu0
      %v1829 = vadd.f32 %v1645, %v1767
      %v1830 = vadd.f32 %v1646, %v1770
      %v1831 = vadd.f32 %v1647, %v1775
      %v1832 = vadd.f32 %v1648, %v1778
      %v1833 = vadd.f32 %v1649, %v1783
      %v1834 = vadd.f32 %v1650, %v1786
      %v1835 = vadd.f32 %v1651, %v1791
      %v1836 = vadd.f32 %v1652, %v1794
      %v1837 = vadd.f32 %v1653, %v1799
      %v1838 = vadd.f32 %v1654, %v1802
      %v1839 = vadd.f32 %v1655, %v1807
      %v1840 = vadd.f32 %v1656, %v1810
      %v1841 = vadd.f32 %v1657, %v1815
      %v1842 = vadd.f32 %v1658, %v1818
      %v1843 = vadd.f32 %v1659, %v1823
      %v1844 = vadd.f32 %v1660, %v1826
      %s1845 = scalar_lea.vmem %s1, 384
      %v1846 = vld [vmem:[%s1845] sm:$0xf]
      %v1847 = vld [vmem:[%s1845 + $0x4] sm:$0xf]
      %v1848 = vld [vmem:[%s1845 + $0x8] sm:$0xf]
      %v1849 = vld [vmem:[%s1845 + $0xc] sm:$0xf]
      %v1850 = vld [vmem:[%s1845 + $0x10] sm:$0xf]
      %v1851 = vld [vmem:[%s1845 + $0x14] sm:$0xf]
      %v1852 = vld [vmem:[%s1845 + $0x18] sm:$0xf]
      %v1853 = vld [vmem:[%s1845 + $0x1c] sm:$0xf]
      %v1854 = vld [vmem:[%s1845 + $0x20] sm:$0xf]
      %v1855 = vld [vmem:[%s1845 + $0x24] sm:$0xf]
      %v1856 = vld [vmem:[%s1845 + $0x28] sm:$0xf]
      %v1857 = vld [vmem:[%s1845 + $0x2c] sm:$0xf]
      %v1858 = vld [vmem:[%s1845 + $0x30] sm:$0xf]
      %v1859 = vld [vmem:[%s1845 + $0x34] sm:$0xf]
      %v1860 = vld [vmem:[%s1845 + $0x38] sm:$0xf]
      %v1861 = vld [vmem:[%s1845 + $0x3c] sm:$0xf]
      %v1878 = vunpack.c.l.b16 %v1846
      %v1879 = vunpack.c.l.b16 %v1847
      %v1880 = vunpack.c.l.b16 %v1848
      %v1881 = vunpack.c.l.b16 %v1849
      %v1882 = vunpack.c.l.b16 %v1850
      %v1883 = vunpack.c.l.b16 %v1851
      %v1884 = vunpack.c.l.b16 %v1852
      %v1885 = vunpack.c.l.b16 %v1853
      %v1886 = vunpack.c.l.b16 %v1854
      %v1887 = vunpack.c.l.b16 %v1855
      %v1888 = vunpack.c.l.b16 %v1856
      %v1889 = vunpack.c.l.b16 %v1857
      %v1890 = vunpack.c.l.b16 %v1858
      %v1891 = vunpack.c.l.b16 %v1859
      %v1892 = vunpack.c.l.b16 %v1860
      %v1893 = vunpack.c.l.b16 %v1861
      %v1894 = vpack.c.b16 %v1879, %v1878
      %v1895 = vpack.c.b16 %v1881, %v1880
      %v1896 = vpack.c.b16 %v1883, %v1882
      %v1897 = vpack.c.b16 %v1885, %v1884
      %v1898 = vpack.c.b16 %v1887, %v1886
      %v1899 = vpack.c.b16 %v1889, %v1888
      %v1900 = vpack.c.b16 %v1891, %v1890
      %v1901 = vpack.c.b16 %v1893, %v1892
      %1910 = vmatprep.subr.bf16.mxu0 0
      %1911 = vmatpush1.bf16.msra.mxu0 %v1894
      %1912 = vmatprep.subr.bf16.mxu0 0
      %1913 = vmatpush1.bf16.msra.mxu0 %v1895
      %1914 = vmatprep.subr.bf16.mxu0 0
      %1915 = vmatpush1.bf16.msra.mxu0 %v1896
      %1916 = vmatprep.subr.bf16.mxu0 0
      %1917 = vmatpush1.bf16.msra.mxu0 %v1897
      %1918 = vmatprep.subr.bf16.mxu0 0
      %1919 = vmatpush1.bf16.msra.mxu0 %v1898
      %1920 = vmatprep.subr.bf16.mxu0 0
      %1921 = vmatpush1.bf16.msra.mxu0 %v1899
      %1922 = vmatprep.subr.bf16.mxu0 0
      %1923 = vmatpush1.bf16.msra.mxu0 %v1900
      %1924 = vmatprep.subr.bf16.mxu0 0
      %1925 = vmatpush1.bf16.msra.mxu0 %v1901
      %1926 = vmatprep.subr.bf16.mxu0 0
      %1927 = vmatpush1.bf16.msra.mxu0 0
      %1928 = vmatprep.subr.bf16.mxu0 0
      %1929 = vmatpush1.bf16.msra.mxu0 0
      %1930 = vmatprep.subr.bf16.mxu0 0
      %1931 = vmatpush1.bf16.msra.mxu0 0
      %1932 = vmatprep.subr.bf16.mxu0 0
      %1933 = vmatpush1.bf16.msra.mxu0 0
      %1934 = vmatprep.subr.bf16.mxu0 0
      %1935 = vmatpush1.bf16.msra.mxu0 0
      %1936 = vmatprep.subr.bf16.mxu0 0
      %1937 = vmatpush1.bf16.msra.mxu0 0
      %1938 = vmatprep.subr.bf16.mxu0 0
      %1939 = vmatpush1.bf16.msra.mxu0 0
      %1940 = vmatprep.subr.bf16.mxu0 0
      %1941 = vmatpush1.bf16.msra.mxu0 0
      %1942 = vmatprep.mubr.bf16.mxu0 0
      %1943 = vmatmul.mubr.bf16.gmra.mrb[0].mxu0 %v621
      %v1944 = vpop.f32.mrb[0].mxu0
      %v1945 = vadd.f32 0.0, %v1944
      %v1946 = vpop.f32.mrb[0].mxu0
      %v1947 = vpop.f32.mrb[0].mxu0
      %v1948 = vadd.f32 0.0, %v1947
      %v1949 = vpop.f32.mrb[0].mxu0
      %1950 = vmatprep.mubr.bf16.mxu0 0
      %1951 = vmatmul.mubr.bf16.gmra.mrb[0].mxu0 %v623
      %v1952 = vpop.f32.mrb[0].mxu0
      %v1953 = vadd.f32 0.0, %v1952
      %v1954 = vpop.f32.mrb[0].mxu0
      %v1955 = vpop.f32.mrb[0].mxu0
      %v1956 = vadd.f32 0.0, %v1955
      %v1957 = vpop.f32.mrb[0].mxu0
      %1958 = vmatprep.mubr.bf16.mxu0 0
      %1959 = vmatmul.mubr.bf16.gmra.mrb[0].mxu0 %v625
      %v1960 = vpop.f32.mrb[0].mxu0
      %v1961 = vadd.f32 0.0, %v1960
      %v1962 = vpop.f32.mrb[0].mxu0
      %v1963 = vpop.f32.mrb[0].mxu0
      %v1964 = vadd.f32 0.0, %v1963
      %v1965 = vpop.f32.mrb[0].mxu0
      %1966 = vmatprep.mubr.bf16.mxu0 0
      %1967 = vmatmul.mubr.bf16.gmra.mrb[0].mxu0 %v627
      %v1968 = vpop.f32.mrb[0].mxu0
      %v1969 = vadd.f32 0.0, %v1968
      %v1970 = vpop.f32.mrb[0].mxu0
      %v1971 = vpop.f32.mrb[0].mxu0
      %v1972 = vadd.f32 0.0, %v1971
      %v1973 = vpop.f32.mrb[0].mxu0
      %1974 = vmatprep.mubr.bf16.mxu0 0
      %1975 = vmatmul.mubr.bf16.gmra.mrb[0].mxu0 %v629
      %v1976 = vpop.f32.mrb[0].mxu0
      %v1977 = vadd.f32 0.0, %v1976
      %v1978 = vpop.f32.mrb[0].mxu0
      %v1979 = vpop.f32.mrb[0].mxu0
      %v1980 = vadd.f32 0.0, %v1979
      %v1981 = vpop.f32.mrb[0].mxu0
      %1982 = vmatprep.mubr.bf16.mxu0 0
      %1983 = vmatmul.mubr.bf16.gmra.mrb[0].mxu0 %v631
      %v1984 = vpop.f32.mrb[0].mxu0
      %v1985 = vadd.f32 0.0, %v1984
      %v1986 = vpop.f32.mrb[0].mxu0
      %v1987 = vpop.f32.mrb[0].mxu0
      %v1988 = vadd.f32 0.0, %v1987
      %v1989 = vpop.f32.mrb[0].mxu0
      %1990 = vmatprep.mubr.bf16.mxu0 0
      %1991 = vmatmul.mubr.bf16.gmra.mrb[0].mxu0 %v633
      %v1992 = vpop.f32.mrb[0].mxu0
      %v1993 = vadd.f32 0.0, %v1992
      %v1994 = vpop.f32.mrb[0].mxu0
      %v1995 = vpop.f32.mrb[0].mxu0
      %v1996 = vadd.f32 0.0, %v1995
      %v1997 = vpop.f32.mrb[0].mxu0
      %1998 = vmatprep.mubr.bf16.mxu0 0
      %1999 = vmatmul.mubr.bf16.gmra.mrb[0].mxu0 %v635
      %v2000 = vpop.f32.mrb[0].mxu0
      %v2001 = vadd.f32 0.0, %v2000
      %v2002 = vpop.f32.mrb[0].mxu0
      %v2003 = vpop.f32.mrb[0].mxu0
      %v2004 = vadd.f32 0.0, %v2003
      %v2005 = vpop.f32.mrb[0].mxu0
      %2006 = vdwg.mxu0
      %v2007 = vadd.f32 %v1829, %v1945
      %v2008 = vadd.f32 %v1830, %v1948
      %v2009 = vadd.f32 %v1831, %v1953
      %v2010 = vadd.f32 %v1832, %v1956
      %v2011 = vadd.f32 %v1833, %v1961
      %v2012 = vadd.f32 %v1834, %v1964
      %v2013 = vadd.f32 %v1835, %v1969
      %v2014 = vadd.f32 %v1836, %v1972
      %v2015 = vadd.f32 %v1837, %v1977
      %v2016 = vadd.f32 %v1838, %v1980
      %v2017 = vadd.f32 %v1839, %v1985
      %v2018 = vadd.f32 %v1840, %v1988
      %v2019 = vadd.f32 %v1841, %v1993
      %v2020 = vadd.f32 %v1842, %v1996
      %v2021 = vadd.f32 %v1843, %v2001
      %v2022 = vadd.f32 %v1844, %v2004
      %v2024 = vshrl.u32 %v635, 16
      %v2026 = vshll.u32 %v635, 16
      %v2028 = vrot.slane %v2026, 1
      %v2029 = vor.u32 %v2024, %v2028
      %v2031 = vshll.u32 %v636, 16
      %v2033 = vrot.slane %v2031, 1
      %v2034 = vsel %vm653, %v2029, %v2033
      %s2036 = scalar_lea.vmem %s1, 448
      %v2037 = vld [vmem:[%s2036] sm:$0xf]
      %v2038 = vld [vmem:[%s2036 + $0x4] sm:$0xf]
      %v2039 = vld [vmem:[%s2036 + $0x8] sm:$0xf]
      %v2040 = vld [vmem:[%s2036 + $0xc] sm:$0xf]
      %v2041 = vld [vmem:[%s2036 + $0x10] sm:$0xf]
      %v2042 = vld [vmem:[%s2036 + $0x14] sm:$0xf]
      %v2043 = vld [vmem:[%s2036 + $0x18] sm:$0xf]
      %v2044 = vld [vmem:[%s2036 + $0x1c] sm:$0xf]
      %v2045 = vld [vmem:[%s2036 + $0x20] sm:$0xf]
      %v2046 = vld [vmem:[%s2036 + $0x24] sm:$0xf]
      %v2047 = vld [vmem:[%s2036 + $0x28] sm:$0xf]
      %v2048 = vld [vmem:[%s2036 + $0x2c] sm:$0xf]
      %v2049 = vld [vmem:[%s2036 + $0x30] sm:$0xf]
      %v2050 = vld [vmem:[%s2036 + $0x34] sm:$0xf]
      %v2051 = vld [vmem:[%s2036 + $0x38] sm:$0xf]
      %v2052 = vld [vmem:[%s2036 + $0x3c] sm:$0xf]
      %v2069 = vunpack.c.l.b16 %v2037
      %v2070 = vunpack.c.l.b16 %v2038
      %v2071 = vunpack.c.l.b16 %v2039
      %v2072 = vunpack.c.l.b16 %v2040
      %v2073 = vunpack.c.l.b16 %v2041
      %v2074 = vunpack.c.l.b16 %v2042
      %v2075 = vunpack.c.l.b16 %v2043
      %v2076 = vunpack.c.l.b16 %v2044
      %v2077 = vunpack.c.l.b16 %v2045
      %v2078 = vunpack.c.l.b16 %v2046
      %v2079 = vunpack.c.l.b16 %v2047
      %v2080 = vunpack.c.l.b16 %v2048
      %v2081 = vunpack.c.l.b16 %v2049
      %v2082 = vunpack.c.l.b16 %v2050
      %v2083 = vunpack.c.l.b16 %v2051
      %v2084 = vunpack.c.l.b16 %v2052
      %v2085 = vpack.c.b16 %v2070, %v2069
      %v2086 = vpack.c.b16 %v2072, %v2071
      %v2087 = vpack.c.b16 %v2074, %v2073
      %v2088 = vpack.c.b16 %v2076, %v2075
      %v2089 = vpack.c.b16 %v2078, %v2077
      %v2090 = vpack.c.b16 %v2080, %v2079
      %v2091 = vpack.c.b16 %v2082, %v2081
      %v2092 = vpack.c.b16 %v2084, %v2083
      %2101 = vmatprep.subr.bf16.mxu0 0
      %2102 = vmatpush1.bf16.msra.mxu0 %v2085
      %2103 = vmatprep.subr.bf16.mxu0 0
      %2104 = vmatpush1.bf16.msra.mxu0 %v2086
      %2105 = vmatprep.subr.bf16.mxu0 0
      %2106 = vmatpush1.bf16.msra.mxu0 %v2087
      %2107 = vmatprep.subr.bf16.mxu0 0
      %2108 = vmatpush1.bf16.msra.mxu0 %v2088
      %2109 = vmatprep.subr.bf16.mxu0 0
      %2110 = vmatpush1.bf16.msra.mxu0 %v2089
      %2111 = vmatprep.subr.bf16.mxu0 0
      %2112 = vmatpush1.bf16.msra.mxu0 %v2090
      %2113 = vmatprep.subr.bf16.mxu0 0
      %2114 = vmatpush1.bf16.msra.mxu0 %v2091
      %2115 = vmatprep.subr.bf16.mxu0 0
      %2116 = vmatpush1.bf16.msra.mxu0 %v2092
      %2117 = vmatprep.subr.bf16.mxu0 0
      %2118 = vmatpush1.bf16.msra.mxu0 0
      %2119 = vmatprep.subr.bf16.mxu0 0
      %2120 = vmatpush1.bf16.msra.mxu0 0
      %2121 = vmatprep.subr.bf16.mxu0 0
      %2122 = vmatpush1.bf16.msra.mxu0 0
      %2123 = vmatprep.subr.bf16.mxu0 0
      %2124 = vmatpush1.bf16.msra.mxu0 0
      %2125 = vmatprep.subr.bf16.mxu0 0
      %2126 = vmatpush1.bf16.msra.mxu0 0
      %2127 = vmatprep.subr.bf16.mxu0 0
      %2128 = vmatpush1.bf16.msra.mxu0 0
      %2129 = vmatprep.subr.bf16.mxu0 0
      %2130 = vmatpush1.bf16.msra.mxu0 0
      %2131 = vmatprep.subr.bf16.mxu0 0
      %2132 = vmatpush1.bf16.msra.mxu0 0
      %2133 = vmatprep.mubr.bf16.mxu0 0
      %2134 = vmatmul.mubr.bf16.gmra.mrb[0].mxu0 %v689
      %v2135 = vpop.f32.mrb[0].mxu0
      %v2136 = vadd.f32 0.0, %v2135
      %v2137 = vpop.f32.mrb[0].mxu0
      %v2138 = vpop.f32.mrb[0].mxu0
      %v2139 = vadd.f32 0.0, %v2138
      %v2140 = vpop.f32.mrb[0].mxu0
      %2141 = vmatprep.mubr.bf16.mxu0 0
      %2142 = vmatmul.mubr.bf16.gmra.mrb[0].mxu0 %v701
      %v2143 = vpop.f32.mrb[0].mxu0
      %v2144 = vadd.f32 0.0, %v2143
      %v2145 = vpop.f32.mrb[0].mxu0
      %v2146 = vpop.f32.mrb[0].mxu0
      %v2147 = vadd.f32 0.0, %v2146
      %v2148 = vpop.f32.mrb[0].mxu0
      %2149 = vmatprep.mubr.bf16.mxu0 0
      %2150 = vmatmul.mubr.bf16.gmra.mrb[0].mxu0 %v713
      %v2151 = vpop.f32.mrb[0].mxu0
      %v2152 = vadd.f32 0.0, %v2151
      %v2153 = vpop.f32.mrb[0].mxu0
      %v2154 = vpop.f32.mrb[0].mxu0
      %v2155 = vadd.f32 0.0, %v2154
      %v2156 = vpop.f32.mrb[0].mxu0
      %2157 = vmatprep.mubr.bf16.mxu0 0
      %2158 = vmatmul.mubr.bf16.gmra.mrb[0].mxu0 %v725
      %v2159 = vpop.f32.mrb[0].mxu0
      %v2160 = vadd.f32 0.0, %v2159
      %v2161 = vpop.f32.mrb[0].mxu0
      %v2162 = vpop.f32.mrb[0].mxu0
      %v2163 = vadd.f32 0.0, %v2162
      %v2164 = vpop.f32.mrb[0].mxu0
      %2165 = vmatprep.mubr.bf16.mxu0 0
      %2166 = vmatmul.mubr.bf16.gmra.mrb[0].mxu0 %v737
      %v2167 = vpop.f32.mrb[0].mxu0
      %v2168 = vadd.f32 0.0, %v2167
      %v2169 = vpop.f32.mrb[0].mxu0
      %v2170 = vpop.f32.mrb[0].mxu0
      %v2171 = vadd.f32 0.0, %v2170
      %v2172 = vpop.f32.mrb[0].mxu0
      %2173 = vmatprep.mubr.bf16.mxu0 0
      %2174 = vmatmul.mubr.bf16.gmra.mrb[0].mxu0 %v749
      %v2175 = vpop.f32.mrb[0].mxu0
      %v2176 = vadd.f32 0.0, %v2175
      %v2177 = vpop.f32.mrb[0].mxu0
      %v2178 = vpop.f32.mrb[0].mxu0
      %v2179 = vadd.f32 0.0, %v2178
      %v2180 = vpop.f32.mrb[0].mxu0
      %2181 = vmatprep.mubr.bf16.mxu0 0
      %2182 = vmatmul.mubr.bf16.gmra.mrb[0].mxu0 %v1481
      %v2183 = vpop.f32.mrb[0].mxu0
      %v2184 = vadd.f32 0.0, %v2183
      %v2185 = vpop.f32.mrb[0].mxu0
      %v2186 = vpop.f32.mrb[0].mxu0
      %v2187 = vadd.f32 0.0, %v2186
      %v2188 = vpop.f32.mrb[0].mxu0
      %2189 = vmatprep.mubr.bf16.mxu0 0
      %2190 = vmatmul.mubr.bf16.gmra.mrb[0].mxu0 %v2034
      %v2191 = vpop.f32.mrb[0].mxu0
      %v2192 = vadd.f32 0.0, %v2191
      %v2193 = vpop.f32.mrb[0].mxu0
      %v2194 = vpop.f32.mrb[0].mxu0
      %v2195 = vadd.f32 0.0, %v2194
      %v2196 = vpop.f32.mrb[0].mxu0
      %2197 = vdwg.mxu0
      %v2198 = vadd.f32 %v2007, %v2136
      %v2199 = vadd.f32 %v2008, %v2139
      %v2200 = vadd.f32 %v2009, %v2144
      %v2201 = vadd.f32 %v2010, %v2147
      %v2202 = vadd.f32 %v2011, %v2152
      %v2203 = vadd.f32 %v2012, %v2155
      %v2204 = vadd.f32 %v2013, %v2160
      %v2205 = vadd.f32 %v2014, %v2163
      %v2206 = vadd.f32 %v2015, %v2168
      %v2207 = vadd.f32 %v2016, %v2171
      %v2208 = vadd.f32 %v2017, %v2176
      %v2209 = vadd.f32 %v2018, %v2179
      %v2210 = vadd.f32 %v2019, %v2184
      %v2211 = vadd.f32 %v2020, %v2187
      %v2212 = vadd.f32 %v2021, %v2192
      %v2213 = vadd.f32 %v2022, %v2195
      %v2216 = vrot.slane %v635, 1
      %v2217 = vrot.slane %v636, 1
      %v2218 = vsel %vm1081, %v2216, %v2217
      %s2220 = scalar_lea.vmem %s1, 512
      %v2221 = vld [vmem:[%s2220] sm:$0xf]
      %v2222 = vld [vmem:[%s2220 + $0x4] sm:$0xf]
      %v2223 = vld [vmem:[%s2220 + $0x8] sm:$0xf]
      %v2224 = vld [vmem:[%s2220 + $0xc] sm:$0xf]
      %v2225 = vld [vmem:[%s2220 + $0x10] sm:$0xf]
      %v2226 = vld [vmem:[%s2220 + $0x14] sm:$0xf]
      %v2227 = vld [vmem:[%s2220 + $0x18] sm:$0xf]
      %v2228 = vld [vmem:[%s2220 + $0x1c] sm:$0xf]
      %v2229 = vld [vmem:[%s2220 + $0x20] sm:$0xf]
      %v2230 = vld [vmem:[%s2220 + $0x24] sm:$0xf]
      %v2231 = vld [vmem:[%s2220 + $0x28] sm:$0xf]
      %v2232 = vld [vmem:[%s2220 + $0x2c] sm:$0xf]
      %v2233 = vld [vmem:[%s2220 + $0x30] sm:$0xf]
      %v2234 = vld [vmem:[%s2220 + $0x34] sm:$0xf]
      %v2235 = vld [vmem:[%s2220 + $0x38] sm:$0xf]
      %v2236 = vld [vmem:[%s2220 + $0x3c] sm:$0xf]
      %v2253 = vunpack.c.l.b16 %v2221
      %v2254 = vunpack.c.l.b16 %v2222
      %v2255 = vunpack.c.l.b16 %v2223
      %v2256 = vunpack.c.l.b16 %v2224
      %v2257 = vunpack.c.l.b16 %v2225
      %v2258 = vunpack.c.l.b16 %v2226
      %v2259 = vunpack.c.l.b16 %v2227
      %v2260 = vunpack.c.l.b16 %v2228
      %v2261 = vunpack.c.l.b16 %v2229
      %v2262 = vunpack.c.l.b16 %v2230
      %v2263 = vunpack.c.l.b16 %v2231
      %v2264 = vunpack.c.l.b16 %v2232
      %v2265 = vunpack.c.l.b16 %v2233
      %v2266 = vunpack.c.l.b16 %v2234
      %v2267 = vunpack.c.l.b16 %v2235
      %v2268 = vunpack.c.l.b16 %v2236
      %v2269 = vpack.c.b16 %v2254, %v2253
      %v2270 = vpack.c.b16 %v2256, %v2255
      %v2271 = vpack.c.b16 %v2258, %v2257
      %v2272 = vpack.c.b16 %v2260, %v2259
      %v2273 = vpack.c.b16 %v2262, %v2261
      %v2274 = vpack.c.b16 %v2264, %v2263
      %v2275 = vpack.c.b16 %v2266, %v2265
      %v2276 = vpack.c.b16 %v2268, %v2267
      %2285 = vmatprep.subr.bf16.mxu0 0
      %2286 = vmatpush1.bf16.msra.mxu0 %v2269
      %2287 = vmatprep.subr.bf16.mxu0 0
      %2288 = vmatpush1.bf16.msra.mxu0 %v2270
      %2289 = vmatprep.subr.bf16.mxu0 0
      %2290 = vmatpush1.bf16.msra.mxu0 %v2271
      %2291 = vmatprep.subr.bf16.mxu0 0
      %2292 = vmatpush1.bf16.msra.mxu0 %v2272
      %2293 = vmatprep.subr.bf16.mxu0 0
      %2294 = vmatpush1.bf16.msra.mxu0 %v2273
      %2295 = vmatprep.subr.bf16.mxu0 0
      %2296 = vmatpush1.bf16.msra.mxu0 %v2274
      %2297 = vmatprep.subr.bf16.mxu0 0
      %2298 = vmatpush1.bf16.msra.mxu0 %v2275
      %2299 = vmatprep.subr.bf16.mxu0 0
      %2300 = vmatpush1.bf16.msra.mxu0 %v2276
      %2301 = vmatprep.subr.bf16.mxu0 0
      %2302 = vmatpush1.bf16.msra.mxu0 0
      %2303 = vmatprep.subr.bf16.mxu0 0
      %2304 = vmatpush1.bf16.msra.mxu0 0
      %2305 = vmatprep.subr.bf16.mxu0 0
      %2306 = vmatpush1.bf16.msra.mxu0 0
      %2307 = vmatprep.subr.bf16.mxu0 0
      %2308 = vmatpush1.bf16.msra.mxu0 0
      %2309 = vmatprep.subr.bf16.mxu0 0
      %2310 = vmatpush1.bf16.msra.mxu0 0
      %2311 = vmatprep.subr.bf16.mxu0 0
      %2312 = vmatpush1.bf16.msra.mxu0 0
      %2313 = vmatprep.subr.bf16.mxu0 0
      %2314 = vmatpush1.bf16.msra.mxu0 0
      %2315 = vmatprep.subr.bf16.mxu0 0
      %2316 = vmatpush1.bf16.msra.mxu0 0
      %2317 = vmatprep.mubr.bf16.mxu0 0
      %2318 = vmatmul.mubr.bf16.gmra.mrb[0].mxu0 %v1090
      %v2319 = vpop.f32.mrb[0].mxu0
      %v2320 = vadd.f32 0.0, %v2319
      %v2321 = vpop.f32.mrb[0].mxu0
      %v2322 = vpop.f32.mrb[0].mxu0
      %v2323 = vadd.f32 0.0, %v2322
      %v2324 = vpop.f32.mrb[0].mxu0
      %2325 = vmatprep.mubr.bf16.mxu0 0
      %2326 = vmatmul.mubr.bf16.gmra.mrb[0].mxu0 %v1093
      %v2327 = vpop.f32.mrb[0].mxu0
      %v2328 = vadd.f32 0.0, %v2327
      %v2329 = vpop.f32.mrb[0].mxu0
      %v2330 = vpop.f32.mrb[0].mxu0
      %v2331 = vadd.f32 0.0, %v2330
      %v2332 = vpop.f32.mrb[0].mxu0
      %2333 = vmatprep.mubr.bf16.mxu0 0
      %2334 = vmatmul.mubr.bf16.gmra.mrb[0].mxu0 %v1096
      %v2335 = vpop.f32.mrb[0].mxu0
      %v2336 = vadd.f32 0.0, %v2335
      %v2337 = vpop.f32.mrb[0].mxu0
      %v2338 = vpop.f32.mrb[0].mxu0
      %v2339 = vadd.f32 0.0, %v2338
      %v2340 = vpop.f32.mrb[0].mxu0
      %2341 = vmatprep.mubr.bf16.mxu0 0
      %2342 = vmatmul.mubr.bf16.gmra.mrb[0].mxu0 %v1099
      %v2343 = vpop.f32.mrb[0].mxu0
      %v2344 = vadd.f32 0.0, %v2343
      %v2345 = vpop.f32.mrb[0].mxu0
      %v2346 = vpop.f32.mrb[0].mxu0
      %v2347 = vadd.f32 0.0, %v2346
      %v2348 = vpop.f32.mrb[0].mxu0
      %2349 = vmatprep.mubr.bf16.mxu0 0
      %2350 = vmatmul.mubr.bf16.gmra.mrb[0].mxu0 %v1102
      %v2351 = vpop.f32.mrb[0].mxu0
      %v2352 = vadd.f32 0.0, %v2351
      %v2353 = vpop.f32.mrb[0].mxu0
      %v2354 = vpop.f32.mrb[0].mxu0
      %v2355 = vadd.f32 0.0, %v2354
      %v2356 = vpop.f32.mrb[0].mxu0
      %2357 = vmatprep.mubr.bf16.mxu0 0
      %2358 = vmatmul.mubr.bf16.gmra.mrb[0].mxu0 %v1105
      %v2359 = vpop.f32.mrb[0].mxu0
      %v2360 = vadd.f32 0.0, %v2359
      %v2361 = vpop.f32.mrb[0].mxu0
      %v2362 = vpop.f32.mrb[0].mxu0
      %v2363 = vadd.f32 0.0, %v2362
      %v2364 = vpop.f32.mrb[0].mxu0
      %2365 = vmatprep.mubr.bf16.mxu0 0
      %2366 = vmatmul.mubr.bf16.gmra.mrb[0].mxu0 %v1665
      %v2367 = vpop.f32.mrb[0].mxu0
      %v2368 = vadd.f32 0.0, %v2367
      %v2369 = vpop.f32.mrb[0].mxu0
      %v2370 = vpop.f32.mrb[0].mxu0
      %v2371 = vadd.f32 0.0, %v2370
      %v2372 = vpop.f32.mrb[0].mxu0
      %2373 = vmatprep.mubr.bf16.mxu0 0
      %2374 = vmatmul.mubr.bf16.gmra.mrb[0].mxu0 %v2218
      %v2375 = vpop.f32.mrb[0].mxu0
      %v2376 = vadd.f32 0.0, %v2375
      %v2377 = vpop.f32.mrb[0].mxu0
      %v2378 = vpop.f32.mrb[0].mxu0
      %v2379 = vadd.f32 0.0, %v2378
      %v2380 = vpop.f32.mrb[0].mxu0
      %2381 = vdwg.mxu0
      %v2382 = vadd.f32 %v2198, %v2320
      %v2383 = vadd.f32 %v2199, %v2323
      %v2384 = vadd.f32 %v2200, %v2328
      %v2385 = vadd.f32 %v2201, %v2331
      %v2386 = vadd.f32 %v2202, %v2336
      %v2387 = vadd.f32 %v2203, %v2339
      %v2388 = vadd.f32 %v2204, %v2344
      %v2389 = vadd.f32 %v2205, %v2347
      %v2390 = vadd.f32 %v2206, %v2352
      %v2391 = vadd.f32 %v2207, %v2355
      %v2392 = vadd.f32 %v2208, %v2360
      %v2393 = vadd.f32 %v2209, %v2363
      %v2394 = vadd.f32 %v2210, %v2368
      %v2395 = vadd.f32 %v2211, %v2371
      %v2396 = vadd.f32 %v2212, %v2376
      %v2397 = vadd.f32 %v2213, %v2379
      %v2398 = vld [vmem:[%s4] sm:$0x1]
      %v2400 = vlaneseq
      %v2401 = vshrl.u32 %v2400, 7
      %v2402 = vsub.s32 0, %v2401
      %v2403 = vrot.slane %v2398, %v2402
      %v2405 = vadd.f32 %v2382, %v2403
      %v2406 = vadd.f32 %v2383, %v2403
      %v2407 = vadd.f32 %v2384, %v2403
      %v2408 = vadd.f32 %v2385, %v2403
      %v2409 = vadd.f32 %v2386, %v2403
      %v2410 = vadd.f32 %v2387, %v2403
      %v2411 = vadd.f32 %v2388, %v2403
      %v2412 = vadd.f32 %v2389, %v2403
      %v2413 = vadd.f32 %v2390, %v2403
      %v2414 = vadd.f32 %v2391, %v2403
      %v2415 = vadd.f32 %v2392, %v2403
      %v2416 = vadd.f32 %v2393, %v2403
      %v2417 = vadd.f32 %v2394, %v2403
      %v2418 = vadd.f32 %v2395, %v2403
      %v2419 = vadd.f32 %v2396, %v2403
      %v2420 = vadd.f32 %v2397, %v2403
      %v2421 = vld [vmem:[%s296] sm:$0xff]
      %v2422 = vld [vmem:[%s296 + $0x8] sm:$0xff]
      %v2423 = vld [vmem:[%s296 + $0x10] sm:$0xff]
      %v2424 = vld [vmem:[%s296 + $0x18] sm:$0xff]
      %v2425 = vld [vmem:[%s296 + $0x20] sm:$0xff]
      %v2426 = vld [vmem:[%s296 + $0x28] sm:$0xff]
      %v2427 = vld [vmem:[%s296 + $0x30] sm:$0xff]
      %v2428 = vld [vmem:[%s296 + $0x38] sm:$0xff]
      %v2429 = vld [vmem:[%s296 + $0x40] sm:$0xff]
      %v2430 = vld [vmem:[%s296 + $0x48] sm:$0xff]
      %v2431 = vld [vmem:[%s296 + $0x50] sm:$0xff]
      %v2432 = vld [vmem:[%s296 + $0x58] sm:$0xff]
      %v2433 = vld [vmem:[%s296 + $0x60] sm:$0xff]
      %v2434 = vld [vmem:[%s296 + $0x68] sm:$0xff]
      %v2435 = vld [vmem:[%s296 + $0x70] sm:$0xff]
      %v2436 = vld [vmem:[%s296 + $0x78] sm:$0xff]
      %v2437 = vadd.f32 %v2405, %v2421
      %v2438 = vadd.f32 %v2406, %v2422
      %v2439 = vadd.f32 %v2407, %v2423
      %v2440 = vadd.f32 %v2408, %v2424
      %v2441 = vadd.f32 %v2409, %v2425
      %v2442 = vadd.f32 %v2410, %v2426
      %v2443 = vadd.f32 %v2411, %v2427
      %v2444 = vadd.f32 %v2412, %v2428
      %v2445 = vadd.f32 %v2413, %v2429
      %v2446 = vadd.f32 %v2414, %v2430
      %v2447 = vadd.f32 %v2415, %v2431
      %v2448 = vadd.f32 %v2416, %v2432
      %v2449 = vadd.f32 %v2417, %v2433
      %v2450 = vadd.f32 %v2418, %v2434
      %v2451 = vadd.f32 %v2419, %v2435
      %v2452 = vadd.f32 %v2420, %v2436
      %2453 = vst [vmem:[%s305] sm:$0xff] %v2437
      %2454 = vst [vmem:[%s305 + $0x8] sm:$0xff] %v2438
      %2455 = vst [vmem:[%s305 + $0x10] sm:$0xff] %v2439
      %2456 = vst [vmem:[%s305 + $0x18] sm:$0xff] %v2440
      %2457 = vst [vmem:[%s305 + $0x20] sm:$0xff] %v2441
      %2458 = vst [vmem:[%s305 + $0x28] sm:$0xff] %v2442
      %2459 = vst [vmem:[%s305 + $0x30] sm:$0xff] %v2443
      %2460 = vst [vmem:[%s305 + $0x38] sm:$0xff] %v2444
      %2461 = vst [vmem:[%s305 + $0x40] sm:$0xff] %v2445
      %2462 = vst [vmem:[%s305 + $0x48] sm:$0xff] %v2446
      %2463 = vst [vmem:[%s305 + $0x50] sm:$0xff] %v2447
      %2464 = vst [vmem:[%s305 + $0x58] sm:$0xff] %v2448
      %2465 = vst [vmem:[%s305 + $0x60] sm:$0xff] %v2449
      %2466 = vst [vmem:[%s305 + $0x68] sm:$0xff] %v2450
      %2467 = vst [vmem:[%s305 + $0x70] sm:$0xff] %v2451
      %2468 = vst [vmem:[%s305 + $0x78] sm:$0xff] %v2452
      %s2469 = smul.u32 %s21, 2
      %s2470 = sadd.s32 %s2469, %s22
      %p2471 = scmp.lt.s32.totalorder %s2470, 3
      %s2472 = scalar_select %p2471, %s2470, 3
      %s2473 = smul.addr %s2472, 16
      %s2474 = smul.addr %s2473, 8
      %s2475 = scalar_lea.vmem %s6, %s2474
      // Predicated region
      $region45: #{resnet_block_forward.3} parent=43 // pred_check
        %p2476 = pneg %p191
      $region46: #{resnet_block_forward.3} parent=43 // pred_check_branch
        %2478 = sbr.rel (%p2476) target = $region48
      $region47: #{resnet_block_forward.3} parent=43 // pred_region
        %s2479 = smul.u32 %s21, 2
        %s2480 = sadd.s32 %s2479, %s22
      $region48: #{resnet_block_forward.3} parent=43 // pred_fallthru
        _
    $region44: #{resnet_block_forward.3} parent=5 // pred_fallthru
      _
    %p2481 = scmp.le.s32.totalorder 2, %s12
    // Predicated region
    $region49: #{resnet_block_forward.3} parent=5 // pred_check
      %p2482 = pneg %p2481
    $region50: #{resnet_block_forward.3} parent=5 // pred_check_branch
      %2484 = sbr.rel (%p2482) target = $region52
    $region51: #{resnet_block_forward.3} parent=5 // pred_region
      %s2485 = ssub.s32 %s12, 2
      // Predicated region
      $region53: #{resnet_block_forward.3} parent=51 // pred_check
        %p2486 = pneg %p197
      $region54: #{resnet_block_forward.3} parent=51 // pred_check_branch
        %2488 = sbr.rel (%p2486) target = $region56
      $region55: #{resnet_block_forward.3} parent=51 // pred_region
        %s2489 = smul.u32 %s23, 2
        %s2490 = sadd.s32 %s2489, %s24
        %p2491 = scmp.lt.s32.totalorder %s2490, 3
        %s2492 = scalar_select %p2491, %s2490, 3
        %s2493 = smul.addr %s2492, 16
        %s2494 = smul.addr %s2493, 8
        %s2495 = scalar_lea.vmem %s6, %s2494
      $region56: #{resnet_block_forward.3} parent=51 // pred_fallthru
        _
    $region52: #{resnet_block_forward.3} parent=5 // pred_fallthru
      _
  $region6: #{resnet_block_forward.3} parent=0 // loop_footer
    %s16 = sadd.s32 1, %s12
  $region7: #{resnet_block_forward.3} parent=0 // loop_footer_branch
    %11 = sbr.rel target = $region3
  $region8: #{resnet_block_forward.3} parent=0 // loop_exit
    _

</llo_original>
